<compile_context>
chip_gen: v7x
topology: tpu7x:2x2x1
jax: 0.10.0
libtpu: 0.0.40
codegen_flags: <defaults>
</compile_context>

<pallas_src>
import math

import jax
import jax.numpy as jnp
from jax import lax
from jax.experimental import pallas as pl
from jax.experimental.pallas import tpu as pltpu


# ----------------------------- kernel helpers ------------------------------

def _layernorm(x, g, b, eps=1e-5):
    # PyTorch nn.LayerNorm semantics: biased variance over last dim, eps=1e-5.
    mu = jnp.mean(x, axis=-1, keepdims=True)
    var = jnp.mean((x - mu) ** 2, axis=-1, keepdims=True)
    return (x - mu) * lax.rsqrt(var + eps) * g + b


def _erf_poly(x):
    # Abramowitz & Stegun 7.1.26 rational approximation (max abs err ~1.5e-7,
    # i.e. float32-accurate) — keeps the kernel compile-safe vs lax.erf.
    a1, a2, a3, a4, a5 = 0.254829592, -0.284496736, 1.421413741, -1.453152027, 1.061405429
    p = 0.3275911
    ax = jnp.abs(x)
    t = 1.0 / (1.0 + p * ax)
    poly = ((((a5 * t + a4) * t + a3) * t + a2) * t + a1) * t
    y = 1.0 - poly * jnp.exp(-ax * ax)
    return jnp.where(x >= 0, y, -y)


def _gelu_exact(x):
    # nn.GELU() default is the exact erf formulation.
    return 0.5 * x * (1.0 + _erf_poly(x * (1.0 / math.sqrt(2.0))))


# ------------------------------- the kernel --------------------------------

def _make_transformer_kernel(*, C, Tp, R, use_final_ln, use_head, wdt):
    """Per-config kernel (encoder: fused final LN; decoder: fused head Linear).

    The residual stream lives in the grid-resident output block (f32).  The
    token rows are packed as consecutive batch elements; attention is computed
    per group of R = lcm(Tp, 8) rows with an in-kernel block-diagonal mask so
    tokens only attend within their own batch element.
    """
    scale = 1.0 / math.sqrt(C)     # Attention1 uses 1/sqrt(emb_dim) (single head).
    inv_tp = 1.0 / Tp

    def kernel(x_ref,
               g1, b1, wqkv, bqkv, wp, bp, g2, b2, w1, bm1, w2, bm2,
               *rest):
        idx = 0
        gf = bf = wh = bh = None
        if use_final_ln:
            gf, bf = rest[idx], rest[idx + 1]
            idx += 2
        if use_head:
            wh, bh = rest[idx], rest[idx + 1]
            idx += 2
        out_ref = rest[idx]

        l = pl.program_id(1)
        n_l = pl.num_programs(1)

        # Load the packed token slab into the resident accumulator (== out_ref)
        # once per row block; out_ref stays in VMEM across the layer axis.
        @pl.when(l == 0)
        def _init():
            out_ref[...] = x_ref[...].astype(out_ref.dtype)

        x = out_ref[...].astype(jnp.float32)            # (rows, C) f32
        rows = x.shape[0]
        gpb = rows // R                                  # attention groups/block

        # In-kernel block-diagonal mask over one (R, R) attention group:
        # row//Tp == col//Tp  <=>  same batch element (groups start at
        # multiples of Tp, so the pattern is identical for every group).
        # float floor(.) instead of integer division for lowering safety.
        ri = lax.broadcasted_iota(jnp.int32, (R, R), 0).astype(jnp.float32)
        ci = lax.broadcasted_iota(jnp.int32, (R, R), 1).astype(jnp.float32)
        rid = jnp.floor((ri + 0.5) * inv_tp)
        cid = jnp.floor((ci + 0.5) * inv_tp)
        mask = jnp.where(jnp.abs(rid - cid) < 0.5, 0.0, -1e30).astype(jnp.float32)

        # ---- Block.attn : x = x + proj(softmax(QK^T/sqrt(C)) V) on norm1(x)
        h = _layernorm(x, g1[...], b1[...])
        qkv = jnp.dot(h.astype(wdt), wqkv[...],
                      preferred_element_type=jnp.float32) + bqkv[...]
        q = (qkv[:, :C] * scale).reshape(gpb, R, C)      # scale folded into Q
        k = qkv[:, C:2 * C].reshape(gpb, R, C)
        v = qkv[:, 2 * C:].reshape(gpb, R, C)
        s = jnp.einsum('gqd,gkd->gqk', q, k,
                       preferred_element_type=jnp.float32)
        s = s + mask[None, :, :]                         # block-diag batch mask
        s = s - jnp.max(s, axis=-1, keepdims=True)
        p = jnp.exp(s)
        p = p * pl.reciprocal(jnp.sum(p, axis=-1, keepdims=True), approx=True)
        a = jnp.einsum('gqk,gkd->gqd', p, v,
                       preferred_element_type=jnp.float32)
        a = a.reshape(rows, C)
        a = jnp.dot(a.astype(wdt), wp[...],
                    preferred_element_type=jnp.float32) + bp[...]
        x = x + a                                        # drop_path=0 -> identity

        # ---- Block.mlp : x = x + fc2(gelu(fc1(norm2(x)))) ----
        h2 = _layernorm(x, g2[...], b2[...])
        m = jnp.dot(h2.astype(wdt), w1[...],
                    preferred_element_type=jnp.float32) + bm1[...]
        m = _gelu_exact(m)
        m = jnp.dot(m.astype(wdt), w2[...],
                    preferred_element_type=jnp.float32) + bm2[...]
        x = x + m

        @pl.when(l < n_l - 1)
        def _store():
            out_ref[...] = x.astype(out_ref.dtype)

        # Fused epilogue on the last layer step.
        @pl.when(l == n_l - 1)
        def _finalize():
            y = x
            if use_final_ln:
                y = _layernorm(y, gf[...], bf[...])
            if use_head:
                y = jnp.dot(y.astype(wdt), wh[...],
                            preferred_element_type=jnp.float32) + bh[...]
            out_ref[...] = y.astype(out_ref.dtype)

    return kernel


# ------------------------------ pallas wrapper ------------------------------

def run_transformer(x, blocks, *, final_ln=None, head=None,
                    weight_dtype=jnp.bfloat16):
    """x: (B, Tp, C).  Applies L transformer Blocks (+ optional final LayerNorm
    and/or final Linear head) in a single pallas_call with grid
    (num_row_blocks, L): row blocks parallel (v7x megacore), layers arbitrary."""
    B, Tp, C = x.shape
    L = int(blocks["wqkv"].shape[0])
    H = int(blocks["w1"].shape[2])

    # Attention-group size: smallest multiple of Tp that is sublane-aligned.
    R = (Tp * 8) // math.gcd(Tp, 8)
    N = B * Tp
    nG = -(-N // R)                              # number of attention groups
    # v7x has 2 TensorCores: split whole groups across a parallel grid axis.
    num_row_blocks = 2 if (nG >= 2 and nG % 2 == 0) else 1
    N_pad = nG * R
    rows_rb = N_pad // num_row_blocks

    xf = x.reshape(N, C).astype(jnp.float32)
    if N_pad != N:
        # Padded rows start at a batch boundary (N is a multiple of Tp), so the
        # in-kernel block-diagonal mask keeps them isolated from real tokens.
        xf = jnp.concatenate([xf, jnp.zeros((N_pad - N, C), jnp.float32)], 0)

    wdt = weight_dtype
    per_layer = [("g1", jnp.float32), ("b1", jnp.float32),
                 ("wqkv", wdt), ("bqkv", jnp.float32),
                 ("wp", wdt), ("bp", jnp.float32),
                 ("g2", jnp.float32), ("b2", jnp.float32),
                 ("w1", wdt), ("bm1", jnp.float32),
                 ("w2", wdt), ("bm2", jnp.float32)]

    args = [xf]
    in_specs = [pl.BlockSpec((rows_rb, C), lambda rb, l: (rb, 0))]
    for name, dt in per_layer:
        arr = blocks[name].astype(dt)
        args.append(arr)
        in_specs.append(pl.BlockSpec((None, arr.shape[1], arr.shape[2]),
                                     lambda rb, l: (l, 0, 0)))

    use_final_ln = final_ln is not None
    use_head = head is not None
    if use_final_ln:
        gf, bf = final_ln
        for arr in (gf.reshape(1, C).astype(jnp.float32),
                    bf.reshape(1, C).astype(jnp.float32)):
            args.append(arr)
            in_specs.append(pl.BlockSpec((1, C), lambda rb, l: (0, 0)))
    if use_head:
        wh, bh = head
        args.append(wh.astype(wdt))
        in_specs.append(pl.BlockSpec((C, C), lambda rb, l: (0, 0)))
        args.append(bh.reshape(1, C).astype(jnp.float32))
        in_specs.append(pl.BlockSpec((1, C), lambda rb, l: (0, 0)))

    # Explicit VMEM budget from the actual per-step footprint, capped per
    # generation via get_tpu_info (no hard-coded 64 MiB clamp).
    def _nbytes(a):
        return int(a.size) * jnp.dtype(a.dtype).itemsize

    layer_weight_bytes = sum(_nbytes(a) // L for a in args[1:13])
    epi_bytes = sum(_nbytes(a) for a in args[13:])
    slab_bytes = rows_rb * C * 4
    gpb = rows_rb // R
    interm_bytes = rows_rb * (3 * C + H + 2 * C) * 4 + 2 * gpb * R * R * 4
    need = (2 * layer_weight_bytes          # double-buffered per-layer weights
            + 2 * 2 * slab_bytes            # x block + resident out block
            + 2 * epi_bytes
            + (interm_bytes * 3) // 2       # intermediates + margin
            + (4 << 20))                    # compiler slack
    try:
        cap = int(getattr(pltpu.get_tpu_info(), "vmem_capacity_bytes", 128 << 20))
    except Exception:  # pragma: no cover - defensive
        cap = 128 << 20
    vmem_bytes = int(min(max(need, 32 << 20), int(0.85 * cap)))

    kernel = _make_transformer_kernel(C=C, Tp=Tp, R=R,
                                      use_final_ln=use_final_ln,
                                      use_head=use_head, wdt=wdt)

    out = pl.pallas_call(
        kernel,
        out_shape=jax.ShapeDtypeStruct((N_pad, C), jnp.float32),
        grid_spec=pltpu.PrefetchScalarGridSpec(
            num_scalar_prefetch=0,
            grid=(num_row_blocks, L),
            in_specs=in_specs,
            out_specs=pl.BlockSpec((rows_rb, C), lambda rb, l: (rb, 0)),
            scratch_shapes=[],
        ),
        compiler_params=pltpu.CompilerParams(
            dimension_semantics=("parallel", "arbitrary"),
            vmem_limit_bytes=vmem_bytes),
    )(*args)

    return out[:N].reshape(B, Tp, C).astype(x.dtype)


# --------------------------- parameter construction -------------------------

def init_params(key, *, emb_dim, encoder_layer, decoder_layer, num_hops,
                h_dim, t_dim, r_dim, mlp_ratio=4.0):
    """Synthetic init matching the PyTorch module's shapes.  Linear weights are
    stored pre-transposed as (in, out); q/k/v are packed into one (C, 3C)."""
    C = emb_dim
    H = int(C * mlp_ratio)

    def trunc(k, shape, std=0.02):
        return std * jax.random.truncated_normal(k, -2.0, 2.0, shape, jnp.float32)

    def uni(k, fan_in, shape):
        b = 1.0 / math.sqrt(fan_in)
        return jax.random.uniform(k, shape, jnp.float32, -b, b)

    def block_stack(k, L):
        ks = jax.random.split(k, 8)
        return {
            "g1": jnp.ones((L, 1, C), jnp.float32),
            "b1": jnp.zeros((L, 1, C), jnp.float32),
            "wqkv": uni(ks[0], C, (L, C, 3 * C)),
            "bqkv": uni(ks[1], C, (L, 1, 3 * C)),
            "wp": uni(ks[2], C, (L, C, C)),
            "bp": uni(ks[3], C, (L, 1, C)),
            "g2": jnp.ones((L, 1, C), jnp.float32),
            "b2": jnp.zeros((L, 1, C), jnp.float32),
            "w1": uni(ks[4], C, (L, C, H)),
            "bm1": uni(ks[5], C, (L, 1, H)),
            "w2": uni(ks[6], H, (L, H, C)),
            "bm2": uni(ks[7], H, (L, 1, C)),
        }

    ks = jax.random.split(key, 14)
    encoder = {
        "w_h": uni(ks[0], h_dim, (h_dim, C)), "b_h": uni(ks[1], h_dim, (1, C)),
        "w_t": uni(ks[2], t_dim, (t_dim, C)), "b_t": uni(ks[3], t_dim, (1, C)),
        "w_r": uni(ks[4], r_dim, (r_dim, C)), "b_r": uni(ks[5], r_dim, (1, C)),
        "cls_token": trunc(ks[6], (1, 1, C)),
        "pos_embedding": trunc(ks[7], (num_hops, 1, C)),
        "blocks": block_stack(ks[8], encoder_layer),
        "ln_g": jnp.ones((1, C), jnp.float32),
        "ln_b": jnp.zeros((1, C), jnp.float32),
    }
    decoder = {
        "mask_token": trunc(ks[9], (1, 1, C)),
        "pos_embedding": trunc(ks[10], (num_hops + 1, 1, C)),
        "blocks": block_stack(ks[11], decoder_layer),
        "w_head": uni(ks[12], C, (C, C)),
        "b_head": uni(ks[13], C, (1, C)),
    }
    return {"encoder": encoder, "decoder": decoder}


# ------------------------------ model glue (JAX) ----------------------------

def patch_shuffle(patches, key, ratio):
    """patches: (T, B, C). Per-batch random permutation; keep int(T*(1-ratio))."""
    T, B, _ = patches.shape
    remain_T = int(T * (1 - ratio))
    keys = jax.random.split(key, B)
    fwd = jnp.stack([jax.random.permutation(keys[b], T) for b in range(B)],
                    axis=-1).astype(jnp.int32)            # (T, B)
    bwd = jnp.argsort(fwd, axis=0).astype(jnp.int32)      # (T, B)
    shuffled = jnp.take_along_axis(patches, fwd[:, :, None], axis=0)
    return shuffled[:remain_T], fwd, bwd


def mae_encoder_forward(params, src_x, dst_x, src_dst_x, shuffle_key, mask_ratio):
    ep = params["encoder"]
    h = src_x @ ep["w_h"] + ep["b_h"]                     # (B, C)
    t = dst_x @ ep["w_t"] + ep["b_t"]
    r = src_dst_x @ ep["w_r"] + ep["b_r"]
    conv_input = jnp.stack([h, r, t], axis=1)             # cat([h, r, t], 1)
    B, _, C = conv_input.shape
    patches = jnp.transpose(conv_input, (1, 0, 2))        # 'b h c -> h b c'
    patches = patches + ep["pos_embedding"]               # (num_hops, 1, C)
    patches, _fwd, bwd = patch_shuffle(patches, shuffle_key, mask_ratio)
    cls = jnp.broadcast_to(ep["cls_token"], (1, B, C))
    patches = jnp.concatenate([cls, patches], axis=0)     # (Tp, B, C)
    x = jnp.transpose(patches, (1, 0, 2))                 # 't b c -> b t c'
    feats = run_transformer(x, ep["blocks"],
                            final_ln=(ep["ln_g"], ep["ln_b"]))
    feats = jnp.transpose(feats, (1, 0, 2))               # 'b t c -> t b c'
    return feats, bwd, conv_input


def mae_decoder_forward(params, features, backward_indexes):
    dp = params["decoder"]
    Tf, B, C = features.shape
    T = Tf
    bwd = jnp.concatenate(
        [jnp.zeros((1, B), backward_indexes.dtype), backward_indexes + 1], axis=0)
    n_total = bwd.shape[0]                                # num_hops + 1
    mask_tok = jnp.broadcast_to(dp["mask_token"], (n_total - Tf, B, C))
    feats = jnp.concatenate([features, mask_tok], axis=0)
    feats = jnp.take_along_axis(feats, bwd[:, :, None], axis=0)   # unshuffle
    feats = feats + dp["pos_embedding"]
    x = jnp.transpose(feats, (1, 0, 2))                   # 't b c -> b t c'
    # Decoder transformer (no final LN); head Linear fused into the kernel's
    # last grid step — head is per-token so head(y)[1:] == head(y[1:]).
    y = run_transformer(x, dp["blocks"], head=(dp["w_head"], dp["b_head"]))
    y = jnp.transpose(y, (1, 0, 2))                       # 'b t c -> t b c'
    patches = y[1:]                                       # drop cls token
    mask = jnp.zeros_like(patches)
    mask = mask.at[T - 1:].set(1.0)
    mask = jnp.take_along_axis(mask, (bwd[1:] - 1)[:, :, None], axis=0)
    img = jnp.transpose(patches, (1, 0, 2))               # 't b c -> b t c'
    mask = jnp.transpose(mask, (1, 0, 2))
    return img, mask


def mae_vit_pretrain_forward(params, src_x, dst_x, src_dst_x, shuffle_key,
                             mask_ratio):
    features, backward_indexes, img = mae_encoder_forward(
        params, src_x, dst_x, src_dst_x, shuffle_key, mask_ratio)
    predicted_img, mask = mae_decoder_forward(params, features, backward_indexes)
    return predicted_img, mask, img


# ----------------------------------- main -----------------------------------

if __name__ == "__main__":
    # Shapes consistent with MAE_ViT_pretrain: the encoder tokens come from the
    # h/r/t embeddings (3 tokens), so num_hops must be 3 for the pos-embedding
    # broadcast to be valid.  mask_ratio=0.25 keeps int(3*0.75)=2 patches.
    # emb_dim=128 keeps the demo small but lane-dense (feedback item).
    B = 2
    emb_dim = 128
    encoder_layer = 2
    decoder_layer = 1
    num_hops = 3
    h_dim, t_dim, r_dim = 25, 26, 1
    mask_ratio = 0.25

    key = jax.random.PRNGKey(0)
    k_param, k_h, k_t, k_r, k_shuffle = jax.random.split(key, 5)

    params = init_params(k_param, emb_dim=emb_dim, encoder_layer=encoder_layer,
                         decoder_layer=decoder_layer, num_hops=num_hops,
                         h_dim=h_dim, t_dim=t_dim, r_dim=r_dim)

    src_x = jax.random.normal(k_h, (B, h_dim), jnp.float32)
    dst_x = jax.random.normal(k_t, (B, t_dim), jnp.float32)
    src_dst_x = jax.random.normal(k_r, (B, r_dim), jnp.float32)

    predicted_img, mask, img = mae_vit_pretrain_forward(
        params, src_x, dst_x, src_dst_x, k_shuffle, mask_ratio)
    predicted_img = jax.block_until_ready(predicted_img)
    mask = jax.block_until_ready(mask)
    img = jax.block_until_ready(img)

    assert predicted_img.shape == (B, num_hops, emb_dim), predicted_img.shape
    assert mask.shape == (B, num_hops, emb_dim), mask.shape
    assert img.shape == (B, num_hops, emb_dim), img.shape
    assert bool(jnp.all(jnp.isfinite(predicted_img)))
    assert bool(jnp.all(jnp.isfinite(mask)))
    assert bool(jnp.all(jnp.isfinite(img)))
    print("KERNEL_OK")
</pallas_src>

<mosaic_0001>
module attributes {stable_mosaic.version = 11 : i64} {
  func.func @kernel(%arg0: i32, %arg1: i32, %arg2: memref<24x128xf32, #tpu.memory_space<vmem>>, %arg3: memref<1x1x128xf32, #tpu.memory_space<vmem>>, %arg4: memref<1x1x128xf32, #tpu.memory_space<vmem>>, %arg5: memref<1x128x384xbf16, #tpu.memory_space<vmem>>, %arg6: memref<1x1x384xf32, #tpu.memory_space<vmem>>, %arg7: memref<1x128x128xbf16, #tpu.memory_space<vmem>>, %arg8: memref<1x1x128xf32, #tpu.memory_space<vmem>>, %arg9: memref<1x1x128xf32, #tpu.memory_space<vmem>>, %arg10: memref<1x1x128xf32, #tpu.memory_space<vmem>>, %arg11: memref<1x128x512xbf16, #tpu.memory_space<vmem>>, %arg12: memref<1x1x512xf32, #tpu.memory_space<vmem>>, %arg13: memref<1x512x128xbf16, #tpu.memory_space<vmem>>, %arg14: memref<1x1x128xf32, #tpu.memory_space<vmem>>, %arg15: memref<1x128xf32, #tpu.memory_space<vmem>>, %arg16: memref<1x128xf32, #tpu.memory_space<vmem>>, %arg17: memref<24x128xf32, #tpu.memory_space<vmem>>) attributes {dimension_semantics = [#tpu.dimension_semantics<parallel>, #tpu.dimension_semantics<arbitrary>], iteration_bounds = array<i64: 1, 2>, scalar_prefetch = 0 : i64, scratch_operands = 0 : i64, tpu.core_type = #tpu.core_type<tc>, window_params = [{transform_indices = @transform_0, window_bounds = array<i64: 24, 128>}, {transform_indices = @transform_1, window_bounds = array<i64: 1, 1, 128>}, {transform_indices = @transform_2, window_bounds = array<i64: 1, 1, 128>}, {transform_indices = @transform_3, window_bounds = array<i64: 1, 128, 384>}, {transform_indices = @transform_4, window_bounds = array<i64: 1, 1, 384>}, {transform_indices = @transform_5, window_bounds = array<i64: 1, 128, 128>}, {transform_indices = @transform_6, window_bounds = array<i64: 1, 1, 128>}, {transform_indices = @transform_7, window_bounds = array<i64: 1, 1, 128>}, {transform_indices = @transform_8, window_bounds = array<i64: 1, 1, 128>}, {transform_indices = @transform_9, window_bounds = array<i64: 1, 128, 512>}, {transform_indices = @transform_10, window_bounds = array<i64: 1, 1, 512>}, {transform_indices = @transform_11, window_bounds = array<i64: 1, 512, 128>}, {transform_indices = @transform_12, window_bounds = array<i64: 1, 1, 128>}, {pipeline_mode = #tpu.pipeline_mode<synchronous>, transform_indices = @transform_13, window_bounds = array<i64: 1, 128>}, {pipeline_mode = #tpu.pipeline_mode<synchronous>, transform_indices = @transform_14, window_bounds = array<i64: 1, 128>}, {transform_indices = @transform_15, window_bounds = array<i64: 24, 128>}]} {
    %c0_i32 = arith.constant 0 : i32
    %0 = arith.cmpi eq, %arg1, %c0_i32 : i32
    %1 = arith.extui %0 : i1 to i32
    %c0_i32_0 = arith.constant 0 : i32
    %2 = arith.cmpi ne, %1, %c0_i32_0 : i32
    scf.if %2 {
      %c0_81 = arith.constant 0 : index
      %c0_82 = arith.constant 0 : index
      %180 = vector.load %arg2[%c0_81, %c0_82] : memref<24x128xf32, #tpu.memory_space<vmem>>, vector<24x128xf32>
      %c0_83 = arith.constant 0 : index
      %c0_84 = arith.constant 0 : index
      %181 = vector.load %arg17[%c0_83, %c0_84] : memref<24x128xf32, #tpu.memory_space<vmem>>, vector<24x128xf32>
      tpu.vector_store %arg17[%c0_83, %c0_84], %180 {strides = array<i32>} : memref<24x128xf32, #tpu.memory_space<vmem>>, vector<24x128xf32>,
    } else {
    }
    %c0 = arith.constant 0 : index
    %c0_1 = arith.constant 0 : index
    %3 = vector.load %arg17[%c0, %c0_1] : memref<24x128xf32, #tpu.memory_space<vmem>>, vector<24x128xf32>
    %4 = tpu.iota {dimensions = array<i32: 0>} : vector<24x24xi32>
    %5 = arith.sitofp %4 : vector<24x24xi32> to vector<24x24xf32>
    %6 = tpu.iota {dimensions = array<i32: 1>} : vector<24x24xi32>
    %7 = arith.sitofp %6 : vector<24x24xi32> to vector<24x24xf32>
    %cst = arith.constant 5.000000e-01 : f32
    %8 = vector.broadcast %cst : f32 to vector<24x24xf32>
    %9 = arith.addf %5, %8 : vector<24x24xf32>
    %cst_2 = arith.constant 0.333333343 : f32
    %10 = vector.broadcast %cst_2 : f32 to vector<24x24xf32>
    %11 = arith.mulf %9, %10 : vector<24x24xf32>
    %12 = math.floor %11 : vector<24x24xf32>
    %cst_3 = arith.constant 5.000000e-01 : f32
    %13 = vector.broadcast %cst_3 : f32 to vector<24x24xf32>
    %14 = arith.addf %7, %13 : vector<24x24xf32>
    %cst_4 = arith.constant 0.333333343 : f32
    %15 = vector.broadcast %cst_4 : f32 to vector<24x24xf32>
    %16 = arith.mulf %14, %15 : vector<24x24xf32>
    %17 = math.floor %16 : vector<24x24xf32>
    %18 = arith.subf %12, %17 : vector<24x24xf32>
    %19 = math.absf %18 : vector<24x24xf32>
    %cst_5 = arith.constant 5.000000e-01 : f32
    %20 = vector.broadcast %cst_5 : f32 to vector<24x24xf32>
    %21 = arith.cmpf olt, %19, %20 : vector<24x24xf32>
    %cst_6 = arith.constant 0.000000e+00 : f32
    %cst_7 = arith.constant -1.000000e+30 : f32
    %22 = vector.broadcast %cst_6 : f32 to vector<24x24xf32>
    %23 = vector.broadcast %cst_7 : f32 to vector<24x24xf32>
    %24 = arith.select %21, %22, %23 : vector<24x24xi1>, vector<24x24xf32>
    %c0_8 = arith.constant 0 : index
    %c0_9 = arith.constant 0 : index
    %c0_10 = arith.constant 0 : index
    %25 = vector.load %arg3[%c0_8, %c0_9, %c0_10] : memref<1x1x128xf32, #tpu.memory_space<vmem>>, vector<1x1x128xf32>
    %26 = vector.shape_cast %25 : vector<1x1x128xf32> to vector<1x128xf32>
    %c0_11 = arith.constant 0 : index
    %c0_12 = arith.constant 0 : index
    %c0_13 = arith.constant 0 : index
    %27 = vector.load %arg4[%c0_11, %c0_12, %c0_13] : memref<1x1x128xf32, #tpu.memory_space<vmem>>, vector<1x1x128xf32>
    %28 = vector.shape_cast %27 : vector<1x1x128xf32> to vector<1x128xf32>
    %cst_14 = arith.constant dense<0.000000e+00> : vector<24xf32>
    %29 = vector.multi_reduction <add>, %3, %cst_14 [1] : vector<24x128xf32> to vector<24xf32>
    %30 = vector.shape_cast %29 : vector<24xf32> to vector<24x1xf32>
    %cst_15 = arith.constant 1.280000e+02 : f32
    %31 = vector.broadcast %cst_15 : f32 to vector<24x1xf32>
    %32 = arith.divf %30, %31 : vector<24x1xf32>
    %33 = vector.broadcast %32 : vector<24x1xf32> to vector<24x128xf32>
    %34 = arith.subf %3, %33 : vector<24x128xf32>
    %35 = arith.mulf %34, %34 : vector<24x128xf32>
    %cst_16 = arith.constant dense<0.000000e+00> : vector<24xf32>
    %36 = vector.multi_reduction <add>, %35, %cst_16 [1] : vector<24x128xf32> to vector<24xf32>
    %37 = vector.shape_cast %36 : vector<24xf32> to vector<24x1xf32>
    %cst_17 = arith.constant 1.280000e+02 : f32
    %38 = vector.broadcast %cst_17 : f32 to vector<24x1xf32>
    %39 = arith.divf %37, %38 : vector<24x1xf32>
    %40 = vector.broadcast %32 : vector<24x1xf32> to vector<24x128xf32>
    %41 = arith.subf %3, %40 : vector<24x128xf32>
    %cst_18 = arith.constant 9.99999974E-6 : f32
    %42 = vector.broadcast %cst_18 : f32 to vector<24x1xf32>
    %43 = arith.addf %39, %42 : vector<24x1xf32>
    %44 = math.rsqrt %43 : vector<24x1xf32>
    %45 = vector.broadcast %44 : vector<24x1xf32> to vector<24x128xf32>
    %46 = arith.mulf %41, %45 : vector<24x128xf32>
    %47 = vector.broadcast %26 : vector<1x128xf32> to vector<24x128xf32>
    %48 = arith.mulf %46, %47 : vector<24x128xf32>
    %49 = vector.broadcast %28 : vector<1x128xf32> to vector<24x128xf32>
    %50 = arith.addf %48, %49 : vector<24x128xf32>
    %51 = arith.truncf %50 : vector<24x128xf32> to vector<24x128xbf16>
    %c0_19 = arith.constant 0 : index
    %c0_20 = arith.constant 0 : index
    %c0_21 = arith.constant 0 : index
    %52 = vector.load %arg5[%c0_19, %c0_20, %c0_21] : memref<1x128x384xbf16, #tpu.memory_space<vmem>>, vector<1x128x384xbf16>
    %53 = vector.shape_cast %52 : vector<1x128x384xbf16> to vector<128x384xbf16>
    %cst_22 = arith.constant dense<0.000000e+00> : vector<24x384xf32>
    %54 = tpu.matmul %51, %53, %cst_22 {dimension_numbers = #tpu.dot_dimension_numbers<[1], [0], [0], [1], [0, 0, 1, 1], [], []>} : vector<24x128xbf16>, vector<128x384xbf16>, vector<24x384xf32> -> vector<24x384xf32>
    %c0_23 = arith.constant 0 : index
    %c0_24 = arith.constant 0 : index
    %c0_25 = arith.constant 0 : index
    %55 = vector.load %arg6[%c0_23, %c0_24, %c0_25] : memref<1x1x384xf32, #tpu.memory_space<vmem>>, vector<1x1x384xf32>
    %56 = vector.shape_cast %55 : vector<1x1x384xf32> to vector<1x384xf32>
    %57 = vector.broadcast %56 : vector<1x384xf32> to vector<24x384xf32>
    %58 = arith.addf %54, %57 : vector<24x384xf32>
    %59 = vector.extract_strided_slice %58 {offsets = [0, 0], sizes = [24, 128], strides = [1, 1]} : vector<24x384xf32> to vector<24x128xf32>
    %cst_26 = arith.constant 0.0883883461 : f32
    %60 = vector.broadcast %cst_26 : f32 to vector<24x128xf32>
    %61 = arith.mulf %59, %60 : vector<24x128xf32>
    %62 = vector.shape_cast %61 : vector<24x128xf32> to vector<1x24x128xf32>
    %63 = vector.extract_strided_slice %58 {offsets = [0, 128], sizes = [24, 128], strides = [1, 1]} : vector<24x384xf32> to vector<24x128xf32>
    %64 = vector.shape_cast %63 : vector<24x128xf32> to vector<1x24x128xf32>
    %65 = vector.extract_strided_slice %58 {offsets = [0, 256], sizes = [24, 128], strides = [1, 1]} : vector<24x384xf32> to vector<24x128xf32>
    %66 = vector.shape_cast %65 : vector<24x128xf32> to vector<1x24x128xf32>
    "tpu.trace_start"() <{level = 10 : i32, message = "gqd,gkd->gqk"}> : () -> ()
    %cst_27 = arith.constant dense<0.000000e+00> : vector<1x24x24xf32>
    %67 = tpu.matmul %62, %64, %cst_27 {dimension_numbers = #tpu.dot_dimension_numbers<[2], [2], [1], [1], [0, 0, 0, 1, 1, 1], [0], [0]>} : vector<1x24x128xf32>, vector<1x24x128xf32>, vector<1x24x24xf32> -> vector<1x24x24xf32>
    "tpu.trace_stop"() : () -> ()
    %68 = vector.shape_cast %24 : vector<24x24xf32> to vector<1x24x24xf32>
    %69 = arith.addf %67, %68 : vector<1x24x24xf32>
    %cst_28 = arith.constant dense<0xFF800000> : vector<1x24xf32>
    %70 = vector.multi_reduction <maximumf>, %69, %cst_28 [2] : vector<1x24x24xf32> to vector<1x24xf32>
    %71 = vector.shape_cast %70 : vector<1x24xf32> to vector<1x24x1xf32>
    %72 = vector.broadcast %71 : vector<1x24x1xf32> to vector<1x24x24xf32>
    %73 = arith.subf %69, %72 : vector<1x24x24xf32>
    %74 = math.exp %73 : vector<1x24x24xf32>
    %cst_29 = arith.constant dense<0.000000e+00> : vector<1x24xf32>
    %75 = vector.multi_reduction <add>, %74, %cst_29 [2] : vector<1x24x24xf32> to vector<1x24xf32>
    %76 = vector.shape_cast %75 : vector<1x24xf32> to vector<1x24x1xf32>
    %77 = tpu.reciprocal %76 {approx = true} : vector<1x24x1xf32> -> vector<1x24x1xf32>
    %78 = vector.broadcast %77 : vector<1x24x1xf32> to vector<1x24x24xf32>
    %79 = arith.mulf %74, %78 : vector<1x24x24xf32>
    "tpu.trace_start"() <{level = 10 : i32, message = "gqk,gkd->gqd"}> : () -> ()
    %cst_30 = arith.constant dense<0.000000e+00> : vector<1x24x128xf32>
    %80 = tpu.matmul %79, %66, %cst_30 {dimension_numbers = #tpu.dot_dimension_numbers<[2], [1], [1], [2], [0, 0, 0, 1, 1, 2], [0], [0]>} : vector<1x24x24xf32>, vector<1x24x128xf32>, vector<1x24x128xf32> -> vector<1x24x128xf32>
    "tpu.trace_stop"() : () -> ()
    %81 = vector.shape_cast %80 : vector<1x24x128xf32> to vector<24x128xf32>
    %82 = arith.truncf %81 : vector<24x128xf32> to vector<24x128xbf16>
    %c0_31 = arith.constant 0 : index
    %c0_32 = arith.constant 0 : index
    %c0_33 = arith.constant 0 : index
    %83 = vector.load %arg7[%c0_31, %c0_32, %c0_33] : memref<1x128x128xbf16, #tpu.memory_space<vmem>>, vector<1x128x128xbf16>
    %84 = vector.shape_cast %83 : vector<1x128x128xbf16> to vector<128x128xbf16>
    %cst_34 = arith.constant dense<0.000000e+00> : vector<24x128xf32>
    %85 = tpu.matmul %82, %84, %cst_34 {dimension_numbers = #tpu.dot_dimension_numbers<[1], [0], [0], [1], [0, 0, 1, 1], [], []>} : vector<24x128xbf16>, vector<128x128xbf16>, vector<24x128xf32> -> vector<24x128xf32>
    %c0_35 = arith.constant 0 : index
    %c0_36 = arith.constant 0 : index
    %c0_37 = arith.constant 0 : index
    %86 = vector.load %arg8[%c0_35, %c0_36, %c0_37] : memref<1x1x128xf32, #tpu.memory_space<vmem>>, vector<1x1x128xf32>
    %87 = vector.shape_cast %86 : vector<1x1x128xf32> to vector<1x128xf32>
    %88 = vector.broadcast %87 : vector<1x128xf32> to vector<24x128xf32>
    %89 = arith.addf %85, %88 : vector<24x128xf32>
    %90 = arith.addf %3, %89 : vector<24x128xf32>
    %c0_38 = arith.constant 0 : index
    %c0_39 = arith.constant 0 : index
    %c0_40 = arith.constant 0 : index
    %91 = vector.load %arg9[%c0_38, %c0_39, %c0_40] : memref<1x1x128xf32, #tpu.memory_space<vmem>>, vector<1x1x128xf32>
    %92 = vector.shape_cast %91 : vector<1x1x128xf32> to vector<1x128xf32>
    %c0_41 = arith.constant 0 : index
    %c0_42 = arith.constant 0 : index
    %c0_43 = arith.constant 0 : index
    %93 = vector.load %arg10[%c0_41, %c0_42, %c0_43] : memref<1x1x128xf32, #tpu.memory_space<vmem>>, vector<1x1x128xf32>
    %94 = vector.shape_cast %93 : vector<1x1x128xf32> to vector<1x128xf32>
    %cst_44 = arith.constant dense<0.000000e+00> : vector<24xf32>
    %95 = vector.multi_reduction <add>, %90, %cst_44 [1] : vector<24x128xf32> to vector<24xf32>
    %96 = vector.shape_cast %95 : vector<24xf32> to vector<24x1xf32>
    %cst_45 = arith.constant 1.280000e+02 : f32
    %97 = vector.broadcast %cst_45 : f32 to vector<24x1xf32>
    %98 = arith.divf %96, %97 : vector<24x1xf32>
    %99 = vector.broadcast %98 : vector<24x1xf32> to vector<24x128xf32>
    %100 = arith.subf %90, %99 : vector<24x128xf32>
    %101 = arith.mulf %100, %100 : vector<24x128xf32>
    %cst_46 = arith.constant dense<0.000000e+00> : vector<24xf32>
    %102 = vector.multi_reduction <add>, %101, %cst_46 [1] : vector<24x128xf32> to vector<24xf32>
    %103 = vector.shape_cast %102 : vector<24xf32> to vector<24x1xf32>
    %cst_47 = arith.constant 1.280000e+02 : f32
    %104 = vector.broadcast %cst_47 : f32 to vector<24x1xf32>
    %105 = arith.divf %103, %104 : vector<24x1xf32>
    %106 = vector.broadcast %98 : vector<24x1xf32> to vector<24x128xf32>
    %107 = arith.subf %90, %106 : vector<24x128xf32>
    %cst_48 = arith.constant 9.99999974E-6 : f32
    %108 = vector.broadcast %cst_48 : f32 to vector<24x1xf32>
    %109 = arith.addf %105, %108 : vector<24x1xf32>
    %110 = math.rsqrt %109 : vector<24x1xf32>
    %111 = vector.broadcast %110 : vector<24x1xf32> to vector<24x128xf32>
    %112 = arith.mulf %107, %111 : vector<24x128xf32>
    %113 = vector.broadcast %92 : vector<1x128xf32> to vector<24x128xf32>
    %114 = arith.mulf %112, %113 : vector<24x128xf32>
    %115 = vector.broadcast %94 : vector<1x128xf32> to vector<24x128xf32>
    %116 = arith.addf %114, %115 : vector<24x128xf32>
    %117 = arith.truncf %116 : vector<24x128xf32> to vector<24x128xbf16>
    %c0_49 = arith.constant 0 : index
    %c0_50 = arith.constant 0 : index
    %c0_51 = arith.constant 0 : index
    %118 = vector.load %arg11[%c0_49, %c0_50, %c0_51] : memref<1x128x512xbf16, #tpu.memory_space<vmem>>, vector<1x128x512xbf16>
    %119 = vector.shape_cast %118 : vector<1x128x512xbf16> to vector<128x512xbf16>
    %cst_52 = arith.constant dense<0.000000e+00> : vector<24x512xf32>
    %120 = tpu.matmul %117, %119, %cst_52 {dimension_numbers = #tpu.dot_dimension_numbers<[1], [0], [0], [1], [0, 0, 1, 1], [], []>} : vector<24x128xbf16>, vector<128x512xbf16>, vector<24x512xf32> -> vector<24x512xf32>
    %c0_53 = arith.constant 0 : index
    %c0_54 = arith.constant 0 : index
    %c0_55 = arith.constant 0 : index
    %121 = vector.load %arg12[%c0_53, %c0_54, %c0_55] : memref<1x1x512xf32, #tpu.memory_space<vmem>>, vector<1x1x512xf32>
    %122 = vector.shape_cast %121 : vector<1x1x512xf32> to vector<1x512xf32>
    %123 = vector.broadcast %122 : vector<1x512xf32> to vector<24x512xf32>
    %124 = arith.addf %120, %123 : vector<24x512xf32>
    %cst_56 = arith.constant 5.000000e-01 : f32
    %125 = vector.broadcast %cst_56 : f32 to vector<24x512xf32>
    %126 = arith.mulf %125, %124 : vector<24x512xf32>
    %cst_57 = arith.constant 0.707106769 : f32
    %127 = vector.broadcast %cst_57 : f32 to vector<24x512xf32>
    %128 = arith.mulf %124, %127 : vector<24x512xf32>
    %129 = math.absf %128 : vector<24x512xf32>
    %cst_58 = arith.constant 0.327591091 : f32
    %130 = vector.broadcast %cst_58 : f32 to vector<24x512xf32>
    %131 = arith.mulf %130, %129 : vector<24x512xf32>
    %cst_59 = arith.constant 1.000000e+00 : f32
    %132 = vector.broadcast %cst_59 : f32 to vector<24x512xf32>
    %133 = arith.addf %132, %131 : vector<24x512xf32>
    %cst_60 = arith.constant 1.000000e+00 : f32
    %134 = vector.broadcast %cst_60 : f32 to vector<24x512xf32>
    %135 = arith.divf %134, %133 : vector<24x512xf32>
    %cst_61 = arith.constant 1.06140542 : f32
    %136 = vector.broadcast %cst_61 : f32 to vector<24x512xf32>
    %137 = arith.mulf %136, %135 : vector<24x512xf32>
    %cst_62 = arith.constant -1.45315206 : f32
    %138 = vector.broadcast %cst_62 : f32 to vector<24x512xf32>
    %139 = arith.addf %137, %138 : vector<24x512xf32>
    %140 = arith.mulf %139, %135 : vector<24x512xf32>
    %cst_63 = arith.constant 1.42141378 : f32
    %141 = vector.broadcast %cst_63 : f32 to vector<24x512xf32>
    %142 = arith.addf %140, %141 : vector<24x512xf32>
    %143 = arith.mulf %142, %135 : vector<24x512xf32>
    %cst_64 = arith.constant -0.284496725 : f32
    %144 = vector.broadcast %cst_64 : f32 to vector<24x512xf32>
    %145 = arith.addf %143, %144 : vector<24x512xf32>
    %146 = arith.mulf %145, %135 : vector<24x512xf32>
    %cst_65 = arith.constant 0.254829586 : f32
    %147 = vector.broadcast %cst_65 : f32 to vector<24x512xf32>
    %148 = arith.addf %146, %147 : vector<24x512xf32>
    %149 = arith.mulf %148, %135 : vector<24x512xf32>
    %cst_66 = arith.constant 0.000000e+00 : f32
    %150 = vector.broadcast %cst_66 : f32 to vector<24x512xf32>
    %151 = arith.subf %150, %129 : vector<24x512xf32>
    %152 = arith.mulf %151, %129 : vector<24x512xf32>
    %153 = math.exp %152 : vector<24x512xf32>
    %154 = arith.mulf %149, %153 : vector<24x512xf32>
    %cst_67 = arith.constant 1.000000e+00 : f32
    %155 = vector.broadcast %cst_67 : f32 to vector<24x512xf32>
    %156 = arith.subf %155, %154 : vector<24x512xf32>
    %cst_68 = arith.constant 0.000000e+00 : f32
    %157 = vector.broadcast %cst_68 : f32 to vector<24x512xf32>
    %158 = arith.cmpf oge, %128, %157 : vector<24x512xf32>
    %cst_69 = arith.constant 0.000000e+00 : f32
    %159 = vector.broadcast %cst_69 : f32 to vector<24x512xf32>
    %160 = arith.subf %159, %156 : vector<24x512xf32>
    %161 = arith.select %158, %156, %160 : vector<24x512xi1>, vector<24x512xf32>
    %cst_70 = arith.constant 1.000000e+00 : f32
    %162 = vector.broadcast %cst_70 : f32 to vector<24x512xf32>
    %163 = arith.addf %162, %161 : vector<24x512xf32>
    %164 = arith.mulf %126, %163 : vector<24x512xf32>
    %165 = arith.truncf %164 : vector<24x512xf32> to vector<24x512xbf16>
    %c0_71 = arith.constant 0 : index
    %c0_72 = arith.constant 0 : index
    %c0_73 = arith.constant 0 : index
    %166 = vector.load %arg13[%c0_71, %c0_72, %c0_73] : memref<1x512x128xbf16, #tpu.memory_space<vmem>>, vector<1x512x128xbf16>
    %167 = vector.shape_cast %166 : vector<1x512x128xbf16> to vector<512x128xbf16>
    %cst_74 = arith.constant dense<0.000000e+00> : vector<24x128xf32>
    %168 = tpu.matmul %165, %167, %cst_74 {dimension_numbers = #tpu.dot_dimension_numbers<[1], [0], [0], [1], [0, 0, 1, 1], [], []>} : vector<24x512xbf16>, vector<512x128xbf16>, vector<24x128xf32> -> vector<24x128xf32>
    %c0_75 = arith.constant 0 : index
    %c0_76 = arith.constant 0 : index
    %c0_77 = arith.constant 0 : index
    %169 = vector.load %arg14[%c0_75, %c0_76, %c0_77] : memref<1x1x128xf32, #tpu.memory_space<vmem>>, vector<1x1x128xf32>
    %170 = vector.shape_cast %169 : vector<1x1x128xf32> to vector<1x128xf32>
    %171 = vector.broadcast %170 : vector<1x128xf32> to vector<24x128xf32>
    %172 = arith.addf %168, %171 : vector<24x128xf32>
    %173 = arith.addf %90, %172 : vector<24x128xf32>
    %c1_i32 = arith.constant 1 : i32
    %174 = arith.cmpi slt, %arg1, %c1_i32 : i32
    %175 = arith.extui %174 : i1 to i32
    %c0_i32_78 = arith.constant 0 : i32
    %176 = arith.cmpi ne, %175, %c0_i32_78 : i32
    scf.if %176 {
      %c0_81 = arith.constant 0 : index
      %c0_82 = arith.constant 0 : index
      %180 = vector.load %arg17[%c0_81, %c0_82] : memref<24x128xf32, #tpu.memory_space<vmem>>, vector<24x128xf32>
      tpu.vector_store %arg17[%c0_81, %c0_82], %173 {strides = array<i32>} : memref<24x128xf32, #tpu.memory_space<vmem>>, vector<24x128xf32>,
    } else {
    }
    %c1_i32_79 = arith.constant 1 : i32
    %177 = arith.cmpi eq, %arg1, %c1_i32_79 : i32
    %178 = arith.extui %177 : i1 to i32
    %c0_i32_80 = arith.constant 0 : i32
    %179 = arith.cmpi ne, %178, %c0_i32_80 : i32
    scf.if %179 {
      %c0_81 = arith.constant 0 : index
      %c0_82 = arith.constant 0 : index
      %180 = vector.load %arg15[%c0_81, %c0_82] : memref<1x128xf32, #tpu.memory_space<vmem>>, vector<1x128xf32>
      %c0_83 = arith.constant 0 : index
      %c0_84 = arith.constant 0 : index
      %181 = vector.load %arg16[%c0_83, %c0_84] : memref<1x128xf32, #tpu.memory_space<vmem>>, vector<1x128xf32>
      %cst_85 = arith.constant dense<0.000000e+00> : vector<24xf32>
      %182 = vector.multi_reduction <add>, %173, %cst_85 [1] : vector<24x128xf32> to vector<24xf32>
      %183 = vector.shape_cast %182 : vector<24xf32> to vector<24x1xf32>
      %cst_86 = arith.constant 1.280000e+02 : f32
      %184 = vector.broadcast %cst_86 : f32 to vector<24x1xf32>
      %185 = arith.divf %183, %184 : vector<24x1xf32>
      %186 = vector.broadcast %185 : vector<24x1xf32> to vector<24x128xf32>
      %187 = arith.subf %173, %186 : vector<24x128xf32>
      %188 = arith.mulf %187, %187 : vector<24x128xf32>
      %cst_87 = arith.constant dense<0.000000e+00> : vector<24xf32>
      %189 = vector.multi_reduction <add>, %188, %cst_87 [1] : vector<24x128xf32> to vector<24xf32>
      %190 = vector.shape_cast %189 : vector<24xf32> to vector<24x1xf32>
      %cst_88 = arith.constant 1.280000e+02 : f32
      %191 = vector.broadcast %cst_88 : f32 to vector<24x1xf32>
      %192 = arith.divf %190, %191 : vector<24x1xf32>
      %193 = vector.broadcast %185 : vector<24x1xf32> to vector<24x128xf32>
      %194 = arith.subf %173, %193 : vector<24x128xf32>
      %cst_89 = arith.constant 9.99999974E-6 : f32
      %195 = vector.broadcast %cst_89 : f32 to vector<24x1xf32>
      %196 = arith.addf %192, %195 : vector<24x1xf32>
      %197 = math.rsqrt %196 : vector<24x1xf32>
      %198 = vector.broadcast %197 : vector<24x1xf32> to vector<24x128xf32>
      %199 = arith.mulf %194, %198 : vector<24x128xf32>
      %200 = vector.broadcast %180 : vector<1x128xf32> to vector<24x128xf32>
      %201 = arith.mulf %199, %200 : vector<24x128xf32>
      %202 = vector.broadcast %181 : vector<1x128xf32> to vector<24x128xf32>
      %203 = arith.addf %201, %202 : vector<24x128xf32>
      %c0_90 = arith.constant 0 : index
      %c0_91 = arith.constant 0 : index
      %204 = vector.load %arg17[%c0_90, %c0_91] : memref<24x128xf32, #tpu.memory_space<vmem>>, vector<24x128xf32>
      tpu.vector_store %arg17[%c0_90, %c0_91], %203 {strides = array<i32>} : memref<24x128xf32, #tpu.memory_space<vmem>>, vector<24x128xf32>,
    } else {
    }
    return
  }
  func.func @transform_0(%arg0: i32, %arg1: i32) -> (i32, i32) {
    %c0_i32 = arith.constant 0 : i32
    %c0_i32_0 = arith.constant 0 : i32
    return %arg0, %c0_i32 : i32, i32
  }
  func.func @transform_1(%arg0: i32, %arg1: i32) -> (i32, i32, i32) {
    %c0_i32 = arith.constant 0 : i32
    %c0_i32_0 = arith.constant 0 : i32
    %c0_i32_1 = arith.constant 0 : i32
    return %arg1, %c0_i32, %c0_i32_0 : i32, i32, i32
  }
  func.func @transform_2(%arg0: i32, %arg1: i32) -> (i32, i32, i32) {
    %c0_i32 = arith.constant 0 : i32
    %c0_i32_0 = arith.constant 0 : i32
    %c0_i32_1 = arith.constant 0 : i32
    return %arg1, %c0_i32, %c0_i32_0 : i32, i32, i32
  }
  func.func @transform_3(%arg0: i32, %arg1: i32) -> (i32, i32, i32) {
    %c0_i32 = arith.constant 0 : i32
    %c0_i32_0 = arith.constant 0 : i32
    %c0_i32_1 = arith.constant 0 : i32
    return %arg1, %c0_i32, %c0_i32_0 : i32, i32, i32
  }
  func.func @transform_4(%arg0: i32, %arg1: i32) -> (i32, i32, i32) {
    %c0_i32 = arith.constant 0 : i32
    %c0_i32_0 = arith.constant 0 : i32
    %c0_i32_1 = arith.constant 0 : i32
    return %arg1, %c0_i32, %c0_i32_0 : i32, i32, i32
  }
  func.func @transform_5(%arg0: i32, %arg1: i32) -> (i32, i32, i32) {
    %c0_i32 = arith.constant 0 : i32
    %c0_i32_0 = arith.constant 0 : i32
    %c0_i32_1 = arith.constant 0 : i32
    return %arg1, %c0_i32, %c0_i32_0 : i32, i32, i32
  }
  func.func @transform_6(%arg0: i32, %arg1: i32) -> (i32, i32, i32) {
    %c0_i32 = arith.constant 0 : i32
    %c0_i32_0 = arith.constant 0 : i32
    %c0_i32_1 = arith.constant 0 : i32
    return %arg1, %c0_i32, %c0_i32_0 : i32, i32, i32
  }
  func.func @transform_7(%arg0: i32, %arg1: i32) -> (i32, i32, i32) {
    %c0_i32 = arith.constant 0 : i32
    %c0_i32_0 = arith.constant 0 : i32
    %c0_i32_1 = arith.constant 0 : i32
    return %arg1, %c0_i32, %c0_i32_0 : i32, i32, i32
  }
  func.func @transform_8(%arg0: i32, %arg1: i32) -> (i32, i32, i32) {
    %c0_i32 = arith.constant 0 : i32
    %c0_i32_0 = arith.constant 0 : i32
    %c0_i32_1 = arith.constant 0 : i32
    return %arg1, %c0_i32, %c0_i32_0 : i32, i32, i32
  }
  func.func @transform_9(%arg0: i32, %arg1: i32) -> (i32, i32, i32) {
    %c0_i32 = arith.constant 0 : i32
    %c0_i32_0 = arith.constant 0 : i32
    %c0_i32_1 = arith.constant 0 : i32
    return %arg1, %c0_i32, %c0_i32_0 : i32, i32, i32
  }
  func.func @transform_10(%arg0: i32, %arg1: i32) -> (i32, i32, i32) {
    %c0_i32 = arith.constant 0 : i32
    %c0_i32_0 = arith.constant 0 : i32
    %c0_i32_1 = arith.constant 0 : i32
    return %arg1, %c0_i32, %c0_i32_0 : i32, i32, i32
  }
  func.func @transform_11(%arg0: i32, %arg1: i32) -> (i32, i32, i32) {
    %c0_i32 = arith.constant 0 : i32
    %c0_i32_0 = arith.constant 0 : i32
    %c0_i32_1 = arith.constant 0 : i32
    return %arg1, %c0_i32, %c0_i32_0 : i32, i32, i32
  }
  func.func @transform_12(%arg0: i32, %arg1: i32) -> (i32, i32, i32) {
    %c0_i32 = arith.constant 0 : i32
    %c0_i32_0 = arith.constant 0 : i32
    %c0_i32_1 = arith.constant 0 : i32
    return %arg1, %c0_i32, %c0_i32_0 : i32, i32, i32
  }
  func.func @transform_13(%arg0: i32, %arg1: i32) -> (i32, i32) {
    %c0_i32 = arith.constant 0 : i32
    %c0_i32_0 = arith.constant 0 : i32
    %c0_i32_1 = arith.constant 0 : i32
    return %c0_i32, %c0_i32_0 : i32, i32
  }
  func.func @transform_14(%arg0: i32, %arg1: i32) -> (i32, i32) {
    %c0_i32 = arith.constant 0 : i32
    %c0_i32_0 = arith.constant 0 : i32
    %c0_i32_1 = arith.constant 0 : i32
    return %c0_i32, %c0_i32_0 : i32, i32
  }
  func.func @transform_15(%arg0: i32, %arg1: i32) -> (i32, i32) {
    %c0_i32 = arith.constant 0 : i32
    %c0_i32_0 = arith.constant 0 : i32
    return %arg0, %c0_i32 : i32, i32
  }
}

</mosaic_0001>

<llo_original>
// kernel: tpu_custom_call.1
$region0: #{tpu_custom_call.1}
  #allocation0 [shape = 'u32[]', space=smem, size = 0x4, offset = 0x4, fixed_abs, tag = 'smem constant byte address 0x4 - core index']
  #allocation1 [shape = 'u32[144,128]{1,0:T(1,128)}', space=vmem, size = 0x12000, scoped, tag = 'internal scratch']
  %s0 = inlined_call_operand.hbm [shape: f32[24,128], index: 0, kind: input, shape index: {}]
  %s1 = inlined_call_operand.hbm [shape: f32[2,1,128], index: 1, kind: input, shape index: {}]
  %s2 = inlined_call_operand.hbm [shape: f32[2,1,128], index: 2, kind: input, shape index: {}]
  %s3 = inlined_call_operand.hbm [shape: bf16[2,128,384], index: 3, kind: input, shape index: {}]
  %s4 = inlined_call_operand.vmem [shape: f32[2,1,384], index: 4, kind: input, shape index: {}]
  %s5 = inlined_call_operand.hbm [shape: bf16[2,128,128], index: 5, kind: input, shape index: {}]
  %s6 = inlined_call_operand.vmem [shape: f32[2,1,128], index: 6, kind: input, shape index: {}]
  %s7 = inlined_call_operand.vmem [shape: f32[2,1,128], index: 7, kind: input, shape index: {}]
  %s8 = inlined_call_operand.vmem [shape: f32[2,1,128], index: 8, kind: input, shape index: {}]
  %s9 = inlined_call_operand.hbm [shape: bf16[2,128,512], index: 9, kind: input, shape index: {}]
  %s10 = inlined_call_operand.vmem [shape: f32[2,1,512], index: 10, kind: input, shape index: {}]
  %s11 = inlined_call_operand.hbm [shape: bf16[2,512,128], index: 11, kind: input, shape index: {}]
  %s12 = inlined_call_operand.vmem [shape: f32[2,1,128], index: 12, kind: input, shape index: {}]
  %s13 = inlined_call_operand.vmem [shape: f32[1,128], index: 13, kind: input, shape index: {}]
  %s14 = inlined_call_operand.vmem [shape: f32[1,128], index: 14, kind: input, shape index: {}]
  %s15 = inlined_call_operand.hbm [shape: f32[24,128], index: 15, kind: output, shape index: {}]
  %s16 = sld [smem:[#allocation0]]
  $region133: #{tpu_custom_call.1} parent=0
    _
  %s18 = ssub.s32 1, %s16
  %s19 = scalar_select 0, %s18, %s16
  $region1: #{tpu_custom_call.1} parent=0
    #allocation2 [shape = 'u8[12288]{0}', space=vmem, size = 0x3000, scoped, tag = 'input window, operand 0, single buffered']
    #allocation3 [shape = 's32[2]{0}', space=sflag, size = 0x8, scoped, tag = 'scoped memory for tpu_custom_call.1']
    #allocation4 [shape = 's32[2]{0}', space=sflag, size = 0x8, scoped, tag = 'scoped memory for tpu_custom_call.1']
    #allocation5 [shape = 'u8[1024]{0}', space=vmem, size = 0x400, scoped, tag = 'input window, operand 1']
    #allocation6 [shape = 's32[2]{0}', space=sflag, size = 0x8, scoped, tag = 'scoped memory for tpu_custom_call.1']
    #allocation7 [shape = 'u8[1024]{0}', space=vmem, size = 0x400, scoped, tag = 'input window, operand 2']
    #allocation8 [shape = 'u8[196608]{0}', space=vmem, size = 0x30000, scoped, tag = 'input window, operand 3']
    #allocation9 [shape = 's32[2]{0}', space=sflag, size = 0x8, scoped, tag = 'scoped memory for tpu_custom_call.1']
    #allocation10 [shape = 'u8[65536]{0}', space=vmem, size = 0x10000, scoped, tag = 'input window, operand 5']
    #allocation11 [shape = 'u8[262144]{0}', space=vmem, size = 0x40000, scoped, tag = 'input window, operand 9']
    #allocation12 [shape = 's32[2]{0}', space=sflag, size = 0x8, scoped, tag = 'scoped memory for tpu_custom_call.1']
    #allocation13 [shape = 'u8[262144]{0}', space=vmem, size = 0x40000, scoped, tag = 'input window, operand 11']
    #allocation14 [shape = 'u8[12288]{0}', space=vmem, size = 0x3000, scoped, tag = 'output window, operand 0, single buffered']
    %20 = vsyncpa [#allocation3], 0
    %21 = vsyncpa [#allocation6], 0
    %s22 = scalar_lea.sflag [#allocation6], 1
    %23 = vsyncpa %s22, 0
    %24 = vsyncpa [#allocation9], 0
    %s25 = scalar_lea.sflag [#allocation9], 1
    %26 = vsyncpa %s25, 0
    %27 = vsyncpa [#allocation12], 0
    %s28 = scalar_lea.sflag [#allocation12], 1
    %29 = vsyncpa %s28, 0
    %30 = vsyncpa [#allocation4], 0
    loop: start=0, step=1, limit=4
    $region2: #{tpu_custom_call.1} parent=1 // loop_pre_header
      _
    $region3: #{tpu_custom_call.1} parent=1 // loop_header
      %s32 = sphi 0, %s36
      %p33 = scmp.ge.s32.totalorder %s32, 4
      %s39 = sphi 0, %s51
      %s40 = sphi 0, %s47
      %s41 = sphi 0, %s39
      %s42 = sphi 0, %s40
      %s43 = sphi 0, %s41
      %s44 = sphi 0, %s42
      %s54 = sphi 0, %s56
      %s57 = sphi 0, %s54
      %s58 = sphi 0, %s57
      %s74 = sphi 0, %s58
      %s80 = sphi 0, %s82
      %s83 = sphi 0, %s80
      %s84 = sphi 0, %s83
      %s100 = sphi 0, %s84
      %s106 = sphi 0, %s108
      %s109 = sphi 0, %s106
      %s110 = sphi 0, %s109
      %s126 = sphi 0, %s110
      %s132 = sphi 0, %s134
      %s135 = sphi 0, %s132
      %s136 = sphi 0, %s135
      %s152 = sphi 0, %s136
      %s158 = sphi 0, %s160
      %s161 = sphi 0, %s158
      %s162 = sphi 0, %s161
      %s178 = sphi 0, %s162
      %s184 = sphi 0, %s186
      %s187 = sphi 0, %s184
      %s188 = sphi 0, %s187
      %s204 = sphi 0, %s188
      %s210 = sphi 0, %s212
      %s213 = sphi 0, %s210
      %s214 = sphi 0, %s213
      %s230 = sphi 0, %s214
      %s236 = sphi 0, %s238
      %s239 = sphi 0, %s236
      %s240 = sphi 0, %s239
      %s256 = sphi 0, %s240
      %s262 = sphi 0, %s264
      %s265 = sphi 0, %s262
      %s266 = sphi 0, %s265
      %s282 = sphi 0, %s266
      %s288 = sphi 0, %s290
      %s291 = sphi 0, %s288
      %s292 = sphi 0, %s291
      %s308 = sphi 0, %s292
      %s314 = sphi 0, %s316
      %s317 = sphi 0, %s314
      %s318 = sphi 0, %s317
      %s334 = sphi 0, %s318
      %s340 = sphi 0, %s342
      %s343 = sphi 0, %s340
      %s344 = sphi 0, %s343
      %s360 = sphi 0, %s344
      %s366 = sphi 0, %s368
      %s369 = sphi 0, %s366
      %s370 = sphi 0, %s369
      %s386 = sphi 0, %s370
      %s390 = sphi 0, %s390
      %s392 = sphi 0, %s390
      %s393 = sphi 0, %s392
      %s407 = sphi 0, %s393
      %s411 = sphi 0, %s411
      %s413 = sphi 0, %s411
      %s414 = sphi 0, %s413
      %s428 = sphi 0, %s414
      %s434 = sphi 0, %s436
      %s437 = sphi 0, %s434
      %s438 = sphi 0, %s437
      %s454 = sphi 0, %s438
    $region4: #{tpu_custom_call.1} parent=1 // loop_header_branch
      %35 = sbr.rel (%p33) target = $region8
    $region5: #{tpu_custom_call.1} parent=1 // loop_body
      %s37 = ssub.s32 %s32, 1
      %s38 = ssub.s32 %s32, 2
      %s45 = sadd.s32 1, %s40
      %p46 = scmp.ge.s32.totalorder %s45, 2
      %s47 = scalar_select %p46, 0, %s45
      %s48 = sadd.s32 1, %s39
      %s49 = scalar_select %p46, %s48, %s39
      %p50 = scmp.ge.s32.totalorder %s49, 1
      %s51 = scalar_select %p50, 0, %s49
      %s52 = ssub.s32 %s39, %s51
      %p53 = scmp.eq.s32.totalorder %s52, 0
      %s55 = sadd.s32 %s54, 1
      %s56 = scalar_select %p53, %s54, %s55
      %p59 = pneg %p53
      %p60 = scmp.eq.s32.totalorder %s32, 1
      %p61 = por %p59, %p60
      %p62 = scmp.ne.s32.totalorder %s54, %s57
      %p63 = scmp.eq.s32.totalorder %s32, 0
      %p64 = por %p62, %p63
      %p65 = scmp.ne.s32.totalorder %s54, %s57
      %p66 = scmp.eq.s32.totalorder %s37, 1
      %p67 = por %p65, %p66
      %p68 = scmp.ne.s32.totalorder %s57, %s58
      %p69 = scmp.eq.s32.totalorder %s37, 0
      %p70 = por %p68, %p69
      %p71 = scmp.ne.s32.totalorder %s57, %s58
      %p72 = scmp.eq.s32.totalorder %s38, 1
      %p73 = por %p71, %p72
      %p75 = scmp.ne.s32.totalorder %s58, %s74
      %p76 = scmp.eq.s32.totalorder %s38, 0
      %p77 = por %p75, %p76
      %s78 = ssub.s32 %s40, %s47
      %p79 = scmp.eq.s32.totalorder %s78, 0
      %s81 = sadd.s32 %s80, 1
      %s82 = scalar_select %p79, %s80, %s81
      %p85 = pneg %p79
      %p86 = scmp.eq.s32.totalorder %s32, 1
      %p87 = por %p85, %p86
      %p88 = scmp.ne.s32.totalorder %s80, %s83
      %p89 = scmp.eq.s32.totalorder %s32, 0
      %p90 = por %p88, %p89
      %p91 = scmp.ne.s32.totalorder %s80, %s83
      %p92 = scmp.eq.s32.totalorder %s37, 1
      %p93 = por %p91, %p92
      %p94 = scmp.ne.s32.totalorder %s83, %s84
      %p95 = scmp.eq.s32.totalorder %s37, 0
      %p96 = por %p94, %p95
      %p97 = scmp.ne.s32.totalorder %s83, %s84
      %p98 = scmp.eq.s32.totalorder %s38, 1
      %p99 = por %p97, %p98
      %p101 = scmp.ne.s32.totalorder %s84, %s100
      %p102 = scmp.eq.s32.totalorder %s38, 0
      %p103 = por %p101, %p102
      %s104 = ssub.s32 %s40, %s47
      %p105 = scmp.eq.s32.totalorder %s104, 0
      %s107 = sadd.s32 %s106, 1
      %s108 = scalar_select %p105, %s106, %s107
      %p111 = pneg %p105
      %p112 = scmp.eq.s32.totalorder %s32, 1
      %p113 = por %p111, %p112
      %p114 = scmp.ne.s32.totalorder %s106, %s109
      %p115 = scmp.eq.s32.totalorder %s32, 0
      %p116 = por %p114, %p115
      %p117 = scmp.ne.s32.totalorder %s106, %s109
      %p118 = scmp.eq.s32.totalorder %s37, 1
      %p119 = por %p117, %p118
      %p120 = scmp.ne.s32.totalorder %s109, %s110
      %p121 = scmp.eq.s32.totalorder %s37, 0
      %p122 = por %p120, %p121
      %p123 = scmp.ne.s32.totalorder %s109, %s110
      %p124 = scmp.eq.s32.totalorder %s38, 1
      %p125 = por %p123, %p124
      %p127 = scmp.ne.s32.totalorder %s110, %s126
      %p128 = scmp.eq.s32.totalorder %s38, 0
      %p129 = por %p127, %p128
      %s130 = ssub.s32 %s40, %s47
      %p131 = scmp.eq.s32.totalorder %s130, 0
      %s133 = sadd.s32 %s132, 1
      %s134 = scalar_select %p131, %s132, %s133
      %p137 = pneg %p131
      %p138 = scmp.eq.s32.totalorder %s32, 1
      %p139 = por %p137, %p138
      %p140 = scmp.ne.s32.totalorder %s132, %s135
      %p141 = scmp.eq.s32.totalorder %s32, 0
      %p142 = por %p140, %p141
      %p143 = scmp.ne.s32.totalorder %s132, %s135
      %p144 = scmp.eq.s32.totalorder %s37, 1
      %p145 = por %p143, %p144
      %p146 = scmp.ne.s32.totalorder %s135, %s136
      %p147 = scmp.eq.s32.totalorder %s37, 0
      %p148 = por %p146, %p147
      %p149 = scmp.ne.s32.totalorder %s135, %s136
      %p150 = scmp.eq.s32.totalorder %s38, 1
      %p151 = por %p149, %p150
      %p153 = scmp.ne.s32.totalorder %s136, %s152
      %p154 = scmp.eq.s32.totalorder %s38, 0
      %p155 = por %p153, %p154
      %s156 = ssub.s32 %s40, %s47
      %p157 = scmp.eq.s32.totalorder %s156, 0
      %s159 = sadd.s32 %s158, 1
      %s160 = scalar_select %p157, %s158, %s159
      %p163 = pneg %p157
      %p164 = scmp.eq.s32.totalorder %s32, 1
      %p165 = por %p163, %p164
      %p166 = scmp.ne.s32.totalorder %s158, %s161
      %p167 = scmp.eq.s32.totalorder %s32, 0
      %p168 = por %p166, %p167
      %p169 = scmp.ne.s32.totalorder %s158, %s161
      %p170 = scmp.eq.s32.totalorder %s37, 1
      %p171 = por %p169, %p170
      %p172 = scmp.ne.s32.totalorder %s161, %s162
      %p173 = scmp.eq.s32.totalorder %s37, 0
      %p174 = por %p172, %p173
      %p175 = scmp.ne.s32.totalorder %s161, %s162
      %p176 = scmp.eq.s32.totalorder %s38, 1
      %p177 = por %p175, %p176
      %p179 = scmp.ne.s32.totalorder %s162, %s178
      %p180 = scmp.eq.s32.totalorder %s38, 0
      %p181 = por %p179, %p180
      %s182 = ssub.s32 %s40, %s47
      %p183 = scmp.eq.s32.totalorder %s182, 0
      %s185 = sadd.s32 %s184, 1
      %s186 = scalar_select %p183, %s184, %s185
      %p189 = pneg %p183
      %p190 = scmp.eq.s32.totalorder %s32, 1
      %p191 = por %p189, %p190
      %p192 = scmp.ne.s32.totalorder %s184, %s187
      %p193 = scmp.eq.s32.totalorder %s32, 0
      %p194 = por %p192, %p193
      %p195 = scmp.ne.s32.totalorder %s184, %s187
      %p196 = scmp.eq.s32.totalorder %s37, 1
      %p197 = por %p195, %p196
      %p198 = scmp.ne.s32.totalorder %s187, %s188
      %p199 = scmp.eq.s32.totalorder %s37, 0
      %p200 = por %p198, %p199
      %p201 = scmp.ne.s32.totalorder %s187, %s188
      %p202 = scmp.eq.s32.totalorder %s38, 1
      %p203 = por %p201, %p202
      %p205 = scmp.ne.s32.totalorder %s188, %s204
      %p206 = scmp.eq.s32.totalorder %s38, 0
      %p207 = por %p205, %p206
      %s208 = ssub.s32 %s40, %s47
      %p209 = scmp.eq.s32.totalorder %s208, 0
      %s211 = sadd.s32 %s210, 1
      %s212 = scalar_select %p209, %s210, %s211
      %p215 = pneg %p209
      %p216 = scmp.eq.s32.totalorder %s32, 1
      %p217 = por %p215, %p216
      %p218 = scmp.ne.s32.totalorder %s210, %s213
      %p219 = scmp.eq.s32.totalorder %s32, 0
      %p220 = por %p218, %p219
      %p221 = scmp.ne.s32.totalorder %s210, %s213
      %p222 = scmp.eq.s32.totalorder %s37, 1
      %p223 = por %p221, %p222
      %p224 = scmp.ne.s32.totalorder %s213, %s214
      %p225 = scmp.eq.s32.totalorder %s37, 0
      %p226 = por %p224, %p225
      %p227 = scmp.ne.s32.totalorder %s213, %s214
      %p228 = scmp.eq.s32.totalorder %s38, 1
      %p229 = por %p227, %p228
      %p231 = scmp.ne.s32.totalorder %s214, %s230
      %p232 = scmp.eq.s32.totalorder %s38, 0
      %p233 = por %p231, %p232
      %s234 = ssub.s32 %s40, %s47
      %p235 = scmp.eq.s32.totalorder %s234, 0
      %s237 = sadd.s32 %s236, 1
      %s238 = scalar_select %p235, %s236, %s237
      %p241 = pneg %p235
      %p242 = scmp.eq.s32.totalorder %s32, 1
      %p243 = por %p241, %p242
      %p244 = scmp.ne.s32.totalorder %s236, %s239
      %p245 = scmp.eq.s32.totalorder %s32, 0
      %p246 = por %p244, %p245
      %p247 = scmp.ne.s32.totalorder %s236, %s239
      %p248 = scmp.eq.s32.totalorder %s37, 1
      %p249 = por %p247, %p248
      %p250 = scmp.ne.s32.totalorder %s239, %s240
      %p251 = scmp.eq.s32.totalorder %s37, 0
      %p252 = por %p250, %p251
      %p253 = scmp.ne.s32.totalorder %s239, %s240
      %p254 = scmp.eq.s32.totalorder %s38, 1
      %p255 = por %p253, %p254
      %p257 = scmp.ne.s32.totalorder %s240, %s256
      %p258 = scmp.eq.s32.totalorder %s38, 0
      %p259 = por %p257, %p258
      %s260 = ssub.s32 %s40, %s47
      %p261 = scmp.eq.s32.totalorder %s260, 0
      %s263 = sadd.s32 %s262, 1
      %s264 = scalar_select %p261, %s262, %s263
      %p267 = pneg %p261
      %p268 = scmp.eq.s32.totalorder %s32, 1
      %p269 = por %p267, %p268
      %p270 = scmp.ne.s32.totalorder %s262, %s265
      %p271 = scmp.eq.s32.totalorder %s32, 0
      %p272 = por %p270, %p271
      %p273 = scmp.ne.s32.totalorder %s262, %s265
      %p274 = scmp.eq.s32.totalorder %s37, 1
      %p275 = por %p273, %p274
      %p276 = scmp.ne.s32.totalorder %s265, %s266
      %p277 = scmp.eq.s32.totalorder %s37, 0
      %p278 = por %p276, %p277
      %p279 = scmp.ne.s32.totalorder %s265, %s266
      %p280 = scmp.eq.s32.totalorder %s38, 1
      %p281 = por %p279, %p280
      %p283 = scmp.ne.s32.totalorder %s266, %s282
      %p284 = scmp.eq.s32.totalorder %s38, 0
      %p285 = por %p283, %p284
      %s286 = ssub.s32 %s40, %s47
      %p287 = scmp.eq.s32.totalorder %s286, 0
      %s289 = sadd.s32 %s288, 1
      %s290 = scalar_select %p287, %s288, %s289
      %p293 = pneg %p287
      %p294 = scmp.eq.s32.totalorder %s32, 1
      %p295 = por %p293, %p294
      %p296 = scmp.ne.s32.totalorder %s288, %s291
      %p297 = scmp.eq.s32.totalorder %s32, 0
      %p298 = por %p296, %p297
      %p299 = scmp.ne.s32.totalorder %s288, %s291
      %p300 = scmp.eq.s32.totalorder %s37, 1
      %p301 = por %p299, %p300
      %p302 = scmp.ne.s32.totalorder %s291, %s292
      %p303 = scmp.eq.s32.totalorder %s37, 0
      %p304 = por %p302, %p303
      %p305 = scmp.ne.s32.totalorder %s291, %s292
      %p306 = scmp.eq.s32.totalorder %s38, 1
      %p307 = por %p305, %p306
      %p309 = scmp.ne.s32.totalorder %s292, %s308
      %p310 = scmp.eq.s32.totalorder %s38, 0
      %p311 = por %p309, %p310
      %s312 = ssub.s32 %s40, %s47
      %p313 = scmp.eq.s32.totalorder %s312, 0
      %s315 = sadd.s32 %s314, 1
      %s316 = scalar_select %p313, %s314, %s315
      %p319 = pneg %p313
      %p320 = scmp.eq.s32.totalorder %s32, 1
      %p321 = por %p319, %p320
      %p322 = scmp.ne.s32.totalorder %s314, %s317
      %p323 = scmp.eq.s32.totalorder %s32, 0
      %p324 = por %p322, %p323
      %p325 = scmp.ne.s32.totalorder %s314, %s317
      %p326 = scmp.eq.s32.totalorder %s37, 1
      %p327 = por %p325, %p326
      %p328 = scmp.ne.s32.totalorder %s317, %s318
      %p329 = scmp.eq.s32.totalorder %s37, 0
      %p330 = por %p328, %p329
      %p331 = scmp.ne.s32.totalorder %s317, %s318
      %p332 = scmp.eq.s32.totalorder %s38, 1
      %p333 = por %p331, %p332
      %p335 = scmp.ne.s32.totalorder %s318, %s334
      %p336 = scmp.eq.s32.totalorder %s38, 0
      %p337 = por %p335, %p336
      %s338 = ssub.s32 %s40, %s47
      %p339 = scmp.eq.s32.totalorder %s338, 0
      %s341 = sadd.s32 %s340, 1
      %s342 = scalar_select %p339, %s340, %s341
      %p345 = pneg %p339
      %p346 = scmp.eq.s32.totalorder %s32, 1
      %p347 = por %p345, %p346
      %p348 = scmp.ne.s32.totalorder %s340, %s343
      %p349 = scmp.eq.s32.totalorder %s32, 0
      %p350 = por %p348, %p349
      %p351 = scmp.ne.s32.totalorder %s340, %s343
      %p352 = scmp.eq.s32.totalorder %s37, 1
      %p353 = por %p351, %p352
      %p354 = scmp.ne.s32.totalorder %s343, %s344
      %p355 = scmp.eq.s32.totalorder %s37, 0
      %p356 = por %p354, %p355
      %p357 = scmp.ne.s32.totalorder %s343, %s344
      %p358 = scmp.eq.s32.totalorder %s38, 1
      %p359 = por %p357, %p358
      %p361 = scmp.ne.s32.totalorder %s344, %s360
      %p362 = scmp.eq.s32.totalorder %s38, 0
      %p363 = por %p361, %p362
      %s364 = ssub.s32 %s40, %s47
      %p365 = scmp.eq.s32.totalorder %s364, 0
      %s367 = sadd.s32 %s366, 1
      %s368 = scalar_select %p365, %s366, %s367
      %p371 = pneg %p365
      %p372 = scmp.eq.s32.totalorder %s32, 1
      %p373 = por %p371, %p372
      %p374 = scmp.ne.s32.totalorder %s366, %s369
      %p375 = scmp.eq.s32.totalorder %s32, 0
      %p376 = por %p374, %p375
      %p377 = scmp.ne.s32.totalorder %s366, %s369
      %p378 = scmp.eq.s32.totalorder %s37, 1
      %p379 = por %p377, %p378
      %p380 = scmp.ne.s32.totalorder %s369, %s370
      %p381 = scmp.eq.s32.totalorder %s37, 0
      %p382 = por %p380, %p381
      %p383 = scmp.ne.s32.totalorder %s369, %s370
      %p384 = scmp.eq.s32.totalorder %s38, 1
      %p385 = por %p383, %p384
      %p387 = scmp.ne.s32.totalorder %s370, %s386
      %p388 = scmp.eq.s32.totalorder %s38, 0
      %p389 = por %p387, %p388
      %s391 = sadd.s32 %s390, 1
      %p394 = scmp.eq.s32.totalorder %s32, 1
      %p395 = scmp.ne.s32.totalorder %s390, %s392
      %p396 = scmp.eq.s32.totalorder %s32, 0
      %p397 = por %p395, %p396
      %p398 = scmp.ne.s32.totalorder %s390, %s392
      %p399 = scmp.eq.s32.totalorder %s37, 1
      %p400 = por %p398, %p399
      %p401 = scmp.ne.s32.totalorder %s392, %s393
      %p402 = scmp.eq.s32.totalorder %s37, 0
      %p403 = por %p401, %p402
      %p404 = scmp.ne.s32.totalorder %s392, %s393
      %p405 = scmp.eq.s32.totalorder %s38, 1
      %p406 = por %p404, %p405
      %p408 = scmp.ne.s32.totalorder %s393, %s407
      %p409 = scmp.eq.s32.totalorder %s38, 0
      %p410 = por %p408, %p409
      %s412 = sadd.s32 %s411, 1
      %p415 = scmp.eq.s32.totalorder %s32, 1
      %p416 = scmp.ne.s32.totalorder %s411, %s413
      %p417 = scmp.eq.s32.totalorder %s32, 0
      %p418 = por %p416, %p417
      %p419 = scmp.ne.s32.totalorder %s411, %s413
      %p420 = scmp.eq.s32.totalorder %s37, 1
      %p421 = por %p419, %p420
      %p422 = scmp.ne.s32.totalorder %s413, %s414
      %p423 = scmp.eq.s32.totalorder %s37, 0
      %p424 = por %p422, %p423
      %p425 = scmp.ne.s32.totalorder %s413, %s414
      %p426 = scmp.eq.s32.totalorder %s38, 1
      %p427 = por %p425, %p426
      %p429 = scmp.ne.s32.totalorder %s414, %s428
      %p430 = scmp.eq.s32.totalorder %s38, 0
      %p431 = por %p429, %p430
      %s432 = ssub.s32 %s39, %s51
      %p433 = scmp.eq.s32.totalorder %s432, 0
      %s435 = sadd.s32 %s434, 1
      %s436 = scalar_select %p433, %s434, %s435
      %p439 = pneg %p433
      %p440 = scmp.eq.s32.totalorder %s32, 1
      %p441 = por %p439, %p440
      %p442 = scmp.ne.s32.totalorder %s434, %s437
      %p443 = scmp.eq.s32.totalorder %s32, 0
      %p444 = por %p442, %p443
      %p445 = scmp.ne.s32.totalorder %s434, %s437
      %p446 = scmp.eq.s32.totalorder %s37, 1
      %p447 = por %p445, %p446
      %p448 = scmp.ne.s32.totalorder %s437, %s438
      %p449 = scmp.eq.s32.totalorder %s37, 0
      %p450 = por %p448, %p449
      %p451 = scmp.ne.s32.totalorder %s437, %s438
      %p452 = scmp.eq.s32.totalorder %s38, 1
      %p453 = por %p451, %p452
      %p455 = scmp.ne.s32.totalorder %s438, %s454
      %p456 = scmp.eq.s32.totalorder %s38, 0
      %p457 = por %p455, %p456
      %p458 = scmp.le.s32.totalorder 1, %s32
      %p459 = scmp.lt.s32.totalorder %s32, 3
      %p460 = pnand %p458, %p459
      %p461 = pneg %p460
      // Predicated region
      $region9: #{tpu_custom_call.1} parent=5 // pred_check
        _
      $region10: #{tpu_custom_call.1} parent=5 // pred_check_branch
        %463 = sbr.rel (%p460) target = $region12
      $region11: #{tpu_custom_call.1} parent=5 // pred_region
        %s464 = ssub.s32 %s32, 1
        // Predicated region
        $region13: #{tpu_custom_call.1} parent=11 // pred_check
          %p465 = pneg %p70
        $region14: #{tpu_custom_call.1} parent=11 // pred_check_branch
          %467 = sbr.rel (%p465) target = $region16
        $region15: #{tpu_custom_call.1} parent=11 // pred_region
          %s468 = smul.u32 3, %s41
          %s470 = ssub.s32 384, 384
          %471 = vsyncadd [#allocation3], %s470
          %s472 = smul.addr %s468, 128
          %s473 = scalar_lea.hbm %s0, %s472
          %s474 = sshll.u32 [#allocation2], 4
          %s475 = int_to_ptr.vmem [resolvable:$true] %s474
          %480 = dma.hbm_to_vmem [thread:$0]  %s473, 384, %s475, [#allocation3], 128, 128, 8
        $region16: #{tpu_custom_call.1} parent=11 // pred_fallthru
          _
        // Predicated region
        $region17: #{tpu_custom_call.1} parent=11 // pred_check
          %p481 = pneg %p403
        $region18: #{tpu_custom_call.1} parent=11 // pred_check_branch
          %483 = sbr.rel (%p481) target = $region20
        $region19: #{tpu_custom_call.1} parent=11 // pred_region
          _
        $region20: #{tpu_custom_call.1} parent=11 // pred_fallthru
          _
        // Predicated region
        $region21: #{tpu_custom_call.1} parent=11 // pred_check
          %p484 = pneg %p424
        $region22: #{tpu_custom_call.1} parent=11 // pred_check_branch
          %486 = sbr.rel (%p484) target = $region24
        $region23: #{tpu_custom_call.1} parent=11 // pred_region
          _
        $region24: #{tpu_custom_call.1} parent=11 // pred_fallthru
          _
      $region12: #{tpu_custom_call.1} parent=5 // pred_fallthru
        _
      %p487 = scmp.lt.s32.totalorder %s32, 2
      // Predicated region
      $region25: #{tpu_custom_call.1} parent=5 // pred_check
        %p488 = pneg %p487
      $region26: #{tpu_custom_call.1} parent=5 // pred_check_branch
        %490 = sbr.rel (%p488) target = $region28
      $region27: #{tpu_custom_call.1} parent=5 // pred_region
        // Predicated region
        $region29: #{tpu_custom_call.1} parent=27 // pred_check
          %p491 = pneg %p90
        $region30: #{tpu_custom_call.1} parent=27 // pred_check_branch
          %493 = sbr.rel (%p491) target = $region32
        $region31: #{tpu_custom_call.1} parent=27 // pred_region
          %s494 = sand.u32 %s32, 1
          %s495 = scalar_lea.sflag [#allocation6], %s494
          %s496 = sand.u32 %s80, 1
          %s497 = scalar_lea.vmem [#allocation5], %s496
          %s499 = ssub.s32 16, 16
          %500 = vsyncadd %s495, %s499
          %s501 = smul.addr %s40, 16
          %s502 = scalar_lea.hbm %s1, %s501
          %s504 = sshll.u32 %s497, 4
          %s505 = int_to_ptr.vmem [resolvable:$true] %s504
          %507 = dma.hbm_to_vmem [thread:$0]  %s502, 16, %s505, %s495
        $region32: #{tpu_custom_call.1} parent=27 // pred_fallthru
          _
        // Predicated region
        $region33: #{tpu_custom_call.1} parent=27 // pred_check
          %p508 = pneg %p116
        $region34: #{tpu_custom_call.1} parent=27 // pred_check_branch
          %510 = sbr.rel (%p508) target = $region36
        $region35: #{tpu_custom_call.1} parent=27 // pred_region
          %s511 = sand.u32 %s32, 1
          %s512 = scalar_lea.sflag [#allocation6], %s511
          %s513 = sand.u32 %s106, 1
          %s514 = scalar_lea.vmem [#allocation7], %s513
          %s516 = ssub.s32 16, 16
          %517 = vsyncadd %s512, %s516
          %s518 = smul.addr %s40, 16
          %s519 = scalar_lea.hbm %s2, %s518
          %s521 = sshll.u32 %s514, 4
          %s522 = int_to_ptr.vmem [resolvable:$true] %s521
          %524 = dma.hbm_to_vmem [thread:$0]  %s519, 16, %s522, %s512
        $region36: #{tpu_custom_call.1} parent=27 // pred_fallthru
          _
        // Predicated region
        $region37: #{tpu_custom_call.1} parent=27 // pred_check
          %p525 = pneg %p142
        $region38: #{tpu_custom_call.1} parent=27 // pred_check_branch
          %527 = sbr.rel (%p525) target = $region40
        $region39: #{tpu_custom_call.1} parent=27 // pred_region
          %s528 = sand.u32 %s32, 1
          %s529 = scalar_lea.sflag [#allocation9], %s528
          %s530 = sand.u32 %s132, 1
          %s531 = smul.addr %s530, 192
          %s532 = scalar_lea.vmem [#allocation8], %s531
          %s534 = ssub.s32 3072, 3072
          %535 = vsyncadd %s529, %s534
          %s536 = smul.addr %s40, 48
          %s537 = smul.addr %s536, 64
          %s538 = scalar_lea.hbm %s3, %s537
          %s539 = sshll.u32 %s532, 4
          %s540 = int_to_ptr.vmem [resolvable:$true] %s539
          %545 = dma.hbm_to_vmem [thread:$0]  %s538, 3072, %s540, %s529, 192, 192, 12
        $region40: #{tpu_custom_call.1} parent=27 // pred_fallthru
          _
        // Predicated region
        $region41: #{tpu_custom_call.1} parent=27 // pred_check
          %p546 = pneg %p168
        $region42: #{tpu_custom_call.1} parent=27 // pred_check_branch
          %548 = sbr.rel (%p546) target = $region44
        $region43: #{tpu_custom_call.1} parent=27 // pred_region
          %p549 = scmp.lt.s32.totalorder %s40, 1
          %s550 = scalar_select %p549, %s40, 1
          %s551 = smul.addr %s550, 3
          %s552 = scalar_lea.vmem %s4, %s551
        $region44: #{tpu_custom_call.1} parent=27 // pred_fallthru
          _
        // Predicated region
        $region45: #{tpu_custom_call.1} parent=27 // pred_check
          %p553 = pneg %p194
        $region46: #{tpu_custom_call.1} parent=27 // pred_check_branch
          %555 = sbr.rel (%p553) target = $region48
        $region47: #{tpu_custom_call.1} parent=27 // pred_region
          %s556 = sand.u32 %s32, 1
          %s557 = scalar_lea.sflag [#allocation9], %s556
          %s558 = sand.u32 %s184, 1
          %s559 = smul.addr %s558, 64
          %s560 = scalar_lea.vmem [#allocation10], %s559
          %s562 = ssub.s32 1024, 1024
          %563 = vsyncadd %s557, %s562
          %s564 = smul.addr %s40, 16
          %s565 = smul.addr %s564, 64
          %s566 = scalar_lea.hbm %s5, %s565
          %s567 = sshll.u32 %s560, 4
          %s568 = int_to_ptr.vmem [resolvable:$true] %s567
          %573 = dma.hbm_to_vmem [thread:$0]  %s566, 1024, %s568, %s557, 64, 64, 4
        $region48: #{tpu_custom_call.1} parent=27 // pred_fallthru
          _
        // Predicated region
        $region49: #{tpu_custom_call.1} parent=27 // pred_check
          %p574 = pneg %p220
        $region50: #{tpu_custom_call.1} parent=27 // pred_check_branch
          %576 = sbr.rel (%p574) target = $region52
        $region51: #{tpu_custom_call.1} parent=27 // pred_region
          %p577 = scmp.lt.s32.totalorder %s40, 1
          %s578 = scalar_select %p577, %s40, 1
          %s579 = scalar_lea.vmem %s6, %s578
        $region52: #{tpu_custom_call.1} parent=27 // pred_fallthru
          _
        // Predicated region
        $region53: #{tpu_custom_call.1} parent=27 // pred_check
          %p580 = pneg %p246
        $region54: #{tpu_custom_call.1} parent=27 // pred_check_branch
          %582 = sbr.rel (%p580) target = $region56
        $region55: #{tpu_custom_call.1} parent=27 // pred_region
          %p583 = scmp.lt.s32.totalorder %s40, 1
          %s584 = scalar_select %p583, %s40, 1
          %s585 = scalar_lea.vmem %s7, %s584
        $region56: #{tpu_custom_call.1} parent=27 // pred_fallthru
          _
        // Predicated region
        $region57: #{tpu_custom_call.1} parent=27 // pred_check
          %p586 = pneg %p272
        $region58: #{tpu_custom_call.1} parent=27 // pred_check_branch
          %588 = sbr.rel (%p586) target = $region60
        $region59: #{tpu_custom_call.1} parent=27 // pred_region
          %p589 = scmp.lt.s32.totalorder %s40, 1
          %s590 = scalar_select %p589, %s40, 1
          %s591 = scalar_lea.vmem %s8, %s590
        $region60: #{tpu_custom_call.1} parent=27 // pred_fallthru
          _
        // Predicated region
        $region61: #{tpu_custom_call.1} parent=27 // pred_check
          %p592 = pneg %p298
        $region62: #{tpu_custom_call.1} parent=27 // pred_check_branch
          %594 = sbr.rel (%p592) target = $region64
        $region63: #{tpu_custom_call.1} parent=27 // pred_region
          %s595 = sand.u32 %s32, 1
          %s596 = scalar_lea.sflag [#allocation12], %s595
          %s597 = sand.u32 %s288, 1
          %s598 = smul.addr %s597, 256
          %s599 = scalar_lea.vmem [#allocation11], %s598
          %s601 = ssub.s32 4096, 4096
          %602 = vsyncadd %s596, %s601
          %s603 = smul.addr %s40, 64
          %s604 = smul.addr %s603, 64
          %s605 = scalar_lea.hbm %s9, %s604
          %s606 = sshll.u32 %s599, 4
          %s607 = int_to_ptr.vmem [resolvable:$true] %s606
          %612 = dma.hbm_to_vmem [thread:$0]  %s605, 4096, %s607, %s596, 256, 256, 16
        $region64: #{tpu_custom_call.1} parent=27 // pred_fallthru
          _
        // Predicated region
        $region65: #{tpu_custom_call.1} parent=27 // pred_check
          %p613 = pneg %p324
        $region66: #{tpu_custom_call.1} parent=27 // pred_check_branch
          %615 = sbr.rel (%p613) target = $region68
        $region67: #{tpu_custom_call.1} parent=27 // pred_region
          %p616 = scmp.lt.s32.totalorder %s40, 1
          %s617 = scalar_select %p616, %s40, 1
          %s618 = smul.addr %s617, 4
          %s619 = scalar_lea.vmem %s10, %s618
        $region68: #{tpu_custom_call.1} parent=27 // pred_fallthru
          _
        // Predicated region
        $region69: #{tpu_custom_call.1} parent=27 // pred_check
          %p620 = pneg %p350
        $region70: #{tpu_custom_call.1} parent=27 // pred_check_branch
          %622 = sbr.rel (%p620) target = $region72
        $region71: #{tpu_custom_call.1} parent=27 // pred_region
          %s623 = sand.u32 %s32, 1
          %s624 = scalar_lea.sflag [#allocation12], %s623
          %s625 = sand.u32 %s340, 1
          %s626 = smul.addr %s625, 256
          %s627 = scalar_lea.vmem [#allocation13], %s626
          %s629 = ssub.s32 4096, 4096
          %630 = vsyncadd %s624, %s629
          %s631 = smul.addr %s40, 64
          %s632 = smul.addr %s631, 64
          %s633 = scalar_lea.hbm %s11, %s632
          %s634 = sshll.u32 %s627, 4
          %s635 = int_to_ptr.vmem [resolvable:$true] %s634
          %640 = dma.hbm_to_vmem [thread:$0]  %s633, 4096, %s635, %s624, 64, 64, 4
        $region72: #{tpu_custom_call.1} parent=27 // pred_fallthru
          _
        // Predicated region
        $region73: #{tpu_custom_call.1} parent=27 // pred_check
          %p641 = pneg %p376
        $region74: #{tpu_custom_call.1} parent=27 // pred_check_branch
          %643 = sbr.rel (%p641) target = $region76
        $region75: #{tpu_custom_call.1} parent=27 // pred_region
          %p644 = scmp.lt.s32.totalorder %s40, 1
          %s645 = scalar_select %p644, %s40, 1
          %s646 = scalar_lea.vmem %s12, %s645
        $region76: #{tpu_custom_call.1} parent=27 // pred_fallthru
          _
      $region28: #{tpu_custom_call.1} parent=5 // pred_fallthru
        _
      %p647 = scmp.le.s32.totalorder 1, %s32
      %p648 = scmp.lt.s32.totalorder %s32, 3
      %p649 = pnand %p647, %p648
      %p650 = pneg %p649
      // Predicated region
      $region77: #{tpu_custom_call.1} parent=5 // pred_check
        _
      $region78: #{tpu_custom_call.1} parent=5 // pred_check_branch
        %652 = sbr.rel (%p649) target = $region80
      $region79: #{tpu_custom_call.1} parent=5 // pred_region
        %s653 = ssub.s32 %s32, 1
        // Predicated region
        $region81: #{tpu_custom_call.1} parent=79 // pred_check
          %p654 = pneg %p70
        $region82: #{tpu_custom_call.1} parent=79 // pred_check_branch
          %656 = sbr.rel (%p654) target = $region84
        $region83: #{tpu_custom_call.1} parent=79 // pred_region
          %657 = dma.done [#allocation3], 384
        $region84: #{tpu_custom_call.1} parent=79 // pred_fallthru
          _
        %s658 = sand.u32 %s37, 1
        %s659 = scalar_lea.sflag [#allocation6], %s658
        %s660 = sand.u32 %s83, 1
        %s661 = scalar_lea.vmem [#allocation5], %s660
        // Predicated region
        $region85: #{tpu_custom_call.1} parent=79 // pred_check
          %p662 = pneg %p96
        $region86: #{tpu_custom_call.1} parent=79 // pred_check_branch
          %664 = sbr.rel (%p662) target = $region88
        $region87: #{tpu_custom_call.1} parent=79 // pred_region
          %665 = dma.done %s659, 16
        $region88: #{tpu_custom_call.1} parent=79 // pred_fallthru
          _
        %s666 = sand.u32 %s37, 1
        %s667 = scalar_lea.sflag [#allocation6], %s666
        %s668 = sand.u32 %s109, 1
        %s669 = scalar_lea.vmem [#allocation7], %s668
        // Predicated region
        $region89: #{tpu_custom_call.1} parent=79 // pred_check
          %p670 = pneg %p122
        $region90: #{tpu_custom_call.1} parent=79 // pred_check_branch
          %672 = sbr.rel (%p670) target = $region92
        $region91: #{tpu_custom_call.1} parent=79 // pred_region
          %673 = dma.done %s667, 16
        $region92: #{tpu_custom_call.1} parent=79 // pred_fallthru
          _
        %s674 = sand.u32 %s37, 1
        %s675 = scalar_lea.sflag [#allocation9], %s674
        %s676 = sand.u32 %s135, 1
        %s677 = smul.addr %s676, 192
        %s678 = scalar_lea.vmem [#allocation8], %s677
        // Predicated region
        $region93: #{tpu_custom_call.1} parent=79 // pred_check
          %p679 = pneg %p148
        $region94: #{tpu_custom_call.1} parent=79 // pred_check_branch
          %681 = sbr.rel (%p679) target = $region96
        $region95: #{tpu_custom_call.1} parent=79 // pred_region
          %682 = dma.done %s675, 3072
        $region96: #{tpu_custom_call.1} parent=79 // pred_fallthru
          _
        %s683 = sand.u32 %s37, 1
        %s684 = scalar_lea.sflag [#allocation9], %s683
        %s685 = sand.u32 %s187, 1
        %s686 = smul.addr %s685, 64
        %s687 = scalar_lea.vmem [#allocation10], %s686
        // Predicated region
        $region97: #{tpu_custom_call.1} parent=79 // pred_check
          %p688 = pneg %p200
        $region98: #{tpu_custom_call.1} parent=79 // pred_check_branch
          %690 = sbr.rel (%p688) target = $region100
        $region99: #{tpu_custom_call.1} parent=79 // pred_region
          %691 = dma.done %s684, 1024
        $region100: #{tpu_custom_call.1} parent=79 // pred_fallthru
          _
        %s692 = sand.u32 %s37, 1
        %s693 = scalar_lea.sflag [#allocation12], %s692
        %s694 = sand.u32 %s291, 1
        %s695 = smul.addr %s694, 256
        %s696 = scalar_lea.vmem [#allocation11], %s695
        // Predicated region
        $region101: #{tpu_custom_call.1} parent=79 // pred_check
          %p697 = pneg %p304
        $region102: #{tpu_custom_call.1} parent=79 // pred_check_branch
          %699 = sbr.rel (%p697) target = $region104
        $region103: #{tpu_custom_call.1} parent=79 // pred_region
          %700 = dma.done %s693, 4096
        $region104: #{tpu_custom_call.1} parent=79 // pred_fallthru
          _
        %s701 = sand.u32 %s37, 1
        %s702 = scalar_lea.sflag [#allocation12], %s701
        %s703 = sand.u32 %s343, 1
        %s704 = smul.addr %s703, 256
        %s705 = scalar_lea.vmem [#allocation13], %s704
        // Predicated region
        $region105: #{tpu_custom_call.1} parent=79 // pred_check
          %p706 = pneg %p356
        $region106: #{tpu_custom_call.1} parent=79 // pred_check_branch
          %708 = sbr.rel (%p706) target = $region108
        $region107: #{tpu_custom_call.1} parent=79 // pred_region
          %709 = dma.done %s702, 4096
        $region108: #{tpu_custom_call.1} parent=79 // pred_fallthru
          _
        %p710 = pneg %p70
        %p711 = pneg %p67
        %s712 = sand.u32 %s37, 1
        %s713 = scalar_lea.sflag [#allocation6], %s712
        %s714 = sand.u32 %s83, 1
        %s715 = scalar_lea.vmem [#allocation5], %s714
        %p716 = pneg %p96
        %p717 = pneg %p93
        %s718 = sand.u32 %s37, 1
        %s719 = scalar_lea.sflag [#allocation6], %s718
        %s720 = sand.u32 %s109, 1
        %s721 = scalar_lea.vmem [#allocation7], %s720
        %p722 = pneg %p122
        %p723 = pneg %p119
        %s724 = sand.u32 %s37, 1
        %s725 = scalar_lea.sflag [#allocation9], %s724
        %s726 = sand.u32 %s135, 1
        %s727 = smul.addr %s726, 192
        %s728 = scalar_lea.vmem [#allocation8], %s727
        %p729 = pneg %p148
        %p730 = pneg %p145
        %p731 = scmp.lt.s32.totalorder %s42, 1
        %s732 = scalar_select %p731, %s42, 1
        %s733 = smul.addr %s732, 3
        %s734 = scalar_lea.vmem %s4, %s733
        %p735 = pneg %p174
        %p736 = pneg %p171
        %s737 = sand.u32 %s37, 1
        %s738 = scalar_lea.sflag [#allocation9], %s737
        %s739 = sand.u32 %s187, 1
        %s740 = smul.addr %s739, 64
        %s741 = scalar_lea.vmem [#allocation10], %s740
        %p742 = pneg %p200
        %p743 = pneg %p197
        %p744 = scmp.lt.s32.totalorder %s42, 1
        %s745 = scalar_select %p744, %s42, 1
        %s746 = scalar_lea.vmem %s6, %s745
        %p747 = pneg %p226
        %p748 = pneg %p223
        %p749 = scmp.lt.s32.totalorder %s42, 1
        %s750 = scalar_select %p749, %s42, 1
        %s751 = scalar_lea.vmem %s7, %s750
        %p752 = pneg %p252
        %p753 = pneg %p249
        %p754 = scmp.lt.s32.totalorder %s42, 1
        %s755 = scalar_select %p754, %s42, 1
        %s756 = scalar_lea.vmem %s8, %s755
        %p757 = pneg %p278
        %p758 = pneg %p275
        %s759 = sand.u32 %s37, 1
        %s760 = scalar_lea.sflag [#allocation12], %s759
        %s761 = sand.u32 %s291, 1
        %s762 = smul.addr %s761, 256
        %s763 = scalar_lea.vmem [#allocation11], %s762
        %p764 = pneg %p304
        %p765 = pneg %p301
        %p766 = scmp.lt.s32.totalorder %s42, 1
        %s767 = scalar_select %p766, %s42, 1
        %s768 = smul.addr %s767, 4
        %s769 = scalar_lea.vmem %s10, %s768
        %p770 = pneg %p330
        %p771 = pneg %p327
        %s772 = sand.u32 %s37, 1
        %s773 = scalar_lea.sflag [#allocation12], %s772
        %s774 = sand.u32 %s343, 1
        %s775 = smul.addr %s774, 256
        %s776 = scalar_lea.vmem [#allocation13], %s775
        %p777 = pneg %p356
        %p778 = pneg %p353
        %p779 = scmp.lt.s32.totalorder %s42, 1
        %s780 = scalar_select %p779, %s42, 1
        %s781 = scalar_lea.vmem %s12, %s780
        %p782 = pneg %p382
        %p783 = pneg %p379
        %p784 = pneg %p403
        %p785 = pneg %p400
        %p786 = pneg %p424
        %p787 = pneg %p421
        %p788 = pneg %p450
        %p789 = pneg %p447
        %s790 = smul.u32 3, %s41
        %p791 = scmp.lt.s32.totalorder %s42, 1
        %s792 = scalar_select %p791, %s42, 1
        %s793 = smul.addr %s792, 3
        %s794 = scalar_lea.vmem %s4, %s793
        %p795 = scmp.lt.s32.totalorder %s42, 1
        %s796 = scalar_select %p795, %s42, 1
        %s797 = scalar_lea.vmem %s6, %s796
        %p798 = scmp.lt.s32.totalorder %s42, 1
        %s799 = scalar_select %p798, %s42, 1
        %s800 = scalar_lea.vmem %s7, %s799
        %p801 = scmp.lt.s32.totalorder %s42, 1
        %s802 = scalar_select %p801, %s42, 1
        %s803 = scalar_lea.vmem %s8, %s802
        %p804 = scmp.lt.s32.totalorder %s42, 1
        %s805 = scalar_select %p804, %s42, 1
        %s806 = smul.addr %s805, 4
        %s807 = scalar_lea.vmem %s10, %s806
        %p808 = scmp.lt.s32.totalorder %s42, 1
        %s809 = scalar_select %p808, %s42, 1
        %s810 = scalar_lea.vmem %s12, %s809
        %s811 = smul.u32 3, %s41
        %p813 = scmp.eq.s32.totalorder %s42, 0
        // Predicated region
        $region109: #{tpu_custom_call.1} parent=79 // pred_check
          %p814 = pneg %p813
        $region110: #{tpu_custom_call.1} parent=79 // pred_check_branch
          %816 = sbr.rel (%p814) target = $region112
        $region111: #{tpu_custom_call.1} parent=79 // pred_region
          %v817 = vld [vmem:[#allocation2] sm:$0xff]
          %v818 = vld [vmem:[#allocation2 + $0x8] sm:$0xff]
          %v819 = vld [vmem:[#allocation2 + $0x10] sm:$0xff]
          %820 = vst [vmem:[#allocation14] sm:$0xff] %v817
          %821 = vst [vmem:[#allocation14 + $0x8] sm:$0xff] %v818
          %822 = vst [vmem:[#allocation14 + $0x10] sm:$0xff] %v819
        $region112: #{tpu_custom_call.1} parent=79 // pred_fallthru
          _
        %v823 = vld [vmem:[#allocation14] sm:$0xff]
        %v824 = vld [vmem:[#allocation14 + $0x8] sm:$0xff]
        %v825 = vld [vmem:[#allocation14 + $0x10] sm:$0xff]
        %v826 = vlaneseq
        %v827 = vshrl.u32 %v826, 7
        %v828 = vadd.s32 %v827, 8
        %v829 = vadd.s32 %v827, 16
        %v830 = vcvt.s32.f32 %v827
        %v831 = vcvt.s32.f32 %v828
        %v832 = vcvt.s32.f32 %v829
        %v833 = vlaneseq
        %v834 = vand.u32 %v833, 127
        %v835 = vcvt.s32.f32 %v834
        %v836 = vadd.f32 %v830, 0.5
        %v837 = vadd.f32 %v831, 0.5
        %v838 = vadd.f32 %v832, 0.5
        %v839 = vmul.f32 %v836, 0.33333334
        %v840 = vmul.f32 %v837, 0.33333334
        %v841 = vmul.f32 %v838, 0.33333334
        %v842 = vfloor.f32 %v839
        %v843 = vfloor.f32 %v840
        %v844 = vfloor.f32 %v841
        %v845 = vadd.f32 %v835, 0.5
        %v846 = vmul.f32 %v845, 0.33333334
        %v847 = vfloor.f32 %v846
        %v848 = vsub.f32 %v842, %v847
        %v849 = vsub.f32 %v843, %v847
        %v850 = vsub.f32 %v844, %v847
        %v851 = vand.u32 2147483647, %v848
        %v852 = vand.u32 2147483647, %v849
        %v853 = vand.u32 2147483647, %v850
        %vm854 = vcmp.lt.f32.partialorder %v851, 0.5
        %vm855 = vcmp.lt.f32.partialorder %v852, 0.5
        %vm856 = vcmp.lt.f32.partialorder %v853, 0.5
        %v857 = vsel %vm854, 0.0, -1e+30
        %v858 = vsel %vm855, 0.0, -1e+30
        %v859 = vsel %vm856, 0.0, -1e+30
        %v860 = vld [vmem:[%s661] sm:$0x1]
        %v861 = vld [vmem:[%s669] sm:$0x1]
        %862 = vadd.xlane.f32.xlu0 %v823
        %v863 = vpop.xlane.xlu0 %862
        %864 = vadd.xlane.f32.xlu0 %v824
        %v865 = vpop.xlane.xlu0 %864
        %866 = vadd.xlane.f32.xlu0 %v825
        %v867 = vpop.xlane.xlu0 %866
        %v868 = vrcp.pop 128.0
        %v869 = vmul.f32 %v863, %v868
        %v870 = vmul.f32 %v865, %v868
        %v871 = vmul.f32 %v867, %v868
        %v872 = vsub.f32 %v823, %v869
        %v873 = vsub.f32 %v824, %v870
        %v874 = vsub.f32 %v825, %v871
        %v875 = vmul.f32 %v872, %v872
        %v876 = vmul.f32 %v873, %v873
        %v877 = vmul.f32 %v874, %v874
        %878 = vadd.xlane.f32.xlu0 %v875
        %v879 = vpop.xlane.xlu0 %878
        %880 = vadd.xlane.f32.xlu0 %v876
        %v881 = vpop.xlane.xlu0 %880
        %882 = vadd.xlane.f32.xlu0 %v877
        %v883 = vpop.xlane.xlu0 %882
        %v884 = vmul.f32 %v879, %v868
        %v885 = vmul.f32 %v881, %v868
        %v886 = vmul.f32 %v883, %v868
        %v887 = vadd.f32 %v884, 1e-05
        %v888 = vadd.f32 %v885, 1e-05
        %v889 = vadd.f32 %v886, 1e-05
        %v890 = vrsqrt.pop %v887
        %v891 = vrsqrt.pop %v888
        %v892 = vrsqrt.pop %v889
        %v893 = vmul.f32 %v872, %v890
        %v894 = vmul.f32 %v873, %v891
        %v895 = vmul.f32 %v874, %v892
        %v897 = vlaneseq
        %v898 = vshrl.u32 %v897, 7
        %v899 = vsub.s32 0, %v898
        %v900 = vrot.slane %v860, %v899
        %v902 = vmul.f32 %v893, %v900
        %v903 = vmul.f32 %v894, %v900
        %v904 = vmul.f32 %v895, %v900
        %v906 = vlaneseq
        %v907 = vshrl.u32 %v906, 7
        %v908 = vsub.s32 0, %v907
        %v909 = vrot.slane %v861, %v908
        %v911 = vadd.f32 %v902, %v909
        %v912 = vadd.f32 %v903, %v909
        %v913 = vadd.f32 %v904, %v909
        %v914 = vpack.c.bf16 %v912, %v911
        %v915 = vpack.c.bf16 %v913, %v913
        %v916 = vld [vmem:[%s678] sm:$0xff]
        %v917 = vld [vmem:[%s678 + $0x8] sm:$0xf]
        %v918 = vld [vmem:[%s678 + $0xc] sm:$0xff]
        %v919 = vld [vmem:[%s678 + $0x14] sm:$0xf]
        %v920 = vld [vmem:[%s678 + $0x18] sm:$0xff]
        %v921 = vld [vmem:[%s678 + $0x20] sm:$0xf]
        %v922 = vld [vmem:[%s678 + $0x24] sm:$0xff]
        %v923 = vld [vmem:[%s678 + $0x2c] sm:$0xf]
        %v924 = vld [vmem:[%s678 + $0x30] sm:$0xff]
        %v925 = vld [vmem:[%s678 + $0x38] sm:$0xf]
        %v926 = vld [vmem:[%s678 + $0x3c] sm:$0xff]
        %v927 = vld [vmem:[%s678 + $0x44] sm:$0xf]
        %v928 = vld [vmem:[%s678 + $0x48] sm:$0xff]
        %v929 = vld [vmem:[%s678 + $0x50] sm:$0xf]
        %v930 = vld [vmem:[%s678 + $0x54] sm:$0xff]
        %v931 = vld [vmem:[%s678 + $0x5c] sm:$0xf]
        %v932 = vld [vmem:[%s678 + $0x60] sm:$0xff]
        %v933 = vld [vmem:[%s678 + $0x68] sm:$0xf]
        %v934 = vld [vmem:[%s678 + $0x6c] sm:$0xff]
        %v935 = vld [vmem:[%s678 + $0x74] sm:$0xf]
        %v936 = vld [vmem:[%s678 + $0x78] sm:$0xff]
        %v937 = vld [vmem:[%s678 + $0x80] sm:$0xf]
        %v938 = vld [vmem:[%s678 + $0x84] sm:$0xff]
        %v939 = vld [vmem:[%s678 + $0x8c] sm:$0xf]
        %v940 = vld [vmem:[%s678 + $0x90] sm:$0xff]
        %v941 = vld [vmem:[%s678 + $0x98] sm:$0xf]
        %v942 = vld [vmem:[%s678 + $0x9c] sm:$0xff]
        %v943 = vld [vmem:[%s678 + $0xa4] sm:$0xf]
        %v944 = vld [vmem:[%s678 + $0xa8] sm:$0xff]
        %v945 = vld [vmem:[%s678 + $0xb0] sm:$0xf]
        %v946 = vld [vmem:[%s678 + $0xb4] sm:$0xff]
        %v947 = vld [vmem:[%s678 + $0xbc] sm:$0xf]
        %v948 = vld [vmem:[%s794] sm:$0x7]
        %v950 = vlaneseq
        %v951 = vshrl.u32 %v950, 7
        %v952 = vsub.s32 0, %v951
        %v953 = vrot.slane %v948, %v952
        %v954 = vlaneseq
        %v955 = vshrl.u32 %v954, 7
        %v956 = vsub.s32 1, %v955
        %v957 = vrot.slane %v948, %v956
        %v958 = vlaneseq
        %v959 = vshrl.u32 %v958, 7
        %v960 = vsub.s32 2, %v959
        %v961 = vrot.slane %v948, %v960
        %v997 = vunpack.c.l.b16 %v916
        %v998 = vunpack.c.h.b16 %v916
        %v999 = vunpack.c.l.b16 %v917
        %v1000 = vunpack.c.l.b16 %v918
        %v1001 = vunpack.c.h.b16 %v918
        %v1002 = vunpack.c.l.b16 %v919
        %v1003 = vunpack.c.l.b16 %v920
        %v1004 = vunpack.c.h.b16 %v920
        %v1005 = vunpack.c.l.b16 %v921
        %v1006 = vunpack.c.l.b16 %v922
        %v1007 = vunpack.c.h.b16 %v922
        %v1008 = vunpack.c.l.b16 %v923
        %v1009 = vunpack.c.l.b16 %v924
        %v1010 = vunpack.c.h.b16 %v924
        %v1011 = vunpack.c.l.b16 %v925
        %v1012 = vunpack.c.l.b16 %v926
        %v1013 = vunpack.c.h.b16 %v926
        %v1014 = vunpack.c.l.b16 %v927
        %v1015 = vunpack.c.l.b16 %v928
        %v1016 = vunpack.c.h.b16 %v928
        %v1017 = vunpack.c.l.b16 %v929
        %v1018 = vunpack.c.l.b16 %v930
        %v1019 = vunpack.c.h.b16 %v930
        %v1020 = vunpack.c.l.b16 %v931
        %v1021 = vunpack.c.l.b16 %v932
        %v1022 = vunpack.c.h.b16 %v932
        %v1023 = vunpack.c.l.b16 %v933
        %v1024 = vunpack.c.l.b16 %v934
        %v1025 = vunpack.c.h.b16 %v934
        %v1026 = vunpack.c.l.b16 %v935
        %v1027 = vunpack.c.l.b16 %v936
        %v1028 = vunpack.c.h.b16 %v936
        %v1029 = vunpack.c.l.b16 %v937
        %v1030 = vunpack.c.l.b16 %v938
        %v1031 = vunpack.c.h.b16 %v938
        %v1032 = vunpack.c.l.b16 %v939
        %v1033 = vunpack.c.l.b16 %v940
        %v1034 = vunpack.c.h.b16 %v940
        %v1035 = vunpack.c.l.b16 %v941
        %v1036 = vunpack.c.l.b16 %v942
        %v1037 = vunpack.c.h.b16 %v942
        %v1038 = vunpack.c.l.b16 %v943
        %v1039 = vunpack.c.l.b16 %v944
        %v1040 = vunpack.c.h.b16 %v944
        %v1041 = vunpack.c.l.b16 %v945
        %v1042 = vunpack.c.l.b16 %v946
        %v1043 = vunpack.c.h.b16 %v946
        %v1044 = vunpack.c.l.b16 %v947
        %v1045 = vpack.c.b16 %v1000, %v997
        %v1046 = vpack.c.b16 %v1001, %v998
        %v1047 = vpack.c.b16 %v1002, %v999
        %v1048 = vpack.c.b16 %v1006, %v1003
        %v1049 = vpack.c.b16 %v1007, %v1004
        %v1050 = vpack.c.b16 %v1008, %v1005
        %v1051 = vpack.c.b16 %v1012, %v1009
        %v1052 = vpack.c.b16 %v1013, %v1010
        %v1053 = vpack.c.b16 %v1014, %v1011
        %v1054 = vpack.c.b16 %v1018, %v1015
        %v1055 = vpack.c.b16 %v1019, %v1016
        %v1056 = vpack.c.b16 %v1020, %v1017
        %v1057 = vpack.c.b16 %v1024, %v1021
        %v1058 = vpack.c.b16 %v1025, %v1022
        %v1059 = vpack.c.b16 %v1026, %v1023
        %v1060 = vpack.c.b16 %v1030, %v1027
        %v1061 = vpack.c.b16 %v1031, %v1028
        %v1062 = vpack.c.b16 %v1032, %v1029
        %v1063 = vpack.c.b16 %v1036, %v1033
        %v1064 = vpack.c.b16 %v1037, %v1034
        %v1065 = vpack.c.b16 %v1038, %v1035
        %v1066 = vpack.c.b16 %v1042, %v1039
        %v1067 = vpack.c.b16 %v1043, %v1040
        %v1068 = vpack.c.b16 %v1044, %v1041
        %1093 = vmatprep.subr.bf16.mxu0 %v1046
        %1094 = vmatpush1.bf16.msra.mxu0 %v1045
        %1095 = vmatprep.subr.bf16.mxu0 %v1049
        %1096 = vmatpush1.bf16.msra.mxu0 %v1048
        %1097 = vmatprep.subr.bf16.mxu0 %v1052
        %1098 = vmatpush1.bf16.msra.mxu0 %v1051
        %1099 = vmatprep.subr.bf16.mxu0 %v1055
        %1100 = vmatpush1.bf16.msra.mxu0 %v1054
        %1101 = vmatprep.subr.bf16.mxu0 %v1058
        %1102 = vmatpush1.bf16.msra.mxu0 %v1057
        %1103 = vmatprep.subr.bf16.mxu0 %v1061
        %1104 = vmatpush1.bf16.msra.mxu0 %v1060
        %1105 = vmatprep.subr.bf16.mxu0 %v1064
        %1106 = vmatpush1.bf16.msra.mxu0 %v1063
        %1107 = vmatprep.subr.bf16.mxu0 %v1067
        %1108 = vmatpush1.bf16.msra.mxu0 %v1066
        %1109 = vmatprep.subr.bf16.mxu0 0
        %1110 = vmatpush1.bf16.msra.mxu0 0
        %1111 = vmatprep.subr.bf16.mxu0 0
        %1112 = vmatpush1.bf16.msra.mxu0 0
        %1113 = vmatprep.subr.bf16.mxu0 0
        %1114 = vmatpush1.bf16.msra.mxu0 0
        %1115 = vmatprep.subr.bf16.mxu0 0
        %1116 = vmatpush1.bf16.msra.mxu0 0
        %1117 = vmatprep.subr.bf16.mxu0 0
        %1118 = vmatpush1.bf16.msra.mxu0 0
        %1119 = vmatprep.subr.bf16.mxu0 0
        %1120 = vmatpush1.bf16.msra.mxu0 0
        %1121 = vmatprep.subr.bf16.mxu0 0
        %1122 = vmatpush1.bf16.msra.mxu0 0
        %1123 = vmatprep.subr.bf16.mxu0 0
        %1124 = vmatpush1.bf16.msra.mxu0 0
        %1125 = vmatprep.mubr.bf16.mxu0 0
        %1126 = vmatmul.mubr.bf16.gmra.mrb[0].mxu0 %v914
        %v1127 = vpop.f32.mrb[0].mxu0
        %v1128 = vadd.f32 %v953, %v1127
        %v1129 = vpop.f32.mrb[0].mxu0
        %v1130 = vadd.f32 %v957, %v1129
        %v1131 = vpop.f32.mrb[0].mxu0
        %v1132 = vadd.f32 %v953, %v1131
        %v1133 = vpop.f32.mrb[0].mxu0
        %v1134 = vadd.f32 %v957, %v1133
        %1135 = vmatprep.mubr.bf16.mxu0 0
        %1136 = vmatmul.mubr.bf16.gmra.mrb[0].mxu0 %v915
        %v1137 = vpop.f32.mrb[0].mxu0
        %v1138 = vadd.f32 %v953, %v1137
        %v1139 = vpop.f32.mrb[0].mxu0
        %v1140 = vadd.f32 %v957, %v1139
        %v1141 = vpop.f32.mrb[0].mxu0
        %v1142 = vpop.f32.mrb[0].mxu0
        %1143 = vdwg.mxu0
        %1144 = vmatprep.subr.bf16.mxu0 0
        %1145 = vmatpush1.bf16.msra.mxu0 %v1047
        %1146 = vmatprep.subr.bf16.mxu0 0
        %1147 = vmatpush1.bf16.msra.mxu0 %v1050
        %1148 = vmatprep.subr.bf16.mxu0 0
        %1149 = vmatpush1.bf16.msra.mxu0 %v1053
        %1150 = vmatprep.subr.bf16.mxu0 0
        %1151 = vmatpush1.bf16.msra.mxu0 %v1056
        %1152 = vmatprep.subr.bf16.mxu0 0
        %1153 = vmatpush1.bf16.msra.mxu0 %v1059
        %1154 = vmatprep.subr.bf16.mxu0 0
        %1155 = vmatpush1.bf16.msra.mxu0 %v1062
        %1156 = vmatprep.subr.bf16.mxu0 0
        %1157 = vmatpush1.bf16.msra.mxu0 %v1065
        %1158 = vmatprep.subr.bf16.mxu0 0
        %1159 = vmatpush1.bf16.msra.mxu0 %v1068
        %1160 = vmatprep.subr.bf16.mxu0 0
        %1161 = vmatpush1.bf16.msra.mxu0 0
        %1162 = vmatprep.subr.bf16.mxu0 0
        %1163 = vmatpush1.bf16.msra.mxu0 0
        %1164 = vmatprep.subr.bf16.mxu0 0
        %1165 = vmatpush1.bf16.msra.mxu0 0
        %1166 = vmatprep.subr.bf16.mxu0 0
        %1167 = vmatpush1.bf16.msra.mxu0 0
        %1168 = vmatprep.subr.bf16.mxu0 0
        %1169 = vmatpush1.bf16.msra.mxu0 0
        %1170 = vmatprep.subr.bf16.mxu0 0
        %1171 = vmatpush1.bf16.msra.mxu0 0
        %1172 = vmatprep.subr.bf16.mxu0 0
        %1173 = vmatpush1.bf16.msra.mxu0 0
        %1174 = vmatprep.subr.bf16.mxu0 0
        %1175 = vmatpush1.bf16.msra.mxu0 0
        %1176 = vmatprep.mubr.bf16.mxu0 0
        %1177 = vmatmul.mubr.bf16.gmra.mrb[0].mxu0 %v914
        %v1178 = vpop.f32.mrb[0].mxu0
        %v1179 = vadd.f32 %v961, %v1178
        %v1180 = vpop.f32.mrb[0].mxu0
        %v1181 = vpop.f32.mrb[0].mxu0
        %v1182 = vadd.f32 %v961, %v1181
        %v1183 = vpop.f32.mrb[0].mxu0
        %1184 = vmatprep.mubr.bf16.mxu0 0
        %1185 = vmatmul.mubr.bf16.gmra.mrb[0].mxu0 %v915
        %v1186 = vpop.f32.mrb[0].mxu0
        %v1187 = vadd.f32 %v961, %v1186
        %v1188 = vpop.f32.mrb[0].mxu0
        %v1189 = vpop.f32.mrb[0].mxu0
        %v1190 = vpop.f32.mrb[0].mxu0
        %1191 = vdwg.mxu0
        %v1192 = vmul.f32 %v1128, 0.088388346
        %v1193 = vmul.f32 %v1132, 0.088388346
        %v1194 = vmul.f32 %v1138, 0.088388346
        %1195 = vmatprep.subr.mxu0 0.0
        %1196 = vmatpush1.xpose.msra.mxu0 %v1130
        %1197 = vmatprep.subr.mxu0 0.0
        %1198 = vmatpush1.xpose.msra.mxu0 %v1134
        %1199 = vmatprep.subr.mxu0 0.0
        %1200 = vmatpush1.xpose.msra.mxu0 %v1140
        %1201 = vmatprep.subr.mxu0 0.0
        %1202 = vmatpush1.xpose.msra.mxu0 0.0
        %1203 = vmatprep.subr.mxu0 0.0
        %1204 = vmatpush1.xpose.msra.mxu0 0.0
        %1205 = vmatprep.subr.mxu0 0.0
        %1206 = vmatpush1.xpose.msra.mxu0 0.0
        %1207 = vmatprep.subr.mxu0 0.0
        %1208 = vmatpush1.xpose.msra.mxu0 0.0
        %1209 = vmatprep.subr.mxu0 0.0
        %1210 = vmatpush1.xpose.msra.mxu0 0.0
        %1211 = vmatprep.subr.mxu0 0.0
        %1212 = vmatpush1.xpose.msra.mxu0 0.0
        %1213 = vmatprep.subr.mxu0 0.0
        %1214 = vmatpush1.xpose.msra.mxu0 0.0
        %1215 = vmatprep.subr.mxu0 0.0
        %1216 = vmatpush1.xpose.msra.mxu0 0.0
        %1217 = vmatprep.subr.mxu0 0.0
        %1218 = vmatpush1.xpose.msra.mxu0 0.0
        %1219 = vmatprep.subr.mxu0 0.0
        %1220 = vmatpush1.xpose.msra.mxu0 0.0
        %1221 = vmatprep.subr.mxu0 0.0
        %1222 = vmatpush1.xpose.msra.mxu0 0.0
        %1223 = vmatprep.subr.mxu0 0.0
        %1224 = vmatpush1.xpose.msra.mxu0 0.0
        %1225 = vmatprep.subr.mxu0 0.0
        %1226 = vmatpush1.xpose.msra.mxu0 0.0
        %1227 = vmatprep.subr.mxu0 0.0
        %1228 = vmatpush1.xpose.msra.mxu0 0.0
        %1229 = vmatprep.subr.mxu0 0.0
        %1230 = vmatpush1.xpose.msra.mxu0 0.0
        %1231 = vmatprep.subr.mxu0 0.0
        %1232 = vmatpush1.xpose.msra.mxu0 0.0
        %1233 = vmatprep.subr.mxu0 0.0
        %1234 = vmatpush1.xpose.msra.mxu0 0.0
        %1235 = vmatprep.subr.mxu0 0.0
        %1236 = vmatpush1.xpose.msra.mxu0 0.0
        %1237 = vmatprep.subr.mxu0 0.0
        %1238 = vmatpush1.xpose.msra.mxu0 0.0
        %1239 = vmatprep.subr.mxu0 0.0
        %1240 = vmatpush1.xpose.msra.mxu0 0.0
        %1241 = vmatprep.subr.mxu0 0.0
        %1242 = vmatpush1.xpose.msra.mxu0 0.0
        %1243 = vmatprep.subr.mxu0 0.0
        %1244 = vmatpush1.xpose.msra.mxu0 0.0
        %1245 = vmatprep.subr.mxu0 0.0
        %1246 = vmatpush1.xpose.msra.mxu0 0.0
        %1247 = vmatprep.subr.mxu0 0.0
        %1248 = vmatpush1.xpose.msra.mxu0 0.0
        %1249 = vmatprep.subr.mxu0 0.0
        %1250 = vmatpush1.xpose.msra.mxu0 0.0
        %1251 = vmatprep.subr.mxu0 0.0
        %1252 = vmatpush1.xpose.msra.mxu0 0.0
        %1253 = vmatprep.subr.mxu0 0.0
        %1254 = vmatpush1.xpose.msra.mxu0 0.0
        %1255 = vmatprep.subr.mxu0 0.0
        %1256 = vmatpush1.xpose.msra.mxu0 0.0
        %1257 = vmatprep.subr.mxu0 0.0
        %1258 = vmatpush1.xpose.msra.mxu0 0.0
        %1259 = vmatprep.mubr.f32.mxu0 0.0
        %1260 = vmatmul.mubr.f32.gmra.mrb[0].mxu0 %v1192
        %v1261 = vpop.f32.mrb[0].mxu0
        %v1262 = vadd.f32 %v857, %v1261
        %v1263 = vpop.f32.mrb[0].mxu0
        %1264 = vmatprep.mubr.f32.mxu0 0.0
        %1265 = vmatmul.mubr.f32.gmra.mrb[0].mxu0 %v1193
        %v1266 = vpop.f32.mrb[0].mxu0
        %v1267 = vadd.f32 %v858, %v1266
        %v1268 = vpop.f32.mrb[0].mxu0
        %1269 = vmatprep.mubr.f32.mxu0 0.0
        %1270 = vmatmul.mubr.f32.gmra.mrb[0].mxu0 %v1194
        %v1271 = vpop.f32.mrb[0].mxu0
        %v1272 = vadd.f32 %v859, %v1271
        %v1273 = vpop.f32.mrb[0].mxu0
        %1274 = vdwg.mxu0
        %vm1275 = vcmask 195584
        %v1276 = vsel %vm1275, %v1262, -inf
        %1277 = vmax.xlane.f32.xlu0 %v1276
        %v1278 = vpop.xlane.xlu0 %1277
        %v1279 = vsel %vm1275, %v1267, -inf
        %1280 = vmax.xlane.f32.xlu0 %v1279
        %v1281 = vpop.xlane.xlu0 %1280
        %v1282 = vsel %vm1275, %v1272, -inf
        %1283 = vmax.xlane.f32.xlu0 %v1282
        %v1284 = vpop.xlane.xlu0 %1283
        %v1285 = vsub.f32 %v1262, %v1278
        %v1286 = vsub.f32 %v1267, %v1281
        %v1287 = vsub.f32 %v1272, %v1284
        %v1288 = vmul.f32 %v1285, 1.442695
        %v1289 = vpow.pop %v1288
        %v1290 = vmul.f32 %v1286, 1.442695
        %v1291 = vpow.pop %v1290
        %v1292 = vmul.f32 %v1287, 1.442695
        %v1293 = vpow.pop %v1292
        %v1294 = vsel %vm1275, %v1289, 0.0
        %1295 = vadd.xlane.f32.xlu0 %v1294
        %v1296 = vpop.xlane.xlu0 %1295
        %v1297 = vsel %vm1275, %v1291, 0.0
        %1298 = vadd.xlane.f32.xlu0 %v1297
        %v1299 = vpop.xlane.xlu0 %1298
        %v1300 = vsel %vm1275, %v1293, 0.0
        %1301 = vadd.xlane.f32.xlu0 %v1300
        %v1302 = vpop.xlane.xlu0 %1301
        %v1303 = vrcp.pop %v1296
        %v1304 = vrcp.pop %v1299
        %v1305 = vrcp.pop %v1302
        %v1306 = vmul.f32 %v1289, %v1303
        %v1307 = vmul.f32 %v1291, %v1304
        %v1308 = vmul.f32 %v1293, %v1305
        %v1310 = vsel %vm1275, %v1306, 0
        %v1313 = vsel %vm1275, %v1307, 0
        %v1316 = vsel %vm1275, %v1308, 0
        %1318 = vmatprep.subr.mxu0 0.0
        %1319 = vmatpush1.msra.mxu0 %v1179
        %1320 = vmatprep.subr.mxu0 0.0
        %1321 = vmatpush1.msra.mxu0 %v1182
        %1322 = vmatprep.subr.mxu0 0.0
        %1323 = vmatpush1.msra.mxu0 %v1187
        %1324 = vmatprep.subr.mxu0 0.0
        %1325 = vmatpush1.msra.mxu0 0.0
        %1326 = vmatprep.subr.mxu0 0.0
        %1327 = vmatpush1.msra.mxu0 0.0
        %1328 = vmatprep.subr.mxu0 0.0
        %1329 = vmatpush1.msra.mxu0 0.0
        %1330 = vmatprep.subr.mxu0 0.0
        %1331 = vmatpush1.msra.mxu0 0.0
        %1332 = vmatprep.subr.mxu0 0.0
        %1333 = vmatpush1.msra.mxu0 0.0
        %1334 = vmatprep.subr.mxu0 0.0
        %1335 = vmatpush1.msra.mxu0 0.0
        %1336 = vmatprep.subr.mxu0 0.0
        %1337 = vmatpush1.msra.mxu0 0.0
        %1338 = vmatprep.subr.mxu0 0.0
        %1339 = vmatpush1.msra.mxu0 0.0
        %1340 = vmatprep.subr.mxu0 0.0
        %1341 = vmatpush1.msra.mxu0 0.0
        %1342 = vmatprep.subr.mxu0 0.0
        %1343 = vmatpush1.msra.mxu0 0.0
        %1344 = vmatprep.subr.mxu0 0.0
        %1345 = vmatpush1.msra.mxu0 0.0
        %1346 = vmatprep.subr.mxu0 0.0
        %1347 = vmatpush1.msra.mxu0 0.0
        %1348 = vmatprep.subr.mxu0 0.0
        %1349 = vmatpush1.msra.mxu0 0.0
        %1350 = vmatprep.subr.mxu0 0.0
        %1351 = vmatpush1.msra.mxu0 0.0
        %1352 = vmatprep.subr.mxu0 0.0
        %1353 = vmatpush1.msra.mxu0 0.0
        %1354 = vmatprep.subr.mxu0 0.0
        %1355 = vmatpush1.msra.mxu0 0.0
        %1356 = vmatprep.subr.mxu0 0.0
        %1357 = vmatpush1.msra.mxu0 0.0
        %1358 = vmatprep.subr.mxu0 0.0
        %1359 = vmatpush1.msra.mxu0 0.0
        %1360 = vmatprep.subr.mxu0 0.0
        %1361 = vmatpush1.msra.mxu0 0.0
        %1362 = vmatprep.subr.mxu0 0.0
        %1363 = vmatpush1.msra.mxu0 0.0
        %1364 = vmatprep.subr.mxu0 0.0
        %1365 = vmatpush1.msra.mxu0 0.0
        %1366 = vmatprep.subr.mxu0 0.0
        %1367 = vmatpush1.msra.mxu0 0.0
        %1368 = vmatprep.subr.mxu0 0.0
        %1369 = vmatpush1.msra.mxu0 0.0
        %1370 = vmatprep.subr.mxu0 0.0
        %1371 = vmatpush1.msra.mxu0 0.0
        %1372 = vmatprep.subr.mxu0 0.0
        %1373 = vmatpush1.msra.mxu0 0.0
        %1374 = vmatprep.subr.mxu0 0.0
        %1375 = vmatpush1.msra.mxu0 0.0
        %1376 = vmatprep.subr.mxu0 0.0
        %1377 = vmatpush1.msra.mxu0 0.0
        %1378 = vmatprep.subr.mxu0 0.0
        %1379 = vmatpush1.msra.mxu0 0.0
        %1380 = vmatprep.subr.mxu0 0.0
        %1381 = vmatpush1.msra.mxu0 0.0
        %1382 = vmatprep.mubr.f32.mxu0 0.0
        %1383 = vmatmul.mubr.f32.gmra.mrb[0].mxu0 %v1310
        %v1384 = vpop.f32.mrb[0].mxu0
        %v1385 = vadd.f32 0.0, %v1384
        %v1386 = vpop.f32.mrb[0].mxu0
        %1387 = vmatprep.mubr.f32.mxu0 0.0
        %1388 = vmatmul.mubr.f32.gmra.mrb[0].mxu0 %v1313
        %v1389 = vpop.f32.mrb[0].mxu0
        %v1390 = vadd.f32 0.0, %v1389
        %v1391 = vpop.f32.mrb[0].mxu0
        %1392 = vmatprep.mubr.f32.mxu0 0.0
        %1393 = vmatmul.mubr.f32.gmra.mrb[0].mxu0 %v1316
        %v1394 = vpop.f32.mrb[0].mxu0
        %v1395 = vadd.f32 0.0, %v1394
        %v1396 = vpop.f32.mrb[0].mxu0
        %1397 = vdwg.mxu0
        %v1398 = vpack.c.bf16 %v1390, %v1385
        %v1399 = vpack.c.bf16 %v1395, %v1395
        %v1400 = vld [vmem:[%s687] sm:$0xf]
        %v1401 = vld [vmem:[%s687 + $0x4] sm:$0xf]
        %v1402 = vld [vmem:[%s687 + $0x8] sm:$0xf]
        %v1403 = vld [vmem:[%s687 + $0xc] sm:$0xf]
        %v1404 = vld [vmem:[%s687 + $0x10] sm:$0xf]
        %v1405 = vld [vmem:[%s687 + $0x14] sm:$0xf]
        %v1406 = vld [vmem:[%s687 + $0x18] sm:$0xf]
        %v1407 = vld [vmem:[%s687 + $0x1c] sm:$0xf]
        %v1408 = vld [vmem:[%s687 + $0x20] sm:$0xf]
        %v1409 = vld [vmem:[%s687 + $0x24] sm:$0xf]
        %v1410 = vld [vmem:[%s687 + $0x28] sm:$0xf]
        %v1411 = vld [vmem:[%s687 + $0x2c] sm:$0xf]
        %v1412 = vld [vmem:[%s687 + $0x30] sm:$0xf]
        %v1413 = vld [vmem:[%s687 + $0x34] sm:$0xf]
        %v1414 = vld [vmem:[%s687 + $0x38] sm:$0xf]
        %v1415 = vld [vmem:[%s687 + $0x3c] sm:$0xf]
        %v1416 = vld [vmem:[%s797] sm:$0x1]
        %v1418 = vlaneseq
        %v1419 = vshrl.u32 %v1418, 7
        %v1420 = vsub.s32 0, %v1419
        %v1421 = vrot.slane %v1416, %v1420
        %v1439 = vunpack.c.l.b16 %v1400
        %v1440 = vunpack.c.l.b16 %v1401
        %v1441 = vunpack.c.l.b16 %v1402
        %v1442 = vunpack.c.l.b16 %v1403
        %v1443 = vunpack.c.l.b16 %v1404
        %v1444 = vunpack.c.l.b16 %v1405
        %v1445 = vunpack.c.l.b16 %v1406
        %v1446 = vunpack.c.l.b16 %v1407
        %v1447 = vunpack.c.l.b16 %v1408
        %v1448 = vunpack.c.l.b16 %v1409
        %v1449 = vunpack.c.l.b16 %v1410
        %v1450 = vunpack.c.l.b16 %v1411
        %v1451 = vunpack.c.l.b16 %v1412
        %v1452 = vunpack.c.l.b16 %v1413
        %v1453 = vunpack.c.l.b16 %v1414
        %v1454 = vunpack.c.l.b16 %v1415
        %v1455 = vpack.c.b16 %v1440, %v1439
        %v1456 = vpack.c.b16 %v1442, %v1441
        %v1457 = vpack.c.b16 %v1444, %v1443
        %v1458 = vpack.c.b16 %v1446, %v1445
        %v1459 = vpack.c.b16 %v1448, %v1447
        %v1460 = vpack.c.b16 %v1450, %v1449
        %v1461 = vpack.c.b16 %v1452, %v1451
        %v1462 = vpack.c.b16 %v1454, %v1453
        %1471 = vmatprep.subr.bf16.mxu0 0
        %1472 = vmatpush1.bf16.msra.mxu0 %v1455
        %1473 = vmatprep.subr.bf16.mxu0 0
        %1474 = vmatpush1.bf16.msra.mxu0 %v1456
        %1475 = vmatprep.subr.bf16.mxu0 0
        %1476 = vmatpush1.bf16.msra.mxu0 %v1457
        %1477 = vmatprep.subr.bf16.mxu0 0
        %1478 = vmatpush1.bf16.msra.mxu0 %v1458
        %1479 = vmatprep.subr.bf16.mxu0 0
        %1480 = vmatpush1.bf16.msra.mxu0 %v1459
        %1481 = vmatprep.subr.bf16.mxu0 0
        %1482 = vmatpush1.bf16.msra.mxu0 %v1460
        %1483 = vmatprep.subr.bf16.mxu0 0
        %1484 = vmatpush1.bf16.msra.mxu0 %v1461
        %1485 = vmatprep.subr.bf16.mxu0 0
        %1486 = vmatpush1.bf16.msra.mxu0 %v1462
        %1487 = vmatprep.subr.bf16.mxu0 0
        %1488 = vmatpush1.bf16.msra.mxu0 0
        %1489 = vmatprep.subr.bf16.mxu0 0
        %1490 = vmatpush1.bf16.msra.mxu0 0
        %1491 = vmatprep.subr.bf16.mxu0 0
        %1492 = vmatpush1.bf16.msra.mxu0 0
        %1493 = vmatprep.subr.bf16.mxu0 0
        %1494 = vmatpush1.bf16.msra.mxu0 0
        %1495 = vmatprep.subr.bf16.mxu0 0
        %1496 = vmatpush1.bf16.msra.mxu0 0
        %1497 = vmatprep.subr.bf16.mxu0 0
        %1498 = vmatpush1.bf16.msra.mxu0 0
        %1499 = vmatprep.subr.bf16.mxu0 0
        %1500 = vmatpush1.bf16.msra.mxu0 0
        %1501 = vmatprep.subr.bf16.mxu0 0
        %1502 = vmatpush1.bf16.msra.mxu0 0
        %1503 = vmatprep.mubr.bf16.mxu0 0
        %1504 = vmatmul.mubr.bf16.gmra.mrb[0].mxu0 %v1398
        %v1505 = vpop.f32.mrb[0].mxu0
        %v1506 = vadd.f32 %v1421, %v1505
        %v1507 = vpop.f32.mrb[0].mxu0
        %v1508 = vpop.f32.mrb[0].mxu0
        %v1509 = vadd.f32 %v1421, %v1508
        %v1510 = vpop.f32.mrb[0].mxu0
        %1511 = vmatprep.mubr.bf16.mxu0 0
        %1512 = vmatmul.mubr.bf16.gmra.mrb[0].mxu0 %v1399
        %v1513 = vpop.f32.mrb[0].mxu0
        %v1514 = vadd.f32 %v1421, %v1513
        %v1515 = vpop.f32.mrb[0].mxu0
        %v1516 = vpop.f32.mrb[0].mxu0
        %v1517 = vpop.f32.mrb[0].mxu0
        %1518 = vdwg.mxu0
        %v1519 = vadd.f32 %v823, %v1506
        %v1520 = vadd.f32 %v824, %v1509
        %v1521 = vadd.f32 %v825, %v1514
        %v1522 = vld [vmem:[%s800] sm:$0x1]
        %v1523 = vld [vmem:[%s803] sm:$0x1]
        %1524 = vadd.xlane.f32.xlu0 %v1519
        %v1525 = vpop.xlane.xlu0 %1524
        %1526 = vadd.xlane.f32.xlu0 %v1520
        %v1527 = vpop.xlane.xlu0 %1526
        %1528 = vadd.xlane.f32.xlu0 %v1521
        %v1529 = vpop.xlane.xlu0 %1528
        %v1530 = vmul.f32 %v1525, %v868
        %v1531 = vmul.f32 %v1527, %v868
        %v1532 = vmul.f32 %v1529, %v868
        %v1533 = vsub.f32 %v1519, %v1530
        %v1534 = vsub.f32 %v1520, %v1531
        %v1535 = vsub.f32 %v1521, %v1532
        %v1536 = vmul.f32 %v1533, %v1533
        %v1537 = vmul.f32 %v1534, %v1534
        %v1538 = vmul.f32 %v1535, %v1535
        %1539 = vadd.xlane.f32.xlu0 %v1536
        %v1540 = vpop.xlane.xlu0 %1539
        %1541 = vadd.xlane.f32.xlu0 %v1537
        %v1542 = vpop.xlane.xlu0 %1541
        %1543 = vadd.xlane.f32.xlu0 %v1538
        %v1544 = vpop.xlane.xlu0 %1543
        %v1545 = vmul.f32 %v1540, %v868
        %v1546 = vmul.f32 %v1542, %v868
        %v1547 = vmul.f32 %v1544, %v868
        %v1548 = vadd.f32 %v1545, 1e-05
        %v1549 = vadd.f32 %v1546, 1e-05
        %v1550 = vadd.f32 %v1547, 1e-05
        %v1551 = vrsqrt.pop %v1548
        %v1552 = vrsqrt.pop %v1549
        %v1553 = vrsqrt.pop %v1550
        %v1554 = vmul.f32 %v1533, %v1551
        %v1555 = vmul.f32 %v1534, %v1552
        %v1556 = vmul.f32 %v1535, %v1553
        %v1558 = vlaneseq
        %v1559 = vshrl.u32 %v1558, 7
        %v1560 = vsub.s32 0, %v1559
        %v1561 = vrot.slane %v1522, %v1560
        %v1563 = vmul.f32 %v1554, %v1561
        %v1564 = vmul.f32 %v1555, %v1561
        %v1565 = vmul.f32 %v1556, %v1561
        %v1567 = vlaneseq
        %v1568 = vshrl.u32 %v1567, 7
        %v1569 = vsub.s32 0, %v1568
        %v1570 = vrot.slane %v1523, %v1569
        %v1572 = vadd.f32 %v1563, %v1570
        %v1573 = vadd.f32 %v1564, %v1570
        %v1574 = vadd.f32 %v1565, %v1570
        %v1575 = vpack.c.bf16 %v1573, %v1572
        %v1576 = vpack.c.bf16 %v1574, %v1574
        %v1577 = vld [vmem:[%s696] sm:$0xff]
        %v1578 = vld [vmem:[%s696 + $0x8] sm:$0xff]
        %v1579 = vld [vmem:[%s696 + $0x10] sm:$0xff]
        %v1580 = vld [vmem:[%s696 + $0x18] sm:$0xff]
        %v1581 = vld [vmem:[%s696 + $0x20] sm:$0xff]
        %v1582 = vld [vmem:[%s696 + $0x28] sm:$0xff]
        %v1583 = vld [vmem:[%s696 + $0x30] sm:$0xff]
        %v1584 = vld [vmem:[%s696 + $0x38] sm:$0xff]
        %v1585 = vld [vmem:[%s696 + $0x40] sm:$0xff]
        %v1586 = vld [vmem:[%s696 + $0x48] sm:$0xff]
        %v1587 = vld [vmem:[%s696 + $0x50] sm:$0xff]
        %v1588 = vld [vmem:[%s696 + $0x58] sm:$0xff]
        %v1589 = vld [vmem:[%s696 + $0x60] sm:$0xff]
        %v1590 = vld [vmem:[%s696 + $0x68] sm:$0xff]
        %v1591 = vld [vmem:[%s696 + $0x70] sm:$0xff]
        %v1592 = vld [vmem:[%s696 + $0x78] sm:$0xff]
        %v1593 = vld [vmem:[%s696 + $0x80] sm:$0xff]
        %v1594 = vld [vmem:[%s696 + $0x88] sm:$0xff]
        %v1595 = vld [vmem:[%s696 + $0x90] sm:$0xff]
        %v1596 = vld [vmem:[%s696 + $0x98] sm:$0xff]
        %v1597 = vld [vmem:[%s696 + $0xa0] sm:$0xff]
        %v1598 = vld [vmem:[%s696 + $0xa8] sm:$0xff]
        %v1599 = vld [vmem:[%s696 + $0xb0] sm:$0xff]
        %v1600 = vld [vmem:[%s696 + $0xb8] sm:$0xff]
        %v1601 = vld [vmem:[%s696 + $0xc0] sm:$0xff]
        %v1602 = vld [vmem:[%s696 + $0xc8] sm:$0xff]
        %v1603 = vld [vmem:[%s696 + $0xd0] sm:$0xff]
        %v1604 = vld [vmem:[%s696 + $0xd8] sm:$0xff]
        %v1605 = vld [vmem:[%s696 + $0xe0] sm:$0xff]
        %v1606 = vld [vmem:[%s696 + $0xe8] sm:$0xff]
        %v1607 = vld [vmem:[%s696 + $0xf0] sm:$0xff]
        %v1608 = vld [vmem:[%s696 + $0xf8] sm:$0xff]
        %v1609 = vld [vmem:[%s807] sm:$0xf]
        %v1611 = vlaneseq
        %v1612 = vshrl.u32 %v1611, 7
        %v1613 = vsub.s32 0, %v1612
        %v1614 = vrot.slane %v1609, %v1613
        %v1615 = vlaneseq
        %v1616 = vshrl.u32 %v1615, 7
        %v1617 = vsub.s32 1, %v1616
        %v1618 = vrot.slane %v1609, %v1617
        %v1619 = vlaneseq
        %v1620 = vshrl.u32 %v1619, 7
        %v1621 = vsub.s32 2, %v1620
        %v1622 = vrot.slane %v1609, %v1621
        %v1623 = vlaneseq
        %v1624 = vshrl.u32 %v1623, 7
        %v1625 = vsub.s32 3, %v1624
        %v1626 = vrot.slane %v1609, %v1625
        %v1663 = vunpack.c.l.b16 %v1577
        %v1664 = vunpack.c.h.b16 %v1577
        %v1665 = vunpack.c.l.b16 %v1578
        %v1666 = vunpack.c.h.b16 %v1578
        %v1667 = vunpack.c.l.b16 %v1579
        %v1668 = vunpack.c.h.b16 %v1579
        %v1669 = vunpack.c.l.b16 %v1580
        %v1670 = vunpack.c.h.b16 %v1580
        %v1671 = vunpack.c.l.b16 %v1581
        %v1672 = vunpack.c.h.b16 %v1581
        %v1673 = vunpack.c.l.b16 %v1582
        %v1674 = vunpack.c.h.b16 %v1582
        %v1675 = vunpack.c.l.b16 %v1583
        %v1676 = vunpack.c.h.b16 %v1583
        %v1677 = vunpack.c.l.b16 %v1584
        %v1678 = vunpack.c.h.b16 %v1584
        %v1679 = vunpack.c.l.b16 %v1585
        %v1680 = vunpack.c.h.b16 %v1585
        %v1681 = vunpack.c.l.b16 %v1586
        %v1682 = vunpack.c.h.b16 %v1586
        %v1683 = vunpack.c.l.b16 %v1587
        %v1684 = vunpack.c.h.b16 %v1587
        %v1685 = vunpack.c.l.b16 %v1588
        %v1686 = vunpack.c.h.b16 %v1588
        %v1687 = vunpack.c.l.b16 %v1589
        %v1688 = vunpack.c.h.b16 %v1589
        %v1689 = vunpack.c.l.b16 %v1590
        %v1690 = vunpack.c.h.b16 %v1590
        %v1691 = vunpack.c.l.b16 %v1591
        %v1692 = vunpack.c.h.b16 %v1591
        %v1693 = vunpack.c.l.b16 %v1592
        %v1694 = vunpack.c.h.b16 %v1592
        %v1695 = vunpack.c.l.b16 %v1593
        %v1696 = vunpack.c.h.b16 %v1593
        %v1697 = vunpack.c.l.b16 %v1594
        %v1698 = vunpack.c.h.b16 %v1594
        %v1699 = vunpack.c.l.b16 %v1595
        %v1700 = vunpack.c.h.b16 %v1595
        %v1701 = vunpack.c.l.b16 %v1596
        %v1702 = vunpack.c.h.b16 %v1596
        %v1703 = vunpack.c.l.b16 %v1597
        %v1704 = vunpack.c.h.b16 %v1597
        %v1705 = vunpack.c.l.b16 %v1598
        %v1706 = vunpack.c.h.b16 %v1598
        %v1707 = vunpack.c.l.b16 %v1599
        %v1708 = vunpack.c.h.b16 %v1599
        %v1709 = vunpack.c.l.b16 %v1600
        %v1710 = vunpack.c.h.b16 %v1600
        %v1711 = vunpack.c.l.b16 %v1601
        %v1712 = vunpack.c.h.b16 %v1601
        %v1713 = vunpack.c.l.b16 %v1602
        %v1714 = vunpack.c.h.b16 %v1602
        %v1715 = vunpack.c.l.b16 %v1603
        %v1716 = vunpack.c.h.b16 %v1603
        %v1717 = vunpack.c.l.b16 %v1604
        %v1718 = vunpack.c.h.b16 %v1604
        %v1719 = vunpack.c.l.b16 %v1605
        %v1720 = vunpack.c.h.b16 %v1605
        %v1721 = vunpack.c.l.b16 %v1606
        %v1722 = vunpack.c.h.b16 %v1606
        %v1723 = vunpack.c.l.b16 %v1607
        %v1724 = vunpack.c.h.b16 %v1607
        %v1725 = vunpack.c.l.b16 %v1608
        %v1726 = vunpack.c.h.b16 %v1608
        %v1727 = vpack.c.b16 %v1667, %v1663
        %v1728 = vpack.c.b16 %v1668, %v1664
        %v1729 = vpack.c.b16 %v1669, %v1665
        %v1730 = vpack.c.b16 %v1670, %v1666
        %v1731 = vpack.c.b16 %v1675, %v1671
        %v1732 = vpack.c.b16 %v1676, %v1672
        %v1733 = vpack.c.b16 %v1677, %v1673
        %v1734 = vpack.c.b16 %v1678, %v1674
        %v1735 = vpack.c.b16 %v1683, %v1679
        %v1736 = vpack.c.b16 %v1684, %v1680
        %v1737 = vpack.c.b16 %v1685, %v1681
        %v1738 = vpack.c.b16 %v1686, %v1682
        %v1739 = vpack.c.b16 %v1691, %v1687
        %v1740 = vpack.c.b16 %v1692, %v1688
        %v1741 = vpack.c.b16 %v1693, %v1689
        %v1742 = vpack.c.b16 %v1694, %v1690
        %v1743 = vpack.c.b16 %v1699, %v1695
        %v1744 = vpack.c.b16 %v1700, %v1696
        %v1745 = vpack.c.b16 %v1701, %v1697
        %v1746 = vpack.c.b16 %v1702, %v1698
        %v1747 = vpack.c.b16 %v1707, %v1703
        %v1748 = vpack.c.b16 %v1708, %v1704
        %v1749 = vpack.c.b16 %v1709, %v1705
        %v1750 = vpack.c.b16 %v1710, %v1706
        %v1751 = vpack.c.b16 %v1715, %v1711
        %v1752 = vpack.c.b16 %v1716, %v1712
        %v1753 = vpack.c.b16 %v1717, %v1713
        %v1754 = vpack.c.b16 %v1718, %v1714
        %v1755 = vpack.c.b16 %v1723, %v1719
        %v1756 = vpack.c.b16 %v1724, %v1720
        %v1757 = vpack.c.b16 %v1725, %v1721
        %v1758 = vpack.c.b16 %v1726, %v1722
        %1791 = vmatprep.subr.bf16.mxu0 %v1728
        %1792 = vmatpush1.bf16.msra.mxu0 %v1727
        %1793 = vmatprep.subr.bf16.mxu0 %v1732
        %1794 = vmatpush1.bf16.msra.mxu0 %v1731
        %1795 = vmatprep.subr.bf16.mxu0 %v1736
        %1796 = vmatpush1.bf16.msra.mxu0 %v1735
        %1797 = vmatprep.subr.bf16.mxu0 %v1740
        %1798 = vmatpush1.bf16.msra.mxu0 %v1739
        %1799 = vmatprep.subr.bf16.mxu0 %v1744
        %1800 = vmatpush1.bf16.msra.mxu0 %v1743
        %1801 = vmatprep.subr.bf16.mxu0 %v1748
        %1802 = vmatpush1.bf16.msra.mxu0 %v1747
        %1803 = vmatprep.subr.bf16.mxu0 %v1752
        %1804 = vmatpush1.bf16.msra.mxu0 %v1751
        %1805 = vmatprep.subr.bf16.mxu0 %v1756
        %1806 = vmatpush1.bf16.msra.mxu0 %v1755
        %1807 = vmatprep.subr.bf16.mxu0 0
        %1808 = vmatpush1.bf16.msra.mxu0 0
        %1809 = vmatprep.subr.bf16.mxu0 0
        %1810 = vmatpush1.bf16.msra.mxu0 0
        %1811 = vmatprep.subr.bf16.mxu0 0
        %1812 = vmatpush1.bf16.msra.mxu0 0
        %1813 = vmatprep.subr.bf16.mxu0 0
        %1814 = vmatpush1.bf16.msra.mxu0 0
        %1815 = vmatprep.subr.bf16.mxu0 0
        %1816 = vmatpush1.bf16.msra.mxu0 0
        %1817 = vmatprep.subr.bf16.mxu0 0
        %1818 = vmatpush1.bf16.msra.mxu0 0
        %1819 = vmatprep.subr.bf16.mxu0 0
        %1820 = vmatpush1.bf16.msra.mxu0 0
        %1821 = vmatprep.subr.bf16.mxu0 0
        %1822 = vmatpush1.bf16.msra.mxu0 0
        %1823 = vmatprep.mubr.bf16.mxu0 0
        %1824 = vmatmul.mubr.bf16.gmra.mrb[0].mxu0 %v1575
        %v1825 = vpop.f32.mrb[0].mxu0
        %v1826 = vadd.f32 %v1614, %v1825
        %v1827 = vpop.f32.mrb[0].mxu0
        %v1828 = vadd.f32 %v1618, %v1827
        %v1829 = vpop.f32.mrb[0].mxu0
        %v1830 = vadd.f32 %v1614, %v1829
        %v1831 = vpop.f32.mrb[0].mxu0
        %v1832 = vadd.f32 %v1618, %v1831
        %1833 = vmatprep.mubr.bf16.mxu0 0
        %1834 = vmatmul.mubr.bf16.gmra.mrb[0].mxu0 %v1576
        %v1835 = vpop.f32.mrb[0].mxu0
        %v1836 = vadd.f32 %v1614, %v1835
        %v1837 = vpop.f32.mrb[0].mxu0
        %v1838 = vadd.f32 %v1618, %v1837
        %v1839 = vpop.f32.mrb[0].mxu0
        %v1840 = vpop.f32.mrb[0].mxu0
        %1841 = vdwg.mxu0
        %1842 = vmatprep.subr.bf16.mxu0 %v1730
        %1843 = vmatpush1.bf16.msra.mxu0 %v1729
        %1844 = vmatprep.subr.bf16.mxu0 %v1734
        %1845 = vmatpush1.bf16.msra.mxu0 %v1733
        %1846 = vmatprep.subr.bf16.mxu0 %v1738
        %1847 = vmatpush1.bf16.msra.mxu0 %v1737
        %1848 = vmatprep.subr.bf16.mxu0 %v1742
        %1849 = vmatpush1.bf16.msra.mxu0 %v1741
        %1850 = vmatprep.subr.bf16.mxu0 %v1746
        %1851 = vmatpush1.bf16.msra.mxu0 %v1745
        %1852 = vmatprep.subr.bf16.mxu0 %v1750
        %1853 = vmatpush1.bf16.msra.mxu0 %v1749
        %1854 = vmatprep.subr.bf16.mxu0 %v1754
        %1855 = vmatpush1.bf16.msra.mxu0 %v1753
        %1856 = vmatprep.subr.bf16.mxu0 %v1758
        %1857 = vmatpush1.bf16.msra.mxu0 %v1757
        %1858 = vmatprep.subr.bf16.mxu0 0
        %1859 = vmatpush1.bf16.msra.mxu0 0
        %1860 = vmatprep.subr.bf16.mxu0 0
        %1861 = vmatpush1.bf16.msra.mxu0 0
        %1862 = vmatprep.subr.bf16.mxu0 0
        %1863 = vmatpush1.bf16.msra.mxu0 0
        %1864 = vmatprep.subr.bf16.mxu0 0
        %1865 = vmatpush1.bf16.msra.mxu0 0
        %1866 = vmatprep.subr.bf16.mxu0 0
        %1867 = vmatpush1.bf16.msra.mxu0 0
        %1868 = vmatprep.subr.bf16.mxu0 0
        %1869 = vmatpush1.bf16.msra.mxu0 0
        %1870 = vmatprep.subr.bf16.mxu0 0
        %1871 = vmatpush1.bf16.msra.mxu0 0
        %1872 = vmatprep.subr.bf16.mxu0 0
        %1873 = vmatpush1.bf16.msra.mxu0 0
        %1874 = vmatprep.mubr.bf16.mxu0 0
        %1875 = vmatmul.mubr.bf16.gmra.mrb[0].mxu0 %v1575
        %v1876 = vpop.f32.mrb[0].mxu0
        %v1877 = vadd.f32 %v1622, %v1876
        %v1878 = vpop.f32.mrb[0].mxu0
        %v1879 = vadd.f32 %v1626, %v1878
        %v1880 = vpop.f32.mrb[0].mxu0
        %v1881 = vadd.f32 %v1622, %v1880
        %v1882 = vpop.f32.mrb[0].mxu0
        %v1883 = vadd.f32 %v1626, %v1882
        %1884 = vmatprep.mubr.bf16.mxu0 0
        %1885 = vmatmul.mubr.bf16.gmra.mrb[0].mxu0 %v1576
        %v1886 = vpop.f32.mrb[0].mxu0
        %v1887 = vadd.f32 %v1622, %v1886
        %v1888 = vpop.f32.mrb[0].mxu0
        %v1889 = vadd.f32 %v1626, %v1888
        %v1890 = vpop.f32.mrb[0].mxu0
        %v1891 = vpop.f32.mrb[0].mxu0
        %1892 = vdwg.mxu0
        %v1893 = vmul.f32 %v1826, 0.5
        %v1894 = vmul.f32 %v1828, 0.5
        %v1895 = vmul.f32 %v1877, 0.5
        %v1896 = vmul.f32 %v1879, 0.5
        %v1897 = vmul.f32 %v1830, 0.5
        %v1898 = vmul.f32 %v1832, 0.5
        %v1899 = vmul.f32 %v1881, 0.5
        %v1900 = vmul.f32 %v1883, 0.5
        %v1901 = vmul.f32 %v1836, 0.5
        %v1902 = vmul.f32 %v1838, 0.5
        %v1903 = vmul.f32 %v1887, 0.5
        %v1904 = vmul.f32 %v1889, 0.5
        %v1905 = vmul.f32 %v1826, 0.70710677
        %v1906 = vmul.f32 %v1828, 0.70710677
        %v1907 = vmul.f32 %v1877, 0.70710677
        %v1908 = vmul.f32 %v1879, 0.70710677
        %v1909 = vmul.f32 %v1830, 0.70710677
        %v1910 = vmul.f32 %v1832, 0.70710677
        %v1911 = vmul.f32 %v1881, 0.70710677
        %v1912 = vmul.f32 %v1883, 0.70710677
        %v1913 = vmul.f32 %v1836, 0.70710677
        %v1914 = vmul.f32 %v1838, 0.70710677
        %v1915 = vmul.f32 %v1887, 0.70710677
        %v1916 = vmul.f32 %v1889, 0.70710677
        %v1917 = vand.u32 2147483647, %v1905
        %v1918 = vand.u32 2147483647, %v1906
        %v1919 = vand.u32 2147483647, %v1907
        %v1920 = vand.u32 2147483647, %v1908
        %v1921 = vand.u32 2147483647, %v1909
        %v1922 = vand.u32 2147483647, %v1910
        %v1923 = vand.u32 2147483647, %v1911
        %v1924 = vand.u32 2147483647, %v1912
        %v1925 = vand.u32 2147483647, %v1913
        %v1926 = vand.u32 2147483647, %v1914
        %v1927 = vand.u32 2147483647, %v1915
        %v1928 = vand.u32 2147483647, %v1916
        %v1929 = vmul.f32 %v1917, 0.3275911
        %v1930 = vmul.f32 %v1918, 0.3275911
        %v1931 = vmul.f32 %v1919, 0.3275911
        %v1932 = vmul.f32 %v1920, 0.3275911
        %v1933 = vmul.f32 %v1921, 0.3275911
        %v1934 = vmul.f32 %v1922, 0.3275911
        %v1935 = vmul.f32 %v1923, 0.3275911
        %v1936 = vmul.f32 %v1924, 0.3275911
        %v1937 = vmul.f32 %v1925, 0.3275911
        %v1938 = vmul.f32 %v1926, 0.3275911
        %v1939 = vmul.f32 %v1927, 0.3275911
        %v1940 = vmul.f32 %v1928, 0.3275911
        %v1941 = vadd.f32 %v1929, 1.0
        %v1942 = vadd.f32 %v1930, 1.0
        %v1943 = vadd.f32 %v1931, 1.0
        %v1944 = vadd.f32 %v1932, 1.0
        %v1945 = vadd.f32 %v1933, 1.0
        %v1946 = vadd.f32 %v1934, 1.0
        %v1947 = vadd.f32 %v1935, 1.0
        %v1948 = vadd.f32 %v1936, 1.0
        %v1949 = vadd.f32 %v1937, 1.0
        %v1950 = vadd.f32 %v1938, 1.0
        %v1951 = vadd.f32 %v1939, 1.0
        %v1952 = vadd.f32 %v1940, 1.0
        %v1953 = vrcp.pop %v1941
        %v1954 = vmul.f32 1.0, %v1953
        %v1955 = vrcp.pop %v1942
        %v1956 = vmul.f32 1.0, %v1955
        %v1957 = vrcp.pop %v1943
        %v1958 = vmul.f32 1.0, %v1957
        %v1959 = vrcp.pop %v1944
        %v1960 = vmul.f32 1.0, %v1959
        %v1961 = vrcp.pop %v1945
        %v1962 = vmul.f32 1.0, %v1961
        %v1963 = vrcp.pop %v1946
        %v1964 = vmul.f32 1.0, %v1963
        %v1965 = vrcp.pop %v1947
        %v1966 = vmul.f32 1.0, %v1965
        %v1967 = vrcp.pop %v1948
        %v1968 = vmul.f32 1.0, %v1967
        %v1969 = vrcp.pop %v1949
        %v1970 = vmul.f32 1.0, %v1969
        %v1971 = vrcp.pop %v1950
        %v1972 = vmul.f32 1.0, %v1971
        %v1973 = vrcp.pop %v1951
        %v1974 = vmul.f32 1.0, %v1973
        %v1975 = vrcp.pop %v1952
        %v1976 = vmul.f32 1.0, %v1975
        %v1977 = vmul.f32 %v1954, 1.0614054
        %v1978 = vmul.f32 %v1956, 1.0614054
        %v1979 = vmul.f32 %v1958, 1.0614054
        %v1980 = vmul.f32 %v1960, 1.0614054
        %v1981 = vmul.f32 %v1962, 1.0614054
        %v1982 = vmul.f32 %v1964, 1.0614054
        %v1983 = vmul.f32 %v1966, 1.0614054
        %v1984 = vmul.f32 %v1968, 1.0614054
        %v1985 = vmul.f32 %v1970, 1.0614054
        %v1986 = vmul.f32 %v1972, 1.0614054
        %v1987 = vmul.f32 %v1974, 1.0614054
        %v1988 = vmul.f32 %v1976, 1.0614054
        %v1989 = vadd.f32 %v1977, -1.4531521
        %v1990 = vadd.f32 %v1978, -1.4531521
        %v1991 = vadd.f32 %v1979, -1.4531521
        %v1992 = vadd.f32 %v1980, -1.4531521
        %v1993 = vadd.f32 %v1981, -1.4531521
        %v1994 = vadd.f32 %v1982, -1.4531521
        %v1995 = vadd.f32 %v1983, -1.4531521
        %v1996 = vadd.f32 %v1984, -1.4531521
        %v1997 = vadd.f32 %v1985, -1.4531521
        %v1998 = vadd.f32 %v1986, -1.4531521
        %v1999 = vadd.f32 %v1987, -1.4531521
        %v2000 = vadd.f32 %v1988, -1.4531521
        %v2001 = vmul.f32 %v1989, %v1954
        %v2002 = vmul.f32 %v1990, %v1956
        %v2003 = vmul.f32 %v1991, %v1958
        %v2004 = vmul.f32 %v1992, %v1960
        %v2005 = vmul.f32 %v1993, %v1962
        %v2006 = vmul.f32 %v1994, %v1964
        %v2007 = vmul.f32 %v1995, %v1966
        %v2008 = vmul.f32 %v1996, %v1968
        %v2009 = vmul.f32 %v1997, %v1970
        %v2010 = vmul.f32 %v1998, %v1972
        %v2011 = vmul.f32 %v1999, %v1974
        %v2012 = vmul.f32 %v2000, %v1976
        %v2013 = vadd.f32 %v2001, 1.4214138
        %v2014 = vadd.f32 %v2002, 1.4214138
        %v2015 = vadd.f32 %v2003, 1.4214138
        %v2016 = vadd.f32 %v2004, 1.4214138
        %v2017 = vadd.f32 %v2005, 1.4214138
        %v2018 = vadd.f32 %v2006, 1.4214138
        %v2019 = vadd.f32 %v2007, 1.4214138
        %v2020 = vadd.f32 %v2008, 1.4214138
        %v2021 = vadd.f32 %v2009, 1.4214138
        %v2022 = vadd.f32 %v2010, 1.4214138
        %v2023 = vadd.f32 %v2011, 1.4214138
        %v2024 = vadd.f32 %v2012, 1.4214138
        %v2025 = vmul.f32 %v2013, %v1954
        %v2026 = vmul.f32 %v2014, %v1956
        %v2027 = vmul.f32 %v2015, %v1958
        %v2028 = vmul.f32 %v2016, %v1960
        %v2029 = vmul.f32 %v2017, %v1962
        %v2030 = vmul.f32 %v2018, %v1964
        %v2031 = vmul.f32 %v2019, %v1966
        %v2032 = vmul.f32 %v2020, %v1968
        %v2033 = vmul.f32 %v2021, %v1970
        %v2034 = vmul.f32 %v2022, %v1972
        %v2035 = vmul.f32 %v2023, %v1974
        %v2036 = vmul.f32 %v2024, %v1976
        %v2037 = vadd.f32 %v2025, -0.28449672
        %v2038 = vadd.f32 %v2026, -0.28449672
        %v2039 = vadd.f32 %v2027, -0.28449672
        %v2040 = vadd.f32 %v2028, -0.28449672
        %v2041 = vadd.f32 %v2029, -0.28449672
        %v2042 = vadd.f32 %v2030, -0.28449672
        %v2043 = vadd.f32 %v2031, -0.28449672
        %v2044 = vadd.f32 %v2032, -0.28449672
        %v2045 = vadd.f32 %v2033, -0.28449672
        %v2046 = vadd.f32 %v2034, -0.28449672
        %v2047 = vadd.f32 %v2035, -0.28449672
        %v2048 = vadd.f32 %v2036, -0.28449672
        %v2049 = vmul.f32 %v2037, %v1954
        %v2050 = vmul.f32 %v2038, %v1956
        %v2051 = vmul.f32 %v2039, %v1958
        %v2052 = vmul.f32 %v2040, %v1960
        %v2053 = vmul.f32 %v2041, %v1962
        %v2054 = vmul.f32 %v2042, %v1964
        %v2055 = vmul.f32 %v2043, %v1966
        %v2056 = vmul.f32 %v2044, %v1968
        %v2057 = vmul.f32 %v2045, %v1970
        %v2058 = vmul.f32 %v2046, %v1972
        %v2059 = vmul.f32 %v2047, %v1974
        %v2060 = vmul.f32 %v2048, %v1976
        %v2061 = vadd.f32 %v2049, 0.2548296
        %v2062 = vadd.f32 %v2050, 0.2548296
        %v2063 = vadd.f32 %v2051, 0.2548296
        %v2064 = vadd.f32 %v2052, 0.2548296
        %v2065 = vadd.f32 %v2053, 0.2548296
        %v2066 = vadd.f32 %v2054, 0.2548296
        %v2067 = vadd.f32 %v2055, 0.2548296
        %v2068 = vadd.f32 %v2056, 0.2548296
        %v2069 = vadd.f32 %v2057, 0.2548296
        %v2070 = vadd.f32 %v2058, 0.2548296
        %v2071 = vadd.f32 %v2059, 0.2548296
        %v2072 = vadd.f32 %v2060, 0.2548296
        %v2073 = vmul.f32 %v2061, %v1954
        %v2074 = vmul.f32 %v2062, %v1956
        %v2075 = vmul.f32 %v2063, %v1958
        %v2076 = vmul.f32 %v2064, %v1960
        %v2077 = vmul.f32 %v2065, %v1962
        %v2078 = vmul.f32 %v2066, %v1964
        %v2079 = vmul.f32 %v2067, %v1966
        %v2080 = vmul.f32 %v2068, %v1968
        %v2081 = vmul.f32 %v2069, %v1970
        %v2082 = vmul.f32 %v2070, %v1972
        %v2083 = vmul.f32 %v2071, %v1974
        %v2084 = vmul.f32 %v2072, %v1976
        %v2085 = vsub.f32 0.0, %v1917
        %v2086 = vsub.f32 0.0, %v1918
        %v2087 = vsub.f32 0.0, %v1919
        %v2088 = vsub.f32 0.0, %v1920
        %v2089 = vsub.f32 0.0, %v1921
        %v2090 = vsub.f32 0.0, %v1922
        %v2091 = vsub.f32 0.0, %v1923
        %v2092 = vsub.f32 0.0, %v1924
        %v2093 = vsub.f32 0.0, %v1925
        %v2094 = vsub.f32 0.0, %v1926
        %v2095 = vsub.f32 0.0, %v1927
        %v2096 = vsub.f32 0.0, %v1928
        %v2097 = vmul.f32 %v2085, %v1917
        %v2098 = vmul.f32 %v2086, %v1918
        %v2099 = vmul.f32 %v2087, %v1919
        %v2100 = vmul.f32 %v2088, %v1920
        %v2101 = vmul.f32 %v2089, %v1921
        %v2102 = vmul.f32 %v2090, %v1922
        %v2103 = vmul.f32 %v2091, %v1923
        %v2104 = vmul.f32 %v2092, %v1924
        %v2105 = vmul.f32 %v2093, %v1925
        %v2106 = vmul.f32 %v2094, %v1926
        %v2107 = vmul.f32 %v2095, %v1927
        %v2108 = vmul.f32 %v2096, %v1928
        %v2109 = vmul.f32 %v2097, 1.442695
        %v2110 = vpow.pop %v2109
        %v2111 = vmul.f32 %v2098, 1.442695
        %v2112 = vpow.pop %v2111
        %v2113 = vmul.f32 %v2099, 1.442695
        %v2114 = vpow.pop %v2113
        %v2115 = vmul.f32 %v2100, 1.442695
        %v2116 = vpow.pop %v2115
        %v2117 = vmul.f32 %v2101, 1.442695
        %v2118 = vpow.pop %v2117
        %v2119 = vmul.f32 %v2102, 1.442695
        %v2120 = vpow.pop %v2119
        %v2121 = vmul.f32 %v2103, 1.442695
        %v2122 = vpow.pop %v2121
        %v2123 = vmul.f32 %v2104, 1.442695
        %v2124 = vpow.pop %v2123
        %v2125 = vmul.f32 %v2105, 1.442695
        %v2126 = vpow.pop %v2125
        %v2127 = vmul.f32 %v2106, 1.442695
        %v2128 = vpow.pop %v2127
        %v2129 = vmul.f32 %v2107, 1.442695
        %v2130 = vpow.pop %v2129
        %v2131 = vmul.f32 %v2108, 1.442695
        %v2132 = vpow.pop %v2131
        %v2133 = vmul.f32 %v2073, %v2110
        %v2134 = vmul.f32 %v2074, %v2112
        %v2135 = vmul.f32 %v2075, %v2114
        %v2136 = vmul.f32 %v2076, %v2116
        %v2137 = vmul.f32 %v2077, %v2118
        %v2138 = vmul.f32 %v2078, %v2120
        %v2139 = vmul.f32 %v2079, %v2122
        %v2140 = vmul.f32 %v2080, %v2124
        %v2141 = vmul.f32 %v2081, %v2126
        %v2142 = vmul.f32 %v2082, %v2128
        %v2143 = vmul.f32 %v2083, %v2130
        %v2144 = vmul.f32 %v2084, %v2132
        %v2145 = vsub.f32 1.0, %v2133
        %v2146 = vsub.f32 1.0, %v2134
        %v2147 = vsub.f32 1.0, %v2135
        %v2148 = vsub.f32 1.0, %v2136
        %v2149 = vsub.f32 1.0, %v2137
        %v2150 = vsub.f32 1.0, %v2138
        %v2151 = vsub.f32 1.0, %v2139
        %v2152 = vsub.f32 1.0, %v2140
        %v2153 = vsub.f32 1.0, %v2141
        %v2154 = vsub.f32 1.0, %v2142
        %v2155 = vsub.f32 1.0, %v2143
        %v2156 = vsub.f32 1.0, %v2144
        %vm2157 = vcmp.ge.f32.partialorder %v1905, 0.0
        %vm2158 = vcmp.ge.f32.partialorder %v1906, 0.0
        %vm2159 = vcmp.ge.f32.partialorder %v1907, 0.0
        %vm2160 = vcmp.ge.f32.partialorder %v1908, 0.0
        %vm2161 = vcmp.ge.f32.partialorder %v1909, 0.0
        %vm2162 = vcmp.ge.f32.partialorder %v1910, 0.0
        %vm2163 = vcmp.ge.f32.partialorder %v1911, 0.0
        %vm2164 = vcmp.ge.f32.partialorder %v1912, 0.0
        %vm2165 = vcmp.ge.f32.partialorder %v1913, 0.0
        %vm2166 = vcmp.ge.f32.partialorder %v1914, 0.0
        %vm2167 = vcmp.ge.f32.partialorder %v1915, 0.0
        %vm2168 = vcmp.ge.f32.partialorder %v1916, 0.0
        %v2169 = vsub.f32 0.0, %v2145
        %v2170 = vsub.f32 0.0, %v2146
        %v2171 = vsub.f32 0.0, %v2147
        %v2172 = vsub.f32 0.0, %v2148
        %v2173 = vsub.f32 0.0, %v2149
        %v2174 = vsub.f32 0.0, %v2150
        %v2175 = vsub.f32 0.0, %v2151
        %v2176 = vsub.f32 0.0, %v2152
        %v2177 = vsub.f32 0.0, %v2153
        %v2178 = vsub.f32 0.0, %v2154
        %v2179 = vsub.f32 0.0, %v2155
        %v2180 = vsub.f32 0.0, %v2156
        %v2181 = vsel %vm2157, %v2145, %v2169
        %v2182 = vsel %vm2158, %v2146, %v2170
        %v2183 = vsel %vm2159, %v2147, %v2171
        %v2184 = vsel %vm2160, %v2148, %v2172
        %v2185 = vsel %vm2161, %v2149, %v2173
        %v2186 = vsel %vm2162, %v2150, %v2174
        %v2187 = vsel %vm2163, %v2151, %v2175
        %v2188 = vsel %vm2164, %v2152, %v2176
        %v2189 = vsel %vm2165, %v2153, %v2177
        %v2190 = vsel %vm2166, %v2154, %v2178
        %v2191 = vsel %vm2167, %v2155, %v2179
        %v2192 = vsel %vm2168, %v2156, %v2180
        %v2193 = vadd.f32 %v2181, 1.0
        %v2194 = vadd.f32 %v2182, 1.0
        %v2195 = vadd.f32 %v2183, 1.0
        %v2196 = vadd.f32 %v2184, 1.0
        %v2197 = vadd.f32 %v2185, 1.0
        %v2198 = vadd.f32 %v2186, 1.0
        %v2199 = vadd.f32 %v2187, 1.0
        %v2200 = vadd.f32 %v2188, 1.0
        %v2201 = vadd.f32 %v2189, 1.0
        %v2202 = vadd.f32 %v2190, 1.0
        %v2203 = vadd.f32 %v2191, 1.0
        %v2204 = vadd.f32 %v2192, 1.0
        %v2205 = vmul.f32 %v1893, %v2193
        %v2206 = vmul.f32 %v1894, %v2194
        %v2207 = vmul.f32 %v1895, %v2195
        %v2208 = vmul.f32 %v1896, %v2196
        %v2209 = vmul.f32 %v1897, %v2197
        %v2210 = vmul.f32 %v1898, %v2198
        %v2211 = vmul.f32 %v1899, %v2199
        %v2212 = vmul.f32 %v1900, %v2200
        %v2213 = vmul.f32 %v1901, %v2201
        %v2214 = vmul.f32 %v1902, %v2202
        %v2215 = vmul.f32 %v1903, %v2203
        %v2216 = vmul.f32 %v1904, %v2204
        %v2217 = vpack.c.bf16 %v2209, %v2205
        %v2218 = vpack.c.bf16 %v2210, %v2206
        %v2219 = vpack.c.bf16 %v2211, %v2207
        %v2220 = vpack.c.bf16 %v2212, %v2208
        %v2221 = vpack.c.bf16 %v2213, %v2213
        %v2222 = vpack.c.bf16 %v2214, %v2214
        %v2223 = vpack.c.bf16 %v2215, %v2215
        %v2224 = vpack.c.bf16 %v2216, %v2216
        %v2225 = vld [vmem:[%s705] sm:$0xf]
        %v2226 = vld [vmem:[%s705 + $0x4] sm:$0xf]
        %v2227 = vld [vmem:[%s705 + $0x8] sm:$0xf]
        %v2228 = vld [vmem:[%s705 + $0xc] sm:$0xf]
        %v2229 = vld [vmem:[%s705 + $0x10] sm:$0xf]
        %v2230 = vld [vmem:[%s705 + $0x14] sm:$0xf]
        %v2231 = vld [vmem:[%s705 + $0x18] sm:$0xf]
        %v2232 = vld [vmem:[%s705 + $0x1c] sm:$0xf]
        %v2233 = vld [vmem:[%s705 + $0x20] sm:$0xf]
        %v2234 = vld [vmem:[%s705 + $0x24] sm:$0xf]
        %v2235 = vld [vmem:[%s705 + $0x28] sm:$0xf]
        %v2236 = vld [vmem:[%s705 + $0x2c] sm:$0xf]
        %v2237 = vld [vmem:[%s705 + $0x30] sm:$0xf]
        %v2238 = vld [vmem:[%s705 + $0x34] sm:$0xf]
        %v2239 = vld [vmem:[%s705 + $0x38] sm:$0xf]
        %v2240 = vld [vmem:[%s705 + $0x3c] sm:$0xf]
        %v2241 = vld [vmem:[%s705 + $0x40] sm:$0xf]
        %v2242 = vld [vmem:[%s705 + $0x44] sm:$0xf]
        %v2243 = vld [vmem:[%s705 + $0x48] sm:$0xf]
        %v2244 = vld [vmem:[%s705 + $0x4c] sm:$0xf]
        %v2245 = vld [vmem:[%s705 + $0x50] sm:$0xf]
        %v2246 = vld [vmem:[%s705 + $0x54] sm:$0xf]
        %v2247 = vld [vmem:[%s705 + $0x58] sm:$0xf]
        %v2248 = vld [vmem:[%s705 + $0x5c] sm:$0xf]
        %v2249 = vld [vmem:[%s705 + $0x60] sm:$0xf]
        %v2250 = vld [vmem:[%s705 + $0x64] sm:$0xf]
        %v2251 = vld [vmem:[%s705 + $0x68] sm:$0xf]
        %v2252 = vld [vmem:[%s705 + $0x6c] sm:$0xf]
        %v2253 = vld [vmem:[%s705 + $0x70] sm:$0xf]
        %v2254 = vld [vmem:[%s705 + $0x74] sm:$0xf]
        %v2255 = vld [vmem:[%s705 + $0x78] sm:$0xf]
        %v2256 = vld [vmem:[%s705 + $0x7c] sm:$0xf]
        %v2257 = vld [vmem:[%s705 + $0x80] sm:$0xf]
        %v2258 = vld [vmem:[%s705 + $0x84] sm:$0xf]
        %v2259 = vld [vmem:[%s705 + $0x88] sm:$0xf]
        %v2260 = vld [vmem:[%s705 + $0x8c] sm:$0xf]
        %v2261 = vld [vmem:[%s705 + $0x90] sm:$0xf]
        %v2262 = vld [vmem:[%s705 + $0x94] sm:$0xf]
        %v2263 = vld [vmem:[%s705 + $0x98] sm:$0xf]
        %v2264 = vld [vmem:[%s705 + $0x9c] sm:$0xf]
        %v2265 = vld [vmem:[%s705 + $0xa0] sm:$0xf]
        %v2266 = vld [vmem:[%s705 + $0xa4] sm:$0xf]
        %v2267 = vld [vmem:[%s705 + $0xa8] sm:$0xf]
        %v2268 = vld [vmem:[%s705 + $0xac] sm:$0xf]
        %v2269 = vld [vmem:[%s705 + $0xb0] sm:$0xf]
        %v2270 = vld [vmem:[%s705 + $0xb4] sm:$0xf]
        %v2271 = vld [vmem:[%s705 + $0xb8] sm:$0xf]
        %v2272 = vld [vmem:[%s705 + $0xbc] sm:$0xf]
        %v2273 = vld [vmem:[%s705 + $0xc0] sm:$0xf]
        %v2274 = vld [vmem:[%s705 + $0xc4] sm:$0xf]
        %v2275 = vld [vmem:[%s705 + $0xc8] sm:$0xf]
        %v2276 = vld [vmem:[%s705 + $0xcc] sm:$0xf]
        %v2277 = vld [vmem:[%s705 + $0xd0] sm:$0xf]
        %v2278 = vld [vmem:[%s705 + $0xd4] sm:$0xf]
        %v2279 = vld [vmem:[%s705 + $0xd8] sm:$0xf]
        %v2280 = vld [vmem:[%s705 + $0xdc] sm:$0xf]
        %v2281 = vld [vmem:[%s705 + $0xe0] sm:$0xf]
        %v2282 = vld [vmem:[%s705 + $0xe4] sm:$0xf]
        %v2283 = vld [vmem:[%s705 + $0xe8] sm:$0xf]
        %v2284 = vld [vmem:[%s705 + $0xec] sm:$0xf]
        %v2285 = vld [vmem:[%s705 + $0xf0] sm:$0xf]
        %v2286 = vld [vmem:[%s705 + $0xf4] sm:$0xf]
        %v2287 = vld [vmem:[%s705 + $0xf8] sm:$0xf]
        %v2288 = vld [vmem:[%s705 + $0xfc] sm:$0xf]
        %v2289 = vld [vmem:[%s810] sm:$0x1]
        %v2291 = vlaneseq
        %v2292 = vshrl.u32 %v2291, 7
        %v2293 = vsub.s32 0, %v2292
        %v2294 = vrot.slane %v2289, %v2293
        %v2360 = vunpack.c.l.b16 %v2225
        %v2361 = vunpack.c.l.b16 %v2226
        %v2362 = vunpack.c.l.b16 %v2227
        %v2363 = vunpack.c.l.b16 %v2228
        %v2364 = vunpack.c.l.b16 %v2229
        %v2365 = vunpack.c.l.b16 %v2230
        %v2366 = vunpack.c.l.b16 %v2231
        %v2367 = vunpack.c.l.b16 %v2232
        %v2368 = vunpack.c.l.b16 %v2233
        %v2369 = vunpack.c.l.b16 %v2234
        %v2370 = vunpack.c.l.b16 %v2235
        %v2371 = vunpack.c.l.b16 %v2236
        %v2372 = vunpack.c.l.b16 %v2237
        %v2373 = vunpack.c.l.b16 %v2238
        %v2374 = vunpack.c.l.b16 %v2239
        %v2375 = vunpack.c.l.b16 %v2240
        %v2376 = vunpack.c.l.b16 %v2241
        %v2377 = vunpack.c.l.b16 %v2242
        %v2378 = vunpack.c.l.b16 %v2243
        %v2379 = vunpack.c.l.b16 %v2244
        %v2380 = vunpack.c.l.b16 %v2245
        %v2381 = vunpack.c.l.b16 %v2246
        %v2382 = vunpack.c.l.b16 %v2247
        %v2383 = vunpack.c.l.b16 %v2248
        %v2384 = vunpack.c.l.b16 %v2249
        %v2385 = vunpack.c.l.b16 %v2250
        %v2386 = vunpack.c.l.b16 %v2251
        %v2387 = vunpack.c.l.b16 %v2252
        %v2388 = vunpack.c.l.b16 %v2253
        %v2389 = vunpack.c.l.b16 %v2254
        %v2390 = vunpack.c.l.b16 %v2255
        %v2391 = vunpack.c.l.b16 %v2256
        %v2392 = vunpack.c.l.b16 %v2257
        %v2393 = vunpack.c.l.b16 %v2258
        %v2394 = vunpack.c.l.b16 %v2259
        %v2395 = vunpack.c.l.b16 %v2260
        %v2396 = vunpack.c.l.b16 %v2261
        %v2397 = vunpack.c.l.b16 %v2262
        %v2398 = vunpack.c.l.b16 %v2263
        %v2399 = vunpack.c.l.b16 %v2264
        %v2400 = vunpack.c.l.b16 %v2265
        %v2401 = vunpack.c.l.b16 %v2266
        %v2402 = vunpack.c.l.b16 %v2267
        %v2403 = vunpack.c.l.b16 %v2268
        %v2404 = vunpack.c.l.b16 %v2269
        %v2405 = vunpack.c.l.b16 %v2270
        %v2406 = vunpack.c.l.b16 %v2271
        %v2407 = vunpack.c.l.b16 %v2272
        %v2408 = vunpack.c.l.b16 %v2273
        %v2409 = vunpack.c.l.b16 %v2274
        %v2410 = vunpack.c.l.b16 %v2275
        %v2411 = vunpack.c.l.b16 %v2276
        %v2412 = vunpack.c.l.b16 %v2277
        %v2413 = vunpack.c.l.b16 %v2278
        %v2414 = vunpack.c.l.b16 %v2279
        %v2415 = vunpack.c.l.b16 %v2280
        %v2416 = vunpack.c.l.b16 %v2281
        %v2417 = vunpack.c.l.b16 %v2282
        %v2418 = vunpack.c.l.b16 %v2283
        %v2419 = vunpack.c.l.b16 %v2284
        %v2420 = vunpack.c.l.b16 %v2285
        %v2421 = vunpack.c.l.b16 %v2286
        %v2422 = vunpack.c.l.b16 %v2287
        %v2423 = vunpack.c.l.b16 %v2288
        %v2424 = vpack.c.b16 %v2361, %v2360
        %v2425 = vpack.c.b16 %v2363, %v2362
        %v2426 = vpack.c.b16 %v2365, %v2364
        %v2427 = vpack.c.b16 %v2367, %v2366
        %v2428 = vpack.c.b16 %v2369, %v2368
        %v2429 = vpack.c.b16 %v2371, %v2370
        %v2430 = vpack.c.b16 %v2373, %v2372
        %v2431 = vpack.c.b16 %v2375, %v2374
        %v2432 = vpack.c.b16 %v2377, %v2376
        %v2433 = vpack.c.b16 %v2379, %v2378
        %v2434 = vpack.c.b16 %v2381, %v2380
        %v2435 = vpack.c.b16 %v2383, %v2382
        %v2436 = vpack.c.b16 %v2385, %v2384
        %v2437 = vpack.c.b16 %v2387, %v2386
        %v2438 = vpack.c.b16 %v2389, %v2388
        %v2439 = vpack.c.b16 %v2391, %v2390
        %v2440 = vpack.c.b16 %v2393, %v2392
        %v2441 = vpack.c.b16 %v2395, %v2394
        %v2442 = vpack.c.b16 %v2397, %v2396
        %v2443 = vpack.c.b16 %v2399, %v2398
        %v2444 = vpack.c.b16 %v2401, %v2400
        %v2445 = vpack.c.b16 %v2403, %v2402
        %v2446 = vpack.c.b16 %v2405, %v2404
        %v2447 = vpack.c.b16 %v2407, %v2406
        %v2448 = vpack.c.b16 %v2409, %v2408
        %v2449 = vpack.c.b16 %v2411, %v2410
        %v2450 = vpack.c.b16 %v2413, %v2412
        %v2451 = vpack.c.b16 %v2415, %v2414
        %v2452 = vpack.c.b16 %v2417, %v2416
        %v2453 = vpack.c.b16 %v2419, %v2418
        %v2454 = vpack.c.b16 %v2421, %v2420
        %v2455 = vpack.c.b16 %v2423, %v2422
        %2488 = vmatprep.subr.bf16.mxu0 0
        %2489 = vmatpush1.bf16.msra.mxu0 %v2424
        %2490 = vmatprep.subr.bf16.mxu0 0
        %2491 = vmatpush1.bf16.msra.mxu0 %v2425
        %2492 = vmatprep.subr.bf16.mxu0 0
        %2493 = vmatpush1.bf16.msra.mxu0 %v2426
        %2494 = vmatprep.subr.bf16.mxu0 0
        %2495 = vmatpush1.bf16.msra.mxu0 %v2427
        %2496 = vmatprep.subr.bf16.mxu0 0
        %2497 = vmatpush1.bf16.msra.mxu0 %v2428
        %2498 = vmatprep.subr.bf16.mxu0 0
        %2499 = vmatpush1.bf16.msra.mxu0 %v2429
        %2500 = vmatprep.subr.bf16.mxu0 0
        %2501 = vmatpush1.bf16.msra.mxu0 %v2430
        %2502 = vmatprep.subr.bf16.mxu0 0
        %2503 = vmatpush1.bf16.msra.mxu0 %v2431
        %2504 = vmatprep.subr.bf16.mxu0 0
        %2505 = vmatpush1.bf16.msra.mxu0 %v2432
        %2506 = vmatprep.subr.bf16.mxu0 0
        %2507 = vmatpush1.bf16.msra.mxu0 %v2433
        %2508 = vmatprep.subr.bf16.mxu0 0
        %2509 = vmatpush1.bf16.msra.mxu0 %v2434
        %2510 = vmatprep.subr.bf16.mxu0 0
        %2511 = vmatpush1.bf16.msra.mxu0 %v2435
        %2512 = vmatprep.subr.bf16.mxu0 0
        %2513 = vmatpush1.bf16.msra.mxu0 %v2436
        %2514 = vmatprep.subr.bf16.mxu0 0
        %2515 = vmatpush1.bf16.msra.mxu0 %v2437
        %2516 = vmatprep.subr.bf16.mxu0 0
        %2517 = vmatpush1.bf16.msra.mxu0 %v2438
        %2518 = vmatprep.subr.bf16.mxu0 0
        %2519 = vmatpush1.bf16.msra.mxu0 %v2439
        %2520 = vmatprep.mubr.bf16.mxu0 %v2218
        %2521 = vmatmul.mubr.bf16.gmra.mrb[0].mxu0 %v2217
        %v2522 = vpop.f32.mrb[0].mxu0
        %v2523 = vadd.f32 %v2294, %v2522
        %v2524 = vpop.f32.mrb[0].mxu0
        %v2525 = vpop.f32.mrb[0].mxu0
        %v2526 = vadd.f32 %v2294, %v2525
        %v2527 = vpop.f32.mrb[0].mxu0
        %2528 = vmatprep.mubr.bf16.mxu0 %v2222
        %2529 = vmatmul.mubr.bf16.gmra.mrb[0].mxu0 %v2221
        %v2530 = vpop.f32.mrb[0].mxu0
        %v2531 = vadd.f32 %v2294, %v2530
        %v2532 = vpop.f32.mrb[0].mxu0
        %v2533 = vpop.f32.mrb[0].mxu0
        %v2534 = vpop.f32.mrb[0].mxu0
        %2535 = vdwg.mxu0
        %2536 = vmatprep.subr.bf16.mxu0 0
        %2537 = vmatpush1.bf16.msra.mxu0 %v2440
        %2538 = vmatprep.subr.bf16.mxu0 0
        %2539 = vmatpush1.bf16.msra.mxu0 %v2441
        %2540 = vmatprep.subr.bf16.mxu0 0
        %2541 = vmatpush1.bf16.msra.mxu0 %v2442
        %2542 = vmatprep.subr.bf16.mxu0 0
        %2543 = vmatpush1.bf16.msra.mxu0 %v2443
        %2544 = vmatprep.subr.bf16.mxu0 0
        %2545 = vmatpush1.bf16.msra.mxu0 %v2444
        %2546 = vmatprep.subr.bf16.mxu0 0
        %2547 = vmatpush1.bf16.msra.mxu0 %v2445
        %2548 = vmatprep.subr.bf16.mxu0 0
        %2549 = vmatpush1.bf16.msra.mxu0 %v2446
        %2550 = vmatprep.subr.bf16.mxu0 0
        %2551 = vmatpush1.bf16.msra.mxu0 %v2447
        %2552 = vmatprep.subr.bf16.mxu0 0
        %2553 = vmatpush1.bf16.msra.mxu0 %v2448
        %2554 = vmatprep.subr.bf16.mxu0 0
        %2555 = vmatpush1.bf16.msra.mxu0 %v2449
        %2556 = vmatprep.subr.bf16.mxu0 0
        %2557 = vmatpush1.bf16.msra.mxu0 %v2450
        %2558 = vmatprep.subr.bf16.mxu0 0
        %2559 = vmatpush1.bf16.msra.mxu0 %v2451
        %2560 = vmatprep.subr.bf16.mxu0 0
        %2561 = vmatpush1.bf16.msra.mxu0 %v2452
        %2562 = vmatprep.subr.bf16.mxu0 0
        %2563 = vmatpush1.bf16.msra.mxu0 %v2453
        %2564 = vmatprep.subr.bf16.mxu0 0
        %2565 = vmatpush1.bf16.msra.mxu0 %v2454
        %2566 = vmatprep.subr.bf16.mxu0 0
        %2567 = vmatpush1.bf16.msra.mxu0 %v2455
        %2568 = vmatprep.mubr.bf16.mxu0 %v2220
        %2569 = vmatmul.mubr.bf16.gmra.mrb[0].mxu0 %v2219
        %v2570 = vpop.f32.mrb[0].mxu0
        %v2571 = vadd.f32 %v2523, %v2570
        %v2572 = vpop.f32.mrb[0].mxu0
        %v2573 = vpop.f32.mrb[0].mxu0
        %v2574 = vadd.f32 %v2526, %v2573
        %v2575 = vpop.f32.mrb[0].mxu0
        %2576 = vmatprep.mubr.bf16.mxu0 %v2224
        %2577 = vmatmul.mubr.bf16.gmra.mrb[0].mxu0 %v2223
        %v2578 = vpop.f32.mrb[0].mxu0
        %v2579 = vadd.f32 %v2531, %v2578
        %v2580 = vpop.f32.mrb[0].mxu0
        %v2581 = vpop.f32.mrb[0].mxu0
        %v2582 = vpop.f32.mrb[0].mxu0
        %2583 = vdwg.mxu0
        %v2584 = vadd.f32 %v1519, %v2571
        %v2585 = vadd.f32 %v1520, %v2574
        %v2586 = vadd.f32 %v1521, %v2579
        %p2587 = scmp.lt.s32.totalorder %s42, 1
        // Predicated region
        $region113: #{tpu_custom_call.1} parent=79 // pred_check
          %p2588 = pneg %p2587
        $region114: #{tpu_custom_call.1} parent=79 // pred_check_branch
          %2590 = sbr.rel (%p2588) target = $region116
        $region115: #{tpu_custom_call.1} parent=79 // pred_region
          %2591 = vst [vmem:[#allocation14] sm:$0xff] %v2584
          %2592 = vst [vmem:[#allocation14 + $0x8] sm:$0xff] %v2585
          %2593 = vst [vmem:[#allocation14 + $0x10] sm:$0xff] %v2586
        $region116: #{tpu_custom_call.1} parent=79 // pred_fallthru
          _
        %p2594 = scmp.eq.s32.totalorder %s42, 1
        // Predicated region
        $region117: #{tpu_custom_call.1} parent=79 // pred_check
          %p2595 = pneg %p2594
        $region118: #{tpu_custom_call.1} parent=79 // pred_check_branch
          %2597 = sbr.rel (%p2595) target = $region120
        $region119: #{tpu_custom_call.1} parent=79 // pred_region
          %v2598 = vld [vmem:[%s13] sm:$0x1]
          %v2599 = vld [vmem:[%s14] sm:$0x1]
          %2600 = vadd.xlane.f32.xlu0 %v2584
          %v2601 = vpop.xlane.xlu0 %2600
          %2602 = vadd.xlane.f32.xlu0 %v2585
          %v2603 = vpop.xlane.xlu0 %2602
          %2604 = vadd.xlane.f32.xlu0 %v2586
          %v2605 = vpop.xlane.xlu0 %2604
          %v2606 = vmul.f32 %v2601, %v868
          %v2607 = vmul.f32 %v2603, %v868
          %v2608 = vmul.f32 %v2605, %v868
          %v2609 = vsub.f32 %v2584, %v2606
          %v2610 = vsub.f32 %v2585, %v2607
          %v2611 = vsub.f32 %v2586, %v2608
          %v2612 = vmul.f32 %v2609, %v2609
          %v2613 = vmul.f32 %v2610, %v2610
          %v2614 = vmul.f32 %v2611, %v2611
          %2615 = vadd.xlane.f32.xlu0 %v2612
          %v2616 = vpop.xlane.xlu0 %2615
          %2617 = vadd.xlane.f32.xlu0 %v2613
          %v2618 = vpop.xlane.xlu0 %2617
          %2619 = vadd.xlane.f32.xlu0 %v2614
          %v2620 = vpop.xlane.xlu0 %2619
          %v2621 = vmul.f32 %v2616, %v868
          %v2622 = vmul.f32 %v2618, %v868
          %v2623 = vmul.f32 %v2620, %v868
          %v2624 = vadd.f32 %v2621, 1e-05
          %v2625 = vadd.f32 %v2622, 1e-05
          %v2626 = vadd.f32 %v2623, 1e-05
          %v2627 = vrsqrt.pop %v2624
          %v2628 = vrsqrt.pop %v2625
          %v2629 = vrsqrt.pop %v2626
          %v2630 = vmul.f32 %v2609, %v2627
          %v2631 = vmul.f32 %v2610, %v2628
          %v2632 = vmul.f32 %v2611, %v2629
          %v2634 = vlaneseq
          %v2635 = vshrl.u32 %v2634, 7
          %v2636 = vsub.s32 0, %v2635
          %v2637 = vrot.slane %v2598, %v2636
          %v2639 = vmul.f32 %v2630, %v2637
          %v2640 = vmul.f32 %v2631, %v2637
          %v2641 = vmul.f32 %v2632, %v2637
          %v2643 = vlaneseq
          %v2644 = vshrl.u32 %v2643, 7
          %v2645 = vsub.s32 0, %v2644
          %v2646 = vrot.slane %v2599, %v2645
          %v2648 = vadd.f32 %v2639, %v2646
          %v2649 = vadd.f32 %v2640, %v2646
          %v2650 = vadd.f32 %v2641, %v2646
          %2651 = vst [vmem:[#allocation14] sm:$0xff] %v2648
          %2652 = vst [vmem:[#allocation14 + $0x8] sm:$0xff] %v2649
          %2653 = vst [vmem:[#allocation14 + $0x10] sm:$0xff] %v2650
        $region120: #{tpu_custom_call.1} parent=79 // pred_fallthru
          _
        // Predicated region
        $region121: #{tpu_custom_call.1} parent=79 // pred_check
          %p2654 = pneg %p447
        $region122: #{tpu_custom_call.1} parent=79 // pred_check_branch
          %2656 = sbr.rel (%p2654) target = $region124
        $region123: #{tpu_custom_call.1} parent=79 // pred_region
          %s2657 = smul.u32 3, %s41
          %s2659 = ssub.s32 384, 384
          %2660 = vsyncadd [#allocation4], %s2659
          %s2661 = smul.addr %s2657, 128
          %s2662 = scalar_lea.hbm %s15, %s2661
          %s2663 = sshll.u32 [#allocation14], 4
          %s2664 = int_to_ptr.vmem [resolvable:$true] %s2663
          %2669 = dma.vmem_to_hbm [thread:$0]  %s2664, 384, %s2662, [#allocation4], 128, 128, 8
        $region124: #{tpu_custom_call.1} parent=79 // pred_fallthru
          _
        // Predicated region
        $region125: #{tpu_custom_call.1} parent=79 // pred_check
          %p2670 = pneg %p447
        $region126: #{tpu_custom_call.1} parent=79 // pred_check_branch
          %2672 = sbr.rel (%p2670) target = $region128
        $region127: #{tpu_custom_call.1} parent=79 // pred_region
          %2673 = dma.done [#allocation4], 384
        $region128: #{tpu_custom_call.1} parent=79 // pred_fallthru
          _
      $region80: #{tpu_custom_call.1} parent=5 // pred_fallthru
        _
      %p2674 = scmp.le.s32.totalorder 2, %s32
      // Predicated region
      $region129: #{tpu_custom_call.1} parent=5 // pred_check
        %p2675 = pneg %p2674
      $region130: #{tpu_custom_call.1} parent=5 // pred_check_branch
        %2677 = sbr.rel (%p2675) target = $region132
      $region131: #{tpu_custom_call.1} parent=5 // pred_region
        %s2678 = ssub.s32 %s32, 2
      $region132: #{tpu_custom_call.1} parent=5 // pred_fallthru
        _
    $region6: #{tpu_custom_call.1} parent=1 // loop_footer
      %s36 = sadd.s32 1, %s32
    $region7: #{tpu_custom_call.1} parent=1 // loop_footer_branch
      %31 = sbr.rel target = $region3
    $region8: #{tpu_custom_call.1} parent=1 // loop_exit
      _
    %2679 = vsyncpa [#allocation3], 1
    %s2680 = scalar_lea.sflag [#allocation3], 1
    %2681 = vsyncpa %s2680, 1
    %2682 = vsyncpa [#allocation6], 1
    %s2683 = scalar_lea.sflag [#allocation6], 1
    %2684 = vsyncpa %s2683, 1
    %2685 = vsyncpa [#allocation9], 1
    %s2686 = scalar_lea.sflag [#allocation9], 1
    %2687 = vsyncpa %s2686, 1
    %2688 = vsyncpa [#allocation12], 1
    %s2689 = scalar_lea.sflag [#allocation12], 1
    %2690 = vsyncpa %s2689, 1
    %2691 = vsyncpa [#allocation4], 1
    %s2692 = scalar_lea.sflag [#allocation4], 1
    %2693 = vsyncpa %s2692, 1

</llo_original>
